<compile_context>
chip_gen: v7x
topology: tpu7x:2x2x1
jax: 0.10.0
libtpu: 0.0.40
codegen_flags: <defaults>
</compile_context>

<pallas_src>
import functools

import jax
import jax.numpy as jnp
from jax import lax
from jax.experimental import pallas as pl
from jax.experimental.pallas import tpu as pltpu


_LANES = 128      # TPU lane width: FC output padded to this for dense stores.
_SUBLANES = 8     # f32 sublane count: batch padded to this.


# ----------------------------------------------------------------------------
# Pallas kernel (whole forward: stacked BiLSTM + FC + mask)
# ----------------------------------------------------------------------------
def lstm_crf_kernel(x_ref, mask_ref, *refs, layer_num, hidden, seq_len,
                    batch_pad, compute_dtype):
  """Fused stacked-BiLSTM + FC + mask.

  x_ref    : (T*Bp, Din)    f32  time-major rows (row = t*Bp + b), sorted by
                                 decreasing length, batch padded to Bp.
  mask_ref : (T*Bp, 1)      f32  1.0 where t < length[b]
  per layer: w_ih_fb (Din_l, 8H) bf16   (fwd|bwd input proj fused on lanes)
             b_fb    (1, 8H)      f32   (b_ih + b_hh, fwd|bwd)
             w_hh_f  (H, 4H)      bf16
             w_hh_b  (H, 4H)      bf16
  fc       : w_fc (2H, NTpad) bf16, b_fc (1, NTpad) f32
  out_ref  : (T*Bp, NTpad)  bf16
  scratch  : 2 x (T*Bp, 2H) f32 (ping-pong inter-layer activations),
             1 x (T*Bp, 8H) f32 (hoisted gate pre-activations).
  """
  L, H, T, Bp = layer_num, hidden, seq_len, batch_pad
  lw = refs[:4 * L]
  w_fc_ref, b_fc_ref = refs[4 * L], refs[4 * L + 1]
  out_ref = refs[4 * L + 2]
  act_refs = (refs[4 * L + 3], refs[4 * L + 4])
  gx_ref = refs[4 * L + 5]
  unroll = True if T <= 16 else 2

  # Hoisted per-lane constants for the single-tanh gate activation:
  #   sigmoid(x) = 0.5*(tanh(x/2)+1)
  # i/f/o lane ranges get pre-scale 0.5 and post 0.5*t+0.5; the g range gets
  # pre-scale 1.0 and is left as tanh(g).
  lane = lax.broadcasted_iota(jnp.int32, (1, 4 * H), 1)
  is_g = (lane >= 2 * H) & (lane < 3 * H)
  scale = jnp.where(is_g, 1.0, 0.5).astype(jnp.float32)   # pre & post scale
  shift = jnp.where(is_g, 0.0, 0.5).astype(jnp.float32)   # post bias

  def cell(gates, h_prev, c_prev, valid):
    """LSTM cell update with packed-sequence gating (f32 math)."""
    t_all = jnp.tanh(gates * scale)              # ONE lane-dense EUP push
    act = t_all * scale + shift                  # sigmoid for i/f/o, tanh g
    # TODO(synk): H=32 < 128 lanes so these slices are quarter-lane; with a
    # production H (multiple of 128) each slice is a full lane tile.
    i = act[:, 0 * H:1 * H]
    f = act[:, 1 * H:2 * H]
    g = act[:, 2 * H:3 * H]
    o = act[:, 3 * H:4 * H]
    c_new = f * c_prev + i * g
    h_new = o * jnp.tanh(c_new)
    keep = valid > 0.0                           # (Bp, 1) -> broadcast
    return jnp.where(keep, h_new, h_prev), jnp.where(keep, c_new, c_prev)

  def run_layer(x_all, dst_ref, w_ih_ref, b_ref, whh_f_ref, whh_b_ref):
    # Hoisted input projection for ALL timesteps, both directions at once:
    # one (T*Bp, Din) x (Din, 8H) MXU matmul, bias folded in.
    gx_ref[...] = (jnp.dot(x_all, w_ih_ref[...],
                           preferred_element_type=jnp.float32) + b_ref[...])
    whh_f = whh_f_ref[...]
    whh_b = whh_b_ref[...]

    def body(t, carry):
      h_f, c_f, h_b, c_b = carry
      tb = T - 1 - t
      rf = pl.multiple_of(t * Bp, _SUBLANES)
      rb = pl.multiple_of(tb * Bp, _SUBLANES)
      # fwd(t) and bwd(T-1-t) are independent chains interleaved in one loop.
      gf = gx_ref[pl.ds(rf, Bp), pl.ds(0, 4 * H)] + jnp.dot(
          h_f.astype(compute_dtype), whh_f, preferred_element_type=jnp.float32)
      gb = gx_ref[pl.ds(rb, Bp), pl.ds(4 * H, 4 * H)] + jnp.dot(
          h_b.astype(compute_dtype), whh_b, preferred_element_type=jnp.float32)
      h_f, c_f = cell(gf, h_f, c_f, mask_ref[pl.ds(rf, Bp), :])
      h_b, c_b = cell(gb, h_b, c_b, mask_ref[pl.ds(rb, Bp), :])
      # TODO(synk): H=32 makes these 32-lane masked stores; production H as a
      # multiple of 128 turns them into dense vst.
      dst_ref[pl.ds(rf, Bp), pl.ds(0, H)] = h_f
      dst_ref[pl.ds(rb, Bp), pl.ds(H, H)] = h_b
      return h_f, c_f, h_b, c_b

    zeros = jnp.zeros((Bp, H), jnp.float32)
    lax.fori_loop(0, T, body, (zeros, zeros, zeros, zeros), unroll=unroll)

  # ---- stacked bidirectional layers; activations stay VMEM-resident --------
  for layer in range(L):
    w_ih, b, whh_f, whh_b = lw[4 * layer:4 * layer + 4]
    x_all = x_ref[...] if layer == 0 else act_refs[(layer - 1) % 2][...]
    run_layer(x_all.astype(compute_dtype), act_refs[layer % 2],
              w_ih, b, whh_f, whh_b)

  # ---- FC + mask epilogue: ONE (T*Bp, 2H) x (2H, NTp) matmul ----------------
  final = act_refs[(L - 1) % 2][...].astype(compute_dtype)
  o = jnp.dot(final, w_fc_ref[...], preferred_element_type=jnp.float32)
  out_ref[...] = ((o + b_fc_ref[...]) * mask_ref[...]).astype(out_ref.dtype)


# ----------------------------------------------------------------------------
# Wrapper
# ----------------------------------------------------------------------------
def lstm_crf_forward(encoding_sorted, sorted_len, reverse_indices, params,
                     *, hidden_size, num_tags, compute_dtype=jnp.bfloat16):
  """encoding_sorted: (B, T, inputSize) f32, sorted by decreasing length."""
  B, T, in_size = encoding_sorted.shape
  H = hidden_size
  L = len(params["lstm"])
  Bp = max(_SUBLANES, ((B + _SUBLANES - 1) // _SUBLANES) * _SUBLANES)
  NTp = max(_LANES, ((num_tags + _LANES - 1) // _LANES) * _LANES)

  # Time-major, batch padded to Bp (padded rows get length 0 -> fully masked),
  # then rows merged to (T*Bp, Din) so every in-kernel op is 2-D and aligned.
  x = jnp.transpose(encoding_sorted.astype(jnp.float32), (1, 0, 2))
  x = jnp.pad(x, ((0, 0), (0, Bp - B), (0, 0))).reshape(T * Bp, in_size)
  len_p = jnp.pad(sorted_len.astype(jnp.int32), (0, Bp - B))
  mask = (jnp.arange(T)[:, None] < len_p[None, :]).astype(jnp.float32)
  mask = mask.reshape(T * Bp, 1)

  flat_w = []
  for (w_ih_fb, b_fb, whh_f, whh_b) in params["lstm"]:
    flat_w += [w_ih_fb.astype(compute_dtype), b_fb,
               whh_f.astype(compute_dtype), whh_b.astype(compute_dtype)]

  w_fc, b_fc = params["fc"]                               # (2H, NT), (1, NT)
  w_fc_p = jnp.zeros((2 * H, NTp), jnp.float32).at[:, :num_tags].set(w_fc)
  b_fc_p = jnp.zeros((1, NTp), jnp.float32).at[:, :num_tags].set(b_fc)

  kernel = functools.partial(
      lstm_crf_kernel, layer_num=L, hidden=H, seq_len=T, batch_pad=Bp,
      compute_dtype=compute_dtype)

  inputs = [x, mask] + flat_w + [w_fc_p.astype(compute_dtype), b_fc_p]

  # Advisory cost estimate (keeps XLA from mis-scheduling surrounding glue).
  rows = T * Bp
  flops, trans = 0, 0
  for l in range(L):
    d_l = in_size if l == 0 else 2 * H
    flops += 2 * rows * d_l * 8 * H          # hoisted input projection
    flops += 2 * rows * H * 4 * H * 2        # recurrent matmuls (2 dirs)
    trans += rows * 2 * (4 * H + H)          # gate tanh + tanh(c)
  flops += 2 * rows * 2 * H * NTp            # FC
  in_bytes = sum(int(a.size) * a.dtype.itemsize for a in inputs)
  cost = pl.CostEstimate(flops=int(flops), transcendentals=int(trans),
                         bytes_accessed=int(in_bytes + rows * NTp * 2))

  vmem = pl.BlockSpec(memory_space=pltpu.MemorySpace.VMEM)
  # TODO(synk): add a parallel batch grid for production shapes (mandatory on
  # v7x for the second TensorCore and 64 MiB VMEM); degenerate for Bp=8 here.
  out = pl.pallas_call(
      kernel,
      out_shape=jax.ShapeDtypeStruct((T * Bp, NTp), jnp.bfloat16),
      in_specs=[vmem] * len(inputs),
      out_specs=vmem,
      scratch_shapes=[pltpu.VMEM((T * Bp, 2 * H), jnp.float32),
                      pltpu.VMEM((T * Bp, 2 * H), jnp.float32),
                      pltpu.VMEM((T * Bp, 8 * H), jnp.float32)],
      compiler_params=pltpu.CompilerParams(
          vmem_limit_bytes=32 * 1024 * 1024),
      cost_estimate=cost,
  )(*inputs)

  fc = out.reshape(T, Bp, NTp)[:, :B, :num_tags]          # (T, B, NT) bf16
  fc = fc.astype(jnp.float32).transpose(1, 0, 2)          # (B, T, NT) f32
  return fc[reverse_indices]                              # unsort batch


# ----------------------------------------------------------------------------
# Deterministic parameter construction (PyTorch nn.LSTM / nn.Linear layout)
# ----------------------------------------------------------------------------
def init_params(key, input_size, hidden_size, layer_num, num_tags):
  H = hidden_size
  k = 1.0 / jnp.sqrt(H)
  params = {"lstm": []}
  for layer in range(layer_num):
    in_sz = input_size if layer == 0 else 2 * H
    w_ih_dirs, b_dirs, w_hh_dirs = [], [], []
    for _ in range(2):                                   # forward, backward
      key, k1, k2, k3, k4 = jax.random.split(key, 5)
      w_ih = jax.random.uniform(k1, (4 * H, in_sz), jnp.float32, -k, k)
      w_hh = jax.random.uniform(k2, (4 * H, H), jnp.float32, -k, k)
      b_ih = jax.random.uniform(k3, (4 * H,), jnp.float32, -k, k)
      b_hh = jax.random.uniform(k4, (4 * H,), jnp.float32, -k, k)
      w_ih_dirs.append(w_ih.T)                           # (in_sz, 4H)
      w_hh_dirs.append(w_hh.T)                           # (H, 4H)
      b_dirs.append((b_ih + b_hh).reshape(1, -1))        # (1, 4H)
    # Fuse both directions' input projection along lanes -> (in_sz, 8H), so
    # the hoisted matmul N-dim is 8H (=256 for H=32): fills the 256-wide MXU
    # on v6e/v7x, and folds the bias add out of the recurrence on all gens.
    w_ih_fb = jnp.concatenate(w_ih_dirs, axis=1)
    b_fb = jnp.concatenate(b_dirs, axis=1)
    params["lstm"].append((w_ih_fb, b_fb, w_hh_dirs[0], w_hh_dirs[1]))
  key, k1, k2 = jax.random.split(key, 3)
  kf = 1.0 / jnp.sqrt(2 * H)
  w_fc = jax.random.uniform(k1, (num_tags, 2 * H), jnp.float32, -kf, kf)
  b_fc = jax.random.uniform(k2, (num_tags,), jnp.float32, -kf, kf)
  params["fc"] = (w_fc.T, b_fc.reshape(1, -1))
  return params


if __name__ == "__main__":
  key = jax.random.PRNGKey(0)

  # Small shapes consistent with the module's forward.
  B, T, CHAR_LEN = 2, 8, 5
  WORD_DIM, CASE_DIM, CHAR_DIM = 16, 8, 8
  INPUT_SIZE = WORD_DIM + CASE_DIM + CHAR_DIM       # 32
  HIDDEN_SIZE, LAYER_NUM, NUM_TAGS = 32, 2, 2

  key, kw, kc, kch, kt1, kt2, kt3, kp = jax.random.split(key, 8)

  # Embedding tables (stand-ins for word/case/char sub-models).
  word_table = jax.random.normal(kw, (20, WORD_DIM), jnp.float32)
  case_table = jax.random.normal(kc, (6, CASE_DIM), jnp.float32)
  char_table = jax.random.normal(kch, (30, CHAR_DIM), jnp.float32)

  # Raw integer inputs (token, case, char), as the PyTorch forward receives.
  token = jax.random.randint(kt1, (B, T), 0, 20)
  case = jax.random.randint(kt2, (B, T), 0, 6)
  char = jax.random.randint(kt3, (B, T, CHAR_LEN), 0, 30)

  # Sequence lengths + sorting (what the sub-models / DataProcessor would do).
  lengths = jnp.array([6, 8], dtype=jnp.int32)
  sorted_idx = jnp.argsort(-lengths)                # descending
  sorted_len = lengths[sorted_idx]
  reverse_indices = jnp.argsort(sorted_idx)

  # Sub-model outputs (glue, plain JAX).
  word_out = word_table[token]                      # (B, T, WORD_DIM)
  case_out = case_table[case]                       # (B, T, CASE_DIM)
  char_out = jnp.mean(char_table[char], axis=2)     # (B, T, CHAR_DIM)
  encoding = jnp.concatenate(
      [word_out, case_out, char_out], axis=2).astype(jnp.float32)
  encoding_sorted = encoding[sorted_idx]            # (B, T, INPUT_SIZE)

  params = init_params(kp, INPUT_SIZE, HIDDEN_SIZE, LAYER_NUM, NUM_TAGS)

  fc_out = lstm_crf_forward(encoding_sorted, sorted_len, reverse_indices,
                            params, hidden_size=HIDDEN_SIZE,
                            num_tags=NUM_TAGS)
  fc_out = jax.block_until_ready(fc_out)

  assert fc_out.shape == (B, T, NUM_TAGS), fc_out.shape
  assert fc_out.dtype == jnp.float32
  # Padded timesteps must be masked to exactly zero.
  assert bool(jnp.all(fc_out[0, 6:, :] == 0.0))
  print("KERNEL_OK")
</pallas_src>

<mosaic_0001>
module attributes {stable_mosaic.version = 11 : i64} {
  func.func @lstm_crf_kernel(%arg0: memref<64x32xf32, #tpu.memory_space<vmem>>, %arg1: memref<64x1xf32, #tpu.memory_space<vmem>>, %arg2: memref<32x256xbf16, #tpu.memory_space<vmem>>, %arg3: memref<1x256xf32, #tpu.memory_space<vmem>>, %arg4: memref<32x128xbf16, #tpu.memory_space<vmem>>, %arg5: memref<32x128xbf16, #tpu.memory_space<vmem>>, %arg6: memref<64x256xbf16, #tpu.memory_space<vmem>>, %arg7: memref<1x256xf32, #tpu.memory_space<vmem>>, %arg8: memref<32x128xbf16, #tpu.memory_space<vmem>>, %arg9: memref<32x128xbf16, #tpu.memory_space<vmem>>, %arg10: memref<64x128xbf16, #tpu.memory_space<vmem>>, %arg11: memref<1x128xf32, #tpu.memory_space<vmem>>, %arg12: memref<64x128xbf16, #tpu.memory_space<vmem>>, %arg13: memref<64x64xf32, #tpu.memory_space<vmem>>, %arg14: memref<64x64xf32, #tpu.memory_space<vmem>>, %arg15: memref<64x256xf32, #tpu.memory_space<vmem>>) attributes {dimension_semantics = [], scalar_prefetch = 0 : i64, scratch_operands = 3 : i64, tpu.core_type = #tpu.core_type<tc>} {
    %0 = tpu.iota {dimensions = array<i32: 1>} : vector<1x128xi32>
    %c64_i32 = arith.constant 64 : i32
    %1 = vector.broadcast %c64_i32 : i32 to vector<1x128xi32>
    %2 = arith.cmpi sge, %0, %1 : vector<1x128xi32>
    %c96_i32 = arith.constant 96 : i32
    %3 = vector.broadcast %c96_i32 : i32 to vector<1x128xi32>
    %4 = arith.cmpi slt, %0, %3 : vector<1x128xi32>
    %5 = arith.andi %2, %4 : vector<1x128xi1>
    %cst = arith.constant 1.000000e+00 : f32
    %cst_0 = arith.constant 5.000000e-01 : f32
    %6 = vector.broadcast %cst : f32 to vector<1x128xf32>
    %7 = vector.broadcast %cst_0 : f32 to vector<1x128xf32>
    %8 = arith.select %5, %6, %7 : vector<1x128xi1>, vector<1x128xf32>
    %cst_1 = arith.constant 0.000000e+00 : f32
    %cst_2 = arith.constant 5.000000e-01 : f32
    %9 = vector.broadcast %cst_1 : f32 to vector<1x128xf32>
    %10 = vector.broadcast %cst_2 : f32 to vector<1x128xf32>
    %11 = arith.select %5, %9, %10 : vector<1x128xi1>, vector<1x128xf32>
    %c0 = arith.constant 0 : index
    %c0_3 = arith.constant 0 : index
    %12 = vector.load %arg0[%c0, %c0_3] : memref<64x32xf32, #tpu.memory_space<vmem>>, vector<64x32xf32>
    %13 = arith.truncf %12 : vector<64x32xf32> to vector<64x32xbf16>
    %c0_4 = arith.constant 0 : index
    %c0_5 = arith.constant 0 : index
    %14 = vector.load %arg2[%c0_4, %c0_5] : memref<32x256xbf16, #tpu.memory_space<vmem>>, vector<32x256xbf16>
    %cst_6 = arith.constant dense<0.000000e+00> : vector<64x256xf32>
    %15 = tpu.matmul %13, %14, %cst_6 {dimension_numbers = #tpu.dot_dimension_numbers<[1], [0], [0], [1], [0, 0, 1, 1], [], []>} : vector<64x32xbf16>, vector<32x256xbf16>, vector<64x256xf32> -> vector<64x256xf32>
    %c0_7 = arith.constant 0 : index
    %c0_8 = arith.constant 0 : index
    %16 = vector.load %arg3[%c0_7, %c0_8] : memref<1x256xf32, #tpu.memory_space<vmem>>, vector<1x256xf32>
    %17 = vector.broadcast %16 : vector<1x256xf32> to vector<64x256xf32>
    %18 = arith.addf %15, %17 : vector<64x256xf32>
    %c0_9 = arith.constant 0 : index
    %c0_10 = arith.constant 0 : index
    %19 = vector.load %arg15[%c0_9, %c0_10] : memref<64x256xf32, #tpu.memory_space<vmem>>, vector<64x256xf32>
    tpu.vector_store %arg15[%c0_9, %c0_10], %18 {strides = array<i32>} : memref<64x256xf32, #tpu.memory_space<vmem>>, vector<64x256xf32>,
    %c0_11 = arith.constant 0 : index
    %c0_12 = arith.constant 0 : index
    %20 = vector.load %arg4[%c0_11, %c0_12] : memref<32x128xbf16, #tpu.memory_space<vmem>>, vector<32x128xbf16>
    %c0_13 = arith.constant 0 : index
    %c0_14 = arith.constant 0 : index
    %21 = vector.load %arg5[%c0_13, %c0_14] : memref<32x128xbf16, #tpu.memory_space<vmem>>, vector<32x128xbf16>
    %cst_15 = arith.constant 0.000000e+00 : f32
    %22 = vector.broadcast %cst_15 : f32 to vector<8x32xf32>
    %c0_i32 = arith.constant 0 : i32
    %c7_i32 = arith.constant 7 : i32
    %23 = arith.subi %c7_i32, %c0_i32 : i32
    %c8_i32 = arith.constant 8 : i32
    %24 = arith.muli %c0_i32, %c8_i32 : i32
    %25 = tpu.assume_multiple %24, 8 : i32
    %c8_i32_16 = arith.constant 8 : i32
    %26 = arith.muli %23, %c8_i32_16 : i32
    %27 = tpu.assume_multiple %26, 8 : i32
    %28 = arith.index_cast %25 : i32 to index
    %c0_17 = arith.constant 0 : index
    %29 = vector.load %arg15[%28, %c0_17] : memref<64x256xf32, #tpu.memory_space<vmem>>, vector<8x128xf32>
    %30 = arith.truncf %22 : vector<8x32xf32> to vector<8x32xbf16>
    %cst_18 = arith.constant dense<0.000000e+00> : vector<8x128xf32>
    %31 = tpu.matmul %30, %20, %cst_18 {dimension_numbers = #tpu.dot_dimension_numbers<[1], [0], [0], [1], [0, 0, 1, 1], [], []>} : vector<8x32xbf16>, vector<32x128xbf16>, vector<8x128xf32> -> vector<8x128xf32>
    %32 = arith.addf %29, %31 : vector<8x128xf32>
    %33 = arith.index_cast %27 : i32 to index
    %c128 = arith.constant 128 : index
    %34 = vector.load %arg15[%33, %c128] : memref<64x256xf32, #tpu.memory_space<vmem>>, vector<8x128xf32>
    %35 = arith.truncf %22 : vector<8x32xf32> to vector<8x32xbf16>
    %cst_19 = arith.constant dense<0.000000e+00> : vector<8x128xf32>
    %36 = tpu.matmul %35, %21, %cst_19 {dimension_numbers = #tpu.dot_dimension_numbers<[1], [0], [0], [1], [0, 0, 1, 1], [], []>} : vector<8x32xbf16>, vector<32x128xbf16>, vector<8x128xf32> -> vector<8x128xf32>
    %37 = arith.addf %34, %36 : vector<8x128xf32>
    %38 = arith.index_cast %25 : i32 to index
    %c0_20 = arith.constant 0 : index
    %39 = vector.load %arg1[%38, %c0_20] : memref<64x1xf32, #tpu.memory_space<vmem>>, vector<8x1xf32>
    %40 = vector.broadcast %8 : vector<1x128xf32> to vector<8x128xf32>
    %41 = arith.mulf %32, %40 : vector<8x128xf32>
    %42 = math.tanh %41 : vector<8x128xf32>
    %43 = vector.broadcast %8 : vector<1x128xf32> to vector<8x128xf32>
    %44 = arith.mulf %42, %43 : vector<8x128xf32>
    %45 = vector.broadcast %11 : vector<1x128xf32> to vector<8x128xf32>
    %46 = arith.addf %44, %45 : vector<8x128xf32>
    %47 = vector.extract_strided_slice %46 {offsets = [0, 0], sizes = [8, 32], strides = [1, 1]} : vector<8x128xf32> to vector<8x32xf32>
    %48 = vector.extract_strided_slice %46 {offsets = [0, 32], sizes = [8, 32], strides = [1, 1]} : vector<8x128xf32> to vector<8x32xf32>
    %49 = vector.extract_strided_slice %46 {offsets = [0, 64], sizes = [8, 32], strides = [1, 1]} : vector<8x128xf32> to vector<8x32xf32>
    %50 = vector.extract_strided_slice %46 {offsets = [0, 96], sizes = [8, 32], strides = [1, 1]} : vector<8x128xf32> to vector<8x32xf32>
    %51 = arith.mulf %48, %22 : vector<8x32xf32>
    %52 = arith.mulf %47, %49 : vector<8x32xf32>
    %53 = arith.addf %51, %52 : vector<8x32xf32>
    %54 = math.tanh %53 : vector<8x32xf32>
    %55 = arith.mulf %50, %54 : vector<8x32xf32>
    %cst_21 = arith.constant 0.000000e+00 : f32
    %56 = vector.broadcast %cst_21 : f32 to vector<8x1xf32>
    %57 = arith.cmpf ogt, %39, %56 : vector<8x1xf32>
    %58 = vector.shape_cast %57 : vector<8x1xi1> to vector<8x1xi1>
    %59 = vector.broadcast %58 : vector<8x1xi1> to vector<8x32xi1>
    %60 = arith.select %59, %55, %22 : vector<8x32xi1>, vector<8x32xf32>
    %61 = vector.shape_cast %57 : vector<8x1xi1> to vector<8x1xi1>
    %62 = vector.broadcast %61 : vector<8x1xi1> to vector<8x32xi1>
    %63 = arith.select %62, %53, %22 : vector<8x32xi1>, vector<8x32xf32>
    %64 = arith.index_cast %27 : i32 to index
    %c0_22 = arith.constant 0 : index
    %65 = vector.load %arg1[%64, %c0_22] : memref<64x1xf32, #tpu.memory_space<vmem>>, vector<8x1xf32>
    %66 = vector.broadcast %8 : vector<1x128xf32> to vector<8x128xf32>
    %67 = arith.mulf %37, %66 : vector<8x128xf32>
    %68 = math.tanh %67 : vector<8x128xf32>
    %69 = vector.broadcast %8 : vector<1x128xf32> to vector<8x128xf32>
    %70 = arith.mulf %68, %69 : vector<8x128xf32>
    %71 = vector.broadcast %11 : vector<1x128xf32> to vector<8x128xf32>
    %72 = arith.addf %70, %71 : vector<8x128xf32>
    %73 = vector.extract_strided_slice %72 {offsets = [0, 0], sizes = [8, 32], strides = [1, 1]} : vector<8x128xf32> to vector<8x32xf32>
    %74 = vector.extract_strided_slice %72 {offsets = [0, 32], sizes = [8, 32], strides = [1, 1]} : vector<8x128xf32> to vector<8x32xf32>
    %75 = vector.extract_strided_slice %72 {offsets = [0, 64], sizes = [8, 32], strides = [1, 1]} : vector<8x128xf32> to vector<8x32xf32>
    %76 = vector.extract_strided_slice %72 {offsets = [0, 96], sizes = [8, 32], strides = [1, 1]} : vector<8x128xf32> to vector<8x32xf32>
    %77 = arith.mulf %74, %22 : vector<8x32xf32>
    %78 = arith.mulf %73, %75 : vector<8x32xf32>
    %79 = arith.addf %77, %78 : vector<8x32xf32>
    %80 = math.tanh %79 : vector<8x32xf32>
    %81 = arith.mulf %76, %80 : vector<8x32xf32>
    %cst_23 = arith.constant 0.000000e+00 : f32
    %82 = vector.broadcast %cst_23 : f32 to vector<8x1xf32>
    %83 = arith.cmpf ogt, %65, %82 : vector<8x1xf32>
    %84 = vector.shape_cast %83 : vector<8x1xi1> to vector<8x1xi1>
    %85 = vector.broadcast %84 : vector<8x1xi1> to vector<8x32xi1>
    %86 = arith.select %85, %81, %22 : vector<8x32xi1>, vector<8x32xf32>
    %87 = vector.shape_cast %83 : vector<8x1xi1> to vector<8x1xi1>
    %88 = vector.broadcast %87 : vector<8x1xi1> to vector<8x32xi1>
    %89 = arith.select %88, %79, %22 : vector<8x32xi1>, vector<8x32xf32>
    %90 = arith.index_cast %25 : i32 to index
    %c0_24 = arith.constant 0 : index
    %91 = vector.load %arg13[%90, %c0_24] : memref<64x64xf32, #tpu.memory_space<vmem>>, vector<8x32xf32>
    tpu.vector_store %arg13[%90, %c0_24], %60 {strides = array<i32>} : memref<64x64xf32, #tpu.memory_space<vmem>>, vector<8x32xf32>,
    %92 = arith.index_cast %27 : i32 to index
    %c32 = arith.constant 32 : index
    %93 = vector.load %arg13[%92, %c32] : memref<64x64xf32, #tpu.memory_space<vmem>>, vector<8x32xf32>
    tpu.vector_store %arg13[%92, %c32], %86 {strides = array<i32>} : memref<64x64xf32, #tpu.memory_space<vmem>>, vector<8x32xf32>,
    %c1_i32 = arith.constant 1 : i32
    %c7_i32_25 = arith.constant 7 : i32
    %94 = arith.subi %c7_i32_25, %c1_i32 : i32
    %c8_i32_26 = arith.constant 8 : i32
    %95 = arith.muli %c1_i32, %c8_i32_26 : i32
    %96 = tpu.assume_multiple %95, 8 : i32
    %c8_i32_27 = arith.constant 8 : i32
    %97 = arith.muli %94, %c8_i32_27 : i32
    %98 = tpu.assume_multiple %97, 8 : i32
    %99 = arith.index_cast %96 : i32 to index
    %c0_28 = arith.constant 0 : index
    %100 = vector.load %arg15[%99, %c0_28] : memref<64x256xf32, #tpu.memory_space<vmem>>, vector<8x128xf32>
    %101 = arith.truncf %60 : vector<8x32xf32> to vector<8x32xbf16>
    %cst_29 = arith.constant dense<0.000000e+00> : vector<8x128xf32>
    %102 = tpu.matmul %101, %20, %cst_29 {dimension_numbers = #tpu.dot_dimension_numbers<[1], [0], [0], [1], [0, 0, 1, 1], [], []>} : vector<8x32xbf16>, vector<32x128xbf16>, vector<8x128xf32> -> vector<8x128xf32>
    %103 = arith.addf %100, %102 : vector<8x128xf32>
    %104 = arith.index_cast %98 : i32 to index
    %c128_30 = arith.constant 128 : index
    %105 = vector.load %arg15[%104, %c128_30] : memref<64x256xf32, #tpu.memory_space<vmem>>, vector<8x128xf32>
    %106 = arith.truncf %86 : vector<8x32xf32> to vector<8x32xbf16>
    %cst_31 = arith.constant dense<0.000000e+00> : vector<8x128xf32>
    %107 = tpu.matmul %106, %21, %cst_31 {dimension_numbers = #tpu.dot_dimension_numbers<[1], [0], [0], [1], [0, 0, 1, 1], [], []>} : vector<8x32xbf16>, vector<32x128xbf16>, vector<8x128xf32> -> vector<8x128xf32>
    %108 = arith.addf %105, %107 : vector<8x128xf32>
    %109 = arith.index_cast %96 : i32 to index
    %c0_32 = arith.constant 0 : index
    %110 = vector.load %arg1[%109, %c0_32] : memref<64x1xf32, #tpu.memory_space<vmem>>, vector<8x1xf32>
    %111 = vector.broadcast %8 : vector<1x128xf32> to vector<8x128xf32>
    %112 = arith.mulf %103, %111 : vector<8x128xf32>
    %113 = math.tanh %112 : vector<8x128xf32>
    %114 = vector.broadcast %8 : vector<1x128xf32> to vector<8x128xf32>
    %115 = arith.mulf %113, %114 : vector<8x128xf32>
    %116 = vector.broadcast %11 : vector<1x128xf32> to vector<8x128xf32>
    %117 = arith.addf %115, %116 : vector<8x128xf32>
    %118 = vector.extract_strided_slice %117 {offsets = [0, 0], sizes = [8, 32], strides = [1, 1]} : vector<8x128xf32> to vector<8x32xf32>
    %119 = vector.extract_strided_slice %117 {offsets = [0, 32], sizes = [8, 32], strides = [1, 1]} : vector<8x128xf32> to vector<8x32xf32>
    %120 = vector.extract_strided_slice %117 {offsets = [0, 64], sizes = [8, 32], strides = [1, 1]} : vector<8x128xf32> to vector<8x32xf32>
    %121 = vector.extract_strided_slice %117 {offsets = [0, 96], sizes = [8, 32], strides = [1, 1]} : vector<8x128xf32> to vector<8x32xf32>
    %122 = arith.mulf %119, %63 : vector<8x32xf32>
    %123 = arith.mulf %118, %120 : vector<8x32xf32>
    %124 = arith.addf %122, %123 : vector<8x32xf32>
    %125 = math.tanh %124 : vector<8x32xf32>
    %126 = arith.mulf %121, %125 : vector<8x32xf32>
    %cst_33 = arith.constant 0.000000e+00 : f32
    %127 = vector.broadcast %cst_33 : f32 to vector<8x1xf32>
    %128 = arith.cmpf ogt, %110, %127 : vector<8x1xf32>
    %129 = vector.shape_cast %128 : vector<8x1xi1> to vector<8x1xi1>
    %130 = vector.broadcast %129 : vector<8x1xi1> to vector<8x32xi1>
    %131 = arith.select %130, %126, %60 : vector<8x32xi1>, vector<8x32xf32>
    %132 = vector.shape_cast %128 : vector<8x1xi1> to vector<8x1xi1>
    %133 = vector.broadcast %132 : vector<8x1xi1> to vector<8x32xi1>
    %134 = arith.select %133, %124, %63 : vector<8x32xi1>, vector<8x32xf32>
    %135 = arith.index_cast %98 : i32 to index
    %c0_34 = arith.constant 0 : index
    %136 = vector.load %arg1[%135, %c0_34] : memref<64x1xf32, #tpu.memory_space<vmem>>, vector<8x1xf32>
    %137 = vector.broadcast %8 : vector<1x128xf32> to vector<8x128xf32>
    %138 = arith.mulf %108, %137 : vector<8x128xf32>
    %139 = math.tanh %138 : vector<8x128xf32>
    %140 = vector.broadcast %8 : vector<1x128xf32> to vector<8x128xf32>
    %141 = arith.mulf %139, %140 : vector<8x128xf32>
    %142 = vector.broadcast %11 : vector<1x128xf32> to vector<8x128xf32>
    %143 = arith.addf %141, %142 : vector<8x128xf32>
    %144 = vector.extract_strided_slice %143 {offsets = [0, 0], sizes = [8, 32], strides = [1, 1]} : vector<8x128xf32> to vector<8x32xf32>
    %145 = vector.extract_strided_slice %143 {offsets = [0, 32], sizes = [8, 32], strides = [1, 1]} : vector<8x128xf32> to vector<8x32xf32>
    %146 = vector.extract_strided_slice %143 {offsets = [0, 64], sizes = [8, 32], strides = [1, 1]} : vector<8x128xf32> to vector<8x32xf32>
    %147 = vector.extract_strided_slice %143 {offsets = [0, 96], sizes = [8, 32], strides = [1, 1]} : vector<8x128xf32> to vector<8x32xf32>
    %148 = arith.mulf %145, %89 : vector<8x32xf32>
    %149 = arith.mulf %144, %146 : vector<8x32xf32>
    %150 = arith.addf %148, %149 : vector<8x32xf32>
    %151 = math.tanh %150 : vector<8x32xf32>
    %152 = arith.mulf %147, %151 : vector<8x32xf32>
    %cst_35 = arith.constant 0.000000e+00 : f32
    %153 = vector.broadcast %cst_35 : f32 to vector<8x1xf32>
    %154 = arith.cmpf ogt, %136, %153 : vector<8x1xf32>
    %155 = vector.shape_cast %154 : vector<8x1xi1> to vector<8x1xi1>
    %156 = vector.broadcast %155 : vector<8x1xi1> to vector<8x32xi1>
    %157 = arith.select %156, %152, %86 : vector<8x32xi1>, vector<8x32xf32>
    %158 = vector.shape_cast %154 : vector<8x1xi1> to vector<8x1xi1>
    %159 = vector.broadcast %158 : vector<8x1xi1> to vector<8x32xi1>
    %160 = arith.select %159, %150, %89 : vector<8x32xi1>, vector<8x32xf32>
    %161 = arith.index_cast %96 : i32 to index
    %c0_36 = arith.constant 0 : index
    %162 = vector.load %arg13[%161, %c0_36] : memref<64x64xf32, #tpu.memory_space<vmem>>, vector<8x32xf32>
    tpu.vector_store %arg13[%161, %c0_36], %131 {strides = array<i32>} : memref<64x64xf32, #tpu.memory_space<vmem>>, vector<8x32xf32>,
    %163 = arith.index_cast %98 : i32 to index
    %c32_37 = arith.constant 32 : index
    %164 = vector.load %arg13[%163, %c32_37] : memref<64x64xf32, #tpu.memory_space<vmem>>, vector<8x32xf32>
    tpu.vector_store %arg13[%163, %c32_37], %157 {strides = array<i32>} : memref<64x64xf32, #tpu.memory_space<vmem>>, vector<8x32xf32>,
    %c2_i32 = arith.constant 2 : i32
    %c7_i32_38 = arith.constant 7 : i32
    %165 = arith.subi %c7_i32_38, %c2_i32 : i32
    %c8_i32_39 = arith.constant 8 : i32
    %166 = arith.muli %c2_i32, %c8_i32_39 : i32
    %167 = tpu.assume_multiple %166, 8 : i32
    %c8_i32_40 = arith.constant 8 : i32
    %168 = arith.muli %165, %c8_i32_40 : i32
    %169 = tpu.assume_multiple %168, 8 : i32
    %170 = arith.index_cast %167 : i32 to index
    %c0_41 = arith.constant 0 : index
    %171 = vector.load %arg15[%170, %c0_41] : memref<64x256xf32, #tpu.memory_space<vmem>>, vector<8x128xf32>
    %172 = arith.truncf %131 : vector<8x32xf32> to vector<8x32xbf16>
    %cst_42 = arith.constant dense<0.000000e+00> : vector<8x128xf32>
    %173 = tpu.matmul %172, %20, %cst_42 {dimension_numbers = #tpu.dot_dimension_numbers<[1], [0], [0], [1], [0, 0, 1, 1], [], []>} : vector<8x32xbf16>, vector<32x128xbf16>, vector<8x128xf32> -> vector<8x128xf32>
    %174 = arith.addf %171, %173 : vector<8x128xf32>
    %175 = arith.index_cast %169 : i32 to index
    %c128_43 = arith.constant 128 : index
    %176 = vector.load %arg15[%175, %c128_43] : memref<64x256xf32, #tpu.memory_space<vmem>>, vector<8x128xf32>
    %177 = arith.truncf %157 : vector<8x32xf32> to vector<8x32xbf16>
    %cst_44 = arith.constant dense<0.000000e+00> : vector<8x128xf32>
    %178 = tpu.matmul %177, %21, %cst_44 {dimension_numbers = #tpu.dot_dimension_numbers<[1], [0], [0], [1], [0, 0, 1, 1], [], []>} : vector<8x32xbf16>, vector<32x128xbf16>, vector<8x128xf32> -> vector<8x128xf32>
    %179 = arith.addf %176, %178 : vector<8x128xf32>
    %180 = arith.index_cast %167 : i32 to index
    %c0_45 = arith.constant 0 : index
    %181 = vector.load %arg1[%180, %c0_45] : memref<64x1xf32, #tpu.memory_space<vmem>>, vector<8x1xf32>
    %182 = vector.broadcast %8 : vector<1x128xf32> to vector<8x128xf32>
    %183 = arith.mulf %174, %182 : vector<8x128xf32>
    %184 = math.tanh %183 : vector<8x128xf32>
    %185 = vector.broadcast %8 : vector<1x128xf32> to vector<8x128xf32>
    %186 = arith.mulf %184, %185 : vector<8x128xf32>
    %187 = vector.broadcast %11 : vector<1x128xf32> to vector<8x128xf32>
    %188 = arith.addf %186, %187 : vector<8x128xf32>
    %189 = vector.extract_strided_slice %188 {offsets = [0, 0], sizes = [8, 32], strides = [1, 1]} : vector<8x128xf32> to vector<8x32xf32>
    %190 = vector.extract_strided_slice %188 {offsets = [0, 32], sizes = [8, 32], strides = [1, 1]} : vector<8x128xf32> to vector<8x32xf32>
    %191 = vector.extract_strided_slice %188 {offsets = [0, 64], sizes = [8, 32], strides = [1, 1]} : vector<8x128xf32> to vector<8x32xf32>
    %192 = vector.extract_strided_slice %188 {offsets = [0, 96], sizes = [8, 32], strides = [1, 1]} : vector<8x128xf32> to vector<8x32xf32>
    %193 = arith.mulf %190, %134 : vector<8x32xf32>
    %194 = arith.mulf %189, %191 : vector<8x32xf32>
    %195 = arith.addf %193, %194 : vector<8x32xf32>
    %196 = math.tanh %195 : vector<8x32xf32>
    %197 = arith.mulf %192, %196 : vector<8x32xf32>
    %cst_46 = arith.constant 0.000000e+00 : f32
    %198 = vector.broadcast %cst_46 : f32 to vector<8x1xf32>
    %199 = arith.cmpf ogt, %181, %198 : vector<8x1xf32>
    %200 = vector.shape_cast %199 : vector<8x1xi1> to vector<8x1xi1>
    %201 = vector.broadcast %200 : vector<8x1xi1> to vector<8x32xi1>
    %202 = arith.select %201, %197, %131 : vector<8x32xi1>, vector<8x32xf32>
    %203 = vector.shape_cast %199 : vector<8x1xi1> to vector<8x1xi1>
    %204 = vector.broadcast %203 : vector<8x1xi1> to vector<8x32xi1>
    %205 = arith.select %204, %195, %134 : vector<8x32xi1>, vector<8x32xf32>
    %206 = arith.index_cast %169 : i32 to index
    %c0_47 = arith.constant 0 : index
    %207 = vector.load %arg1[%206, %c0_47] : memref<64x1xf32, #tpu.memory_space<vmem>>, vector<8x1xf32>
    %208 = vector.broadcast %8 : vector<1x128xf32> to vector<8x128xf32>
    %209 = arith.mulf %179, %208 : vector<8x128xf32>
    %210 = math.tanh %209 : vector<8x128xf32>
    %211 = vector.broadcast %8 : vector<1x128xf32> to vector<8x128xf32>
    %212 = arith.mulf %210, %211 : vector<8x128xf32>
    %213 = vector.broadcast %11 : vector<1x128xf32> to vector<8x128xf32>
    %214 = arith.addf %212, %213 : vector<8x128xf32>
    %215 = vector.extract_strided_slice %214 {offsets = [0, 0], sizes = [8, 32], strides = [1, 1]} : vector<8x128xf32> to vector<8x32xf32>
    %216 = vector.extract_strided_slice %214 {offsets = [0, 32], sizes = [8, 32], strides = [1, 1]} : vector<8x128xf32> to vector<8x32xf32>
    %217 = vector.extract_strided_slice %214 {offsets = [0, 64], sizes = [8, 32], strides = [1, 1]} : vector<8x128xf32> to vector<8x32xf32>
    %218 = vector.extract_strided_slice %214 {offsets = [0, 96], sizes = [8, 32], strides = [1, 1]} : vector<8x128xf32> to vector<8x32xf32>
    %219 = arith.mulf %216, %160 : vector<8x32xf32>
    %220 = arith.mulf %215, %217 : vector<8x32xf32>
    %221 = arith.addf %219, %220 : vector<8x32xf32>
    %222 = math.tanh %221 : vector<8x32xf32>
    %223 = arith.mulf %218, %222 : vector<8x32xf32>
    %cst_48 = arith.constant 0.000000e+00 : f32
    %224 = vector.broadcast %cst_48 : f32 to vector<8x1xf32>
    %225 = arith.cmpf ogt, %207, %224 : vector<8x1xf32>
    %226 = vector.shape_cast %225 : vector<8x1xi1> to vector<8x1xi1>
    %227 = vector.broadcast %226 : vector<8x1xi1> to vector<8x32xi1>
    %228 = arith.select %227, %223, %157 : vector<8x32xi1>, vector<8x32xf32>
    %229 = vector.shape_cast %225 : vector<8x1xi1> to vector<8x1xi1>
    %230 = vector.broadcast %229 : vector<8x1xi1> to vector<8x32xi1>
    %231 = arith.select %230, %221, %160 : vector<8x32xi1>, vector<8x32xf32>
    %232 = arith.index_cast %167 : i32 to index
    %c0_49 = arith.constant 0 : index
    %233 = vector.load %arg13[%232, %c0_49] : memref<64x64xf32, #tpu.memory_space<vmem>>, vector<8x32xf32>
    tpu.vector_store %arg13[%232, %c0_49], %202 {strides = array<i32>} : memref<64x64xf32, #tpu.memory_space<vmem>>, vector<8x32xf32>,
    %234 = arith.index_cast %169 : i32 to index
    %c32_50 = arith.constant 32 : index
    %235 = vector.load %arg13[%234, %c32_50] : memref<64x64xf32, #tpu.memory_space<vmem>>, vector<8x32xf32>
    tpu.vector_store %arg13[%234, %c32_50], %228 {strides = array<i32>} : memref<64x64xf32, #tpu.memory_space<vmem>>, vector<8x32xf32>,
    %c3_i32 = arith.constant 3 : i32
    %c7_i32_51 = arith.constant 7 : i32
    %236 = arith.subi %c7_i32_51, %c3_i32 : i32
    %c8_i32_52 = arith.constant 8 : i32
    %237 = arith.muli %c3_i32, %c8_i32_52 : i32
    %238 = tpu.assume_multiple %237, 8 : i32
    %c8_i32_53 = arith.constant 8 : i32
    %239 = arith.muli %236, %c8_i32_53 : i32
    %240 = tpu.assume_multiple %239, 8 : i32
    %241 = arith.index_cast %238 : i32 to index
    %c0_54 = arith.constant 0 : index
    %242 = vector.load %arg15[%241, %c0_54] : memref<64x256xf32, #tpu.memory_space<vmem>>, vector<8x128xf32>
    %243 = arith.truncf %202 : vector<8x32xf32> to vector<8x32xbf16>
    %cst_55 = arith.constant dense<0.000000e+00> : vector<8x128xf32>
    %244 = tpu.matmul %243, %20, %cst_55 {dimension_numbers = #tpu.dot_dimension_numbers<[1], [0], [0], [1], [0, 0, 1, 1], [], []>} : vector<8x32xbf16>, vector<32x128xbf16>, vector<8x128xf32> -> vector<8x128xf32>
    %245 = arith.addf %242, %244 : vector<8x128xf32>
    %246 = arith.index_cast %240 : i32 to index
    %c128_56 = arith.constant 128 : index
    %247 = vector.load %arg15[%246, %c128_56] : memref<64x256xf32, #tpu.memory_space<vmem>>, vector<8x128xf32>
    %248 = arith.truncf %228 : vector<8x32xf32> to vector<8x32xbf16>
    %cst_57 = arith.constant dense<0.000000e+00> : vector<8x128xf32>
    %249 = tpu.matmul %248, %21, %cst_57 {dimension_numbers = #tpu.dot_dimension_numbers<[1], [0], [0], [1], [0, 0, 1, 1], [], []>} : vector<8x32xbf16>, vector<32x128xbf16>, vector<8x128xf32> -> vector<8x128xf32>
    %250 = arith.addf %247, %249 : vector<8x128xf32>
    %251 = arith.index_cast %238 : i32 to index
    %c0_58 = arith.constant 0 : index
    %252 = vector.load %arg1[%251, %c0_58] : memref<64x1xf32, #tpu.memory_space<vmem>>, vector<8x1xf32>
    %253 = vector.broadcast %8 : vector<1x128xf32> to vector<8x128xf32>
    %254 = arith.mulf %245, %253 : vector<8x128xf32>
    %255 = math.tanh %254 : vector<8x128xf32>
    %256 = vector.broadcast %8 : vector<1x128xf32> to vector<8x128xf32>
    %257 = arith.mulf %255, %256 : vector<8x128xf32>
    %258 = vector.broadcast %11 : vector<1x128xf32> to vector<8x128xf32>
    %259 = arith.addf %257, %258 : vector<8x128xf32>
    %260 = vector.extract_strided_slice %259 {offsets = [0, 0], sizes = [8, 32], strides = [1, 1]} : vector<8x128xf32> to vector<8x32xf32>
    %261 = vector.extract_strided_slice %259 {offsets = [0, 32], sizes = [8, 32], strides = [1, 1]} : vector<8x128xf32> to vector<8x32xf32>
    %262 = vector.extract_strided_slice %259 {offsets = [0, 64], sizes = [8, 32], strides = [1, 1]} : vector<8x128xf32> to vector<8x32xf32>
    %263 = vector.extract_strided_slice %259 {offsets = [0, 96], sizes = [8, 32], strides = [1, 1]} : vector<8x128xf32> to vector<8x32xf32>
    %264 = arith.mulf %261, %205 : vector<8x32xf32>
    %265 = arith.mulf %260, %262 : vector<8x32xf32>
    %266 = arith.addf %264, %265 : vector<8x32xf32>
    %267 = math.tanh %266 : vector<8x32xf32>
    %268 = arith.mulf %263, %267 : vector<8x32xf32>
    %cst_59 = arith.constant 0.000000e+00 : f32
    %269 = vector.broadcast %cst_59 : f32 to vector<8x1xf32>
    %270 = arith.cmpf ogt, %252, %269 : vector<8x1xf32>
    %271 = vector.shape_cast %270 : vector<8x1xi1> to vector<8x1xi1>
    %272 = vector.broadcast %271 : vector<8x1xi1> to vector<8x32xi1>
    %273 = arith.select %272, %268, %202 : vector<8x32xi1>, vector<8x32xf32>
    %274 = vector.shape_cast %270 : vector<8x1xi1> to vector<8x1xi1>
    %275 = vector.broadcast %274 : vector<8x1xi1> to vector<8x32xi1>
    %276 = arith.select %275, %266, %205 : vector<8x32xi1>, vector<8x32xf32>
    %277 = arith.index_cast %240 : i32 to index
    %c0_60 = arith.constant 0 : index
    %278 = vector.load %arg1[%277, %c0_60] : memref<64x1xf32, #tpu.memory_space<vmem>>, vector<8x1xf32>
    %279 = vector.broadcast %8 : vector<1x128xf32> to vector<8x128xf32>
    %280 = arith.mulf %250, %279 : vector<8x128xf32>
    %281 = math.tanh %280 : vector<8x128xf32>
    %282 = vector.broadcast %8 : vector<1x128xf32> to vector<8x128xf32>
    %283 = arith.mulf %281, %282 : vector<8x128xf32>
    %284 = vector.broadcast %11 : vector<1x128xf32> to vector<8x128xf32>
    %285 = arith.addf %283, %284 : vector<8x128xf32>
    %286 = vector.extract_strided_slice %285 {offsets = [0, 0], sizes = [8, 32], strides = [1, 1]} : vector<8x128xf32> to vector<8x32xf32>
    %287 = vector.extract_strided_slice %285 {offsets = [0, 32], sizes = [8, 32], strides = [1, 1]} : vector<8x128xf32> to vector<8x32xf32>
    %288 = vector.extract_strided_slice %285 {offsets = [0, 64], sizes = [8, 32], strides = [1, 1]} : vector<8x128xf32> to vector<8x32xf32>
    %289 = vector.extract_strided_slice %285 {offsets = [0, 96], sizes = [8, 32], strides = [1, 1]} : vector<8x128xf32> to vector<8x32xf32>
    %290 = arith.mulf %287, %231 : vector<8x32xf32>
    %291 = arith.mulf %286, %288 : vector<8x32xf32>
    %292 = arith.addf %290, %291 : vector<8x32xf32>
    %293 = math.tanh %292 : vector<8x32xf32>
    %294 = arith.mulf %289, %293 : vector<8x32xf32>
    %cst_61 = arith.constant 0.000000e+00 : f32
    %295 = vector.broadcast %cst_61 : f32 to vector<8x1xf32>
    %296 = arith.cmpf ogt, %278, %295 : vector<8x1xf32>
    %297 = vector.shape_cast %296 : vector<8x1xi1> to vector<8x1xi1>
    %298 = vector.broadcast %297 : vector<8x1xi1> to vector<8x32xi1>
    %299 = arith.select %298, %294, %228 : vector<8x32xi1>, vector<8x32xf32>
    %300 = vector.shape_cast %296 : vector<8x1xi1> to vector<8x1xi1>
    %301 = vector.broadcast %300 : vector<8x1xi1> to vector<8x32xi1>
    %302 = arith.select %301, %292, %231 : vector<8x32xi1>, vector<8x32xf32>
    %303 = arith.index_cast %238 : i32 to index
    %c0_62 = arith.constant 0 : index
    %304 = vector.load %arg13[%303, %c0_62] : memref<64x64xf32, #tpu.memory_space<vmem>>, vector<8x32xf32>
    tpu.vector_store %arg13[%303, %c0_62], %273 {strides = array<i32>} : memref<64x64xf32, #tpu.memory_space<vmem>>, vector<8x32xf32>,
    %305 = arith.index_cast %240 : i32 to index
    %c32_63 = arith.constant 32 : index
    %306 = vector.load %arg13[%305, %c32_63] : memref<64x64xf32, #tpu.memory_space<vmem>>, vector<8x32xf32>
    tpu.vector_store %arg13[%305, %c32_63], %299 {strides = array<i32>} : memref<64x64xf32, #tpu.memory_space<vmem>>, vector<8x32xf32>,
    %c4_i32 = arith.constant 4 : i32
    %c7_i32_64 = arith.constant 7 : i32
    %307 = arith.subi %c7_i32_64, %c4_i32 : i32
    %c8_i32_65 = arith.constant 8 : i32
    %308 = arith.muli %c4_i32, %c8_i32_65 : i32
    %309 = tpu.assume_multiple %308, 8 : i32
    %c8_i32_66 = arith.constant 8 : i32
    %310 = arith.muli %307, %c8_i32_66 : i32
    %311 = tpu.assume_multiple %310, 8 : i32
    %312 = arith.index_cast %309 : i32 to index
    %c0_67 = arith.constant 0 : index
    %313 = vector.load %arg15[%312, %c0_67] : memref<64x256xf32, #tpu.memory_space<vmem>>, vector<8x128xf32>
    %314 = arith.truncf %273 : vector<8x32xf32> to vector<8x32xbf16>
    %cst_68 = arith.constant dense<0.000000e+00> : vector<8x128xf32>
    %315 = tpu.matmul %314, %20, %cst_68 {dimension_numbers = #tpu.dot_dimension_numbers<[1], [0], [0], [1], [0, 0, 1, 1], [], []>} : vector<8x32xbf16>, vector<32x128xbf16>, vector<8x128xf32> -> vector<8x128xf32>
    %316 = arith.addf %313, %315 : vector<8x128xf32>
    %317 = arith.index_cast %311 : i32 to index
    %c128_69 = arith.constant 128 : index
    %318 = vector.load %arg15[%317, %c128_69] : memref<64x256xf32, #tpu.memory_space<vmem>>, vector<8x128xf32>
    %319 = arith.truncf %299 : vector<8x32xf32> to vector<8x32xbf16>
    %cst_70 = arith.constant dense<0.000000e+00> : vector<8x128xf32>
    %320 = tpu.matmul %319, %21, %cst_70 {dimension_numbers = #tpu.dot_dimension_numbers<[1], [0], [0], [1], [0, 0, 1, 1], [], []>} : vector<8x32xbf16>, vector<32x128xbf16>, vector<8x128xf32> -> vector<8x128xf32>
    %321 = arith.addf %318, %320 : vector<8x128xf32>
    %322 = arith.index_cast %309 : i32 to index
    %c0_71 = arith.constant 0 : index
    %323 = vector.load %arg1[%322, %c0_71] : memref<64x1xf32, #tpu.memory_space<vmem>>, vector<8x1xf32>
    %324 = vector.broadcast %8 : vector<1x128xf32> to vector<8x128xf32>
    %325 = arith.mulf %316, %324 : vector<8x128xf32>
    %326 = math.tanh %325 : vector<8x128xf32>
    %327 = vector.broadcast %8 : vector<1x128xf32> to vector<8x128xf32>
    %328 = arith.mulf %326, %327 : vector<8x128xf32>
    %329 = vector.broadcast %11 : vector<1x128xf32> to vector<8x128xf32>
    %330 = arith.addf %328, %329 : vector<8x128xf32>
    %331 = vector.extract_strided_slice %330 {offsets = [0, 0], sizes = [8, 32], strides = [1, 1]} : vector<8x128xf32> to vector<8x32xf32>
    %332 = vector.extract_strided_slice %330 {offsets = [0, 32], sizes = [8, 32], strides = [1, 1]} : vector<8x128xf32> to vector<8x32xf32>
    %333 = vector.extract_strided_slice %330 {offsets = [0, 64], sizes = [8, 32], strides = [1, 1]} : vector<8x128xf32> to vector<8x32xf32>
    %334 = vector.extract_strided_slice %330 {offsets = [0, 96], sizes = [8, 32], strides = [1, 1]} : vector<8x128xf32> to vector<8x32xf32>
    %335 = arith.mulf %332, %276 : vector<8x32xf32>
    %336 = arith.mulf %331, %333 : vector<8x32xf32>
    %337 = arith.addf %335, %336 : vector<8x32xf32>
    %338 = math.tanh %337 : vector<8x32xf32>
    %339 = arith.mulf %334, %338 : vector<8x32xf32>
    %cst_72 = arith.constant 0.000000e+00 : f32
    %340 = vector.broadcast %cst_72 : f32 to vector<8x1xf32>
    %341 = arith.cmpf ogt, %323, %340 : vector<8x1xf32>
    %342 = vector.shape_cast %341 : vector<8x1xi1> to vector<8x1xi1>
    %343 = vector.broadcast %342 : vector<8x1xi1> to vector<8x32xi1>
    %344 = arith.select %343, %339, %273 : vector<8x32xi1>, vector<8x32xf32>
    %345 = vector.shape_cast %341 : vector<8x1xi1> to vector<8x1xi1>
    %346 = vector.broadcast %345 : vector<8x1xi1> to vector<8x32xi1>
    %347 = arith.select %346, %337, %276 : vector<8x32xi1>, vector<8x32xf32>
    %348 = arith.index_cast %311 : i32 to index
    %c0_73 = arith.constant 0 : index
    %349 = vector.load %arg1[%348, %c0_73] : memref<64x1xf32, #tpu.memory_space<vmem>>, vector<8x1xf32>
    %350 = vector.broadcast %8 : vector<1x128xf32> to vector<8x128xf32>
    %351 = arith.mulf %321, %350 : vector<8x128xf32>
    %352 = math.tanh %351 : vector<8x128xf32>
    %353 = vector.broadcast %8 : vector<1x128xf32> to vector<8x128xf32>
    %354 = arith.mulf %352, %353 : vector<8x128xf32>
    %355 = vector.broadcast %11 : vector<1x128xf32> to vector<8x128xf32>
    %356 = arith.addf %354, %355 : vector<8x128xf32>
    %357 = vector.extract_strided_slice %356 {offsets = [0, 0], sizes = [8, 32], strides = [1, 1]} : vector<8x128xf32> to vector<8x32xf32>
    %358 = vector.extract_strided_slice %356 {offsets = [0, 32], sizes = [8, 32], strides = [1, 1]} : vector<8x128xf32> to vector<8x32xf32>
    %359 = vector.extract_strided_slice %356 {offsets = [0, 64], sizes = [8, 32], strides = [1, 1]} : vector<8x128xf32> to vector<8x32xf32>
    %360 = vector.extract_strided_slice %356 {offsets = [0, 96], sizes = [8, 32], strides = [1, 1]} : vector<8x128xf32> to vector<8x32xf32>
    %361 = arith.mulf %358, %302 : vector<8x32xf32>
    %362 = arith.mulf %357, %359 : vector<8x32xf32>
    %363 = arith.addf %361, %362 : vector<8x32xf32>
    %364 = math.tanh %363 : vector<8x32xf32>
    %365 = arith.mulf %360, %364 : vector<8x32xf32>
    %cst_74 = arith.constant 0.000000e+00 : f32
    %366 = vector.broadcast %cst_74 : f32 to vector<8x1xf32>
    %367 = arith.cmpf ogt, %349, %366 : vector<8x1xf32>
    %368 = vector.shape_cast %367 : vector<8x1xi1> to vector<8x1xi1>
    %369 = vector.broadcast %368 : vector<8x1xi1> to vector<8x32xi1>
    %370 = arith.select %369, %365, %299 : vector<8x32xi1>, vector<8x32xf32>
    %371 = vector.shape_cast %367 : vector<8x1xi1> to vector<8x1xi1>
    %372 = vector.broadcast %371 : vector<8x1xi1> to vector<8x32xi1>
    %373 = arith.select %372, %363, %302 : vector<8x32xi1>, vector<8x32xf32>
    %374 = arith.index_cast %309 : i32 to index
    %c0_75 = arith.constant 0 : index
    %375 = vector.load %arg13[%374, %c0_75] : memref<64x64xf32, #tpu.memory_space<vmem>>, vector<8x32xf32>
    tpu.vector_store %arg13[%374, %c0_75], %344 {strides = array<i32>} : memref<64x64xf32, #tpu.memory_space<vmem>>, vector<8x32xf32>,
    %376 = arith.index_cast %311 : i32 to index
    %c32_76 = arith.constant 32 : index
    %377 = vector.load %arg13[%376, %c32_76] : memref<64x64xf32, #tpu.memory_space<vmem>>, vector<8x32xf32>
    tpu.vector_store %arg13[%376, %c32_76], %370 {strides = array<i32>} : memref<64x64xf32, #tpu.memory_space<vmem>>, vector<8x32xf32>,
    %c5_i32 = arith.constant 5 : i32
    %c7_i32_77 = arith.constant 7 : i32
    %378 = arith.subi %c7_i32_77, %c5_i32 : i32
    %c8_i32_78 = arith.constant 8 : i32
    %379 = arith.muli %c5_i32, %c8_i32_78 : i32
    %380 = tpu.assume_multiple %379, 8 : i32
    %c8_i32_79 = arith.constant 8 : i32
    %381 = arith.muli %378, %c8_i32_79 : i32
    %382 = tpu.assume_multiple %381, 8 : i32
    %383 = arith.index_cast %380 : i32 to index
    %c0_80 = arith.constant 0 : index
    %384 = vector.load %arg15[%383, %c0_80] : memref<64x256xf32, #tpu.memory_space<vmem>>, vector<8x128xf32>
    %385 = arith.truncf %344 : vector<8x32xf32> to vector<8x32xbf16>
    %cst_81 = arith.constant dense<0.000000e+00> : vector<8x128xf32>
    %386 = tpu.matmul %385, %20, %cst_81 {dimension_numbers = #tpu.dot_dimension_numbers<[1], [0], [0], [1], [0, 0, 1, 1], [], []>} : vector<8x32xbf16>, vector<32x128xbf16>, vector<8x128xf32> -> vector<8x128xf32>
    %387 = arith.addf %384, %386 : vector<8x128xf32>
    %388 = arith.index_cast %382 : i32 to index
    %c128_82 = arith.constant 128 : index
    %389 = vector.load %arg15[%388, %c128_82] : memref<64x256xf32, #tpu.memory_space<vmem>>, vector<8x128xf32>
    %390 = arith.truncf %370 : vector<8x32xf32> to vector<8x32xbf16>
    %cst_83 = arith.constant dense<0.000000e+00> : vector<8x128xf32>
    %391 = tpu.matmul %390, %21, %cst_83 {dimension_numbers = #tpu.dot_dimension_numbers<[1], [0], [0], [1], [0, 0, 1, 1], [], []>} : vector<8x32xbf16>, vector<32x128xbf16>, vector<8x128xf32> -> vector<8x128xf32>
    %392 = arith.addf %389, %391 : vector<8x128xf32>
    %393 = arith.index_cast %380 : i32 to index
    %c0_84 = arith.constant 0 : index
    %394 = vector.load %arg1[%393, %c0_84] : memref<64x1xf32, #tpu.memory_space<vmem>>, vector<8x1xf32>
    %395 = vector.broadcast %8 : vector<1x128xf32> to vector<8x128xf32>
    %396 = arith.mulf %387, %395 : vector<8x128xf32>
    %397 = math.tanh %396 : vector<8x128xf32>
    %398 = vector.broadcast %8 : vector<1x128xf32> to vector<8x128xf32>
    %399 = arith.mulf %397, %398 : vector<8x128xf32>
    %400 = vector.broadcast %11 : vector<1x128xf32> to vector<8x128xf32>
    %401 = arith.addf %399, %400 : vector<8x128xf32>
    %402 = vector.extract_strided_slice %401 {offsets = [0, 0], sizes = [8, 32], strides = [1, 1]} : vector<8x128xf32> to vector<8x32xf32>
    %403 = vector.extract_strided_slice %401 {offsets = [0, 32], sizes = [8, 32], strides = [1, 1]} : vector<8x128xf32> to vector<8x32xf32>
    %404 = vector.extract_strided_slice %401 {offsets = [0, 64], sizes = [8, 32], strides = [1, 1]} : vector<8x128xf32> to vector<8x32xf32>
    %405 = vector.extract_strided_slice %401 {offsets = [0, 96], sizes = [8, 32], strides = [1, 1]} : vector<8x128xf32> to vector<8x32xf32>
    %406 = arith.mulf %403, %347 : vector<8x32xf32>
    %407 = arith.mulf %402, %404 : vector<8x32xf32>
    %408 = arith.addf %406, %407 : vector<8x32xf32>
    %409 = math.tanh %408 : vector<8x32xf32>
    %410 = arith.mulf %405, %409 : vector<8x32xf32>
    %cst_85 = arith.constant 0.000000e+00 : f32
    %411 = vector.broadcast %cst_85 : f32 to vector<8x1xf32>
    %412 = arith.cmpf ogt, %394, %411 : vector<8x1xf32>
    %413 = vector.shape_cast %412 : vector<8x1xi1> to vector<8x1xi1>
    %414 = vector.broadcast %413 : vector<8x1xi1> to vector<8x32xi1>
    %415 = arith.select %414, %410, %344 : vector<8x32xi1>, vector<8x32xf32>
    %416 = vector.shape_cast %412 : vector<8x1xi1> to vector<8x1xi1>
    %417 = vector.broadcast %416 : vector<8x1xi1> to vector<8x32xi1>
    %418 = arith.select %417, %408, %347 : vector<8x32xi1>, vector<8x32xf32>
    %419 = arith.index_cast %382 : i32 to index
    %c0_86 = arith.constant 0 : index
    %420 = vector.load %arg1[%419, %c0_86] : memref<64x1xf32, #tpu.memory_space<vmem>>, vector<8x1xf32>
    %421 = vector.broadcast %8 : vector<1x128xf32> to vector<8x128xf32>
    %422 = arith.mulf %392, %421 : vector<8x128xf32>
    %423 = math.tanh %422 : vector<8x128xf32>
    %424 = vector.broadcast %8 : vector<1x128xf32> to vector<8x128xf32>
    %425 = arith.mulf %423, %424 : vector<8x128xf32>
    %426 = vector.broadcast %11 : vector<1x128xf32> to vector<8x128xf32>
    %427 = arith.addf %425, %426 : vector<8x128xf32>
    %428 = vector.extract_strided_slice %427 {offsets = [0, 0], sizes = [8, 32], strides = [1, 1]} : vector<8x128xf32> to vector<8x32xf32>
    %429 = vector.extract_strided_slice %427 {offsets = [0, 32], sizes = [8, 32], strides = [1, 1]} : vector<8x128xf32> to vector<8x32xf32>
    %430 = vector.extract_strided_slice %427 {offsets = [0, 64], sizes = [8, 32], strides = [1, 1]} : vector<8x128xf32> to vector<8x32xf32>
    %431 = vector.extract_strided_slice %427 {offsets = [0, 96], sizes = [8, 32], strides = [1, 1]} : vector<8x128xf32> to vector<8x32xf32>
    %432 = arith.mulf %429, %373 : vector<8x32xf32>
    %433 = arith.mulf %428, %430 : vector<8x32xf32>
    %434 = arith.addf %432, %433 : vector<8x32xf32>
    %435 = math.tanh %434 : vector<8x32xf32>
    %436 = arith.mulf %431, %435 : vector<8x32xf32>
    %cst_87 = arith.constant 0.000000e+00 : f32
    %437 = vector.broadcast %cst_87 : f32 to vector<8x1xf32>
    %438 = arith.cmpf ogt, %420, %437 : vector<8x1xf32>
    %439 = vector.shape_cast %438 : vector<8x1xi1> to vector<8x1xi1>
    %440 = vector.broadcast %439 : vector<8x1xi1> to vector<8x32xi1>
    %441 = arith.select %440, %436, %370 : vector<8x32xi1>, vector<8x32xf32>
    %442 = vector.shape_cast %438 : vector<8x1xi1> to vector<8x1xi1>
    %443 = vector.broadcast %442 : vector<8x1xi1> to vector<8x32xi1>
    %444 = arith.select %443, %434, %373 : vector<8x32xi1>, vector<8x32xf32>
    %445 = arith.index_cast %380 : i32 to index
    %c0_88 = arith.constant 0 : index
    %446 = vector.load %arg13[%445, %c0_88] : memref<64x64xf32, #tpu.memory_space<vmem>>, vector<8x32xf32>
    tpu.vector_store %arg13[%445, %c0_88], %415 {strides = array<i32>} : memref<64x64xf32, #tpu.memory_space<vmem>>, vector<8x32xf32>,
    %447 = arith.index_cast %382 : i32 to index
    %c32_89 = arith.constant 32 : index
    %448 = vector.load %arg13[%447, %c32_89] : memref<64x64xf32, #tpu.memory_space<vmem>>, vector<8x32xf32>
    tpu.vector_store %arg13[%447, %c32_89], %441 {strides = array<i32>} : memref<64x64xf32, #tpu.memory_space<vmem>>, vector<8x32xf32>,
    %c6_i32 = arith.constant 6 : i32
    %c7_i32_90 = arith.constant 7 : i32
    %449 = arith.subi %c7_i32_90, %c6_i32 : i32
    %c8_i32_91 = arith.constant 8 : i32
    %450 = arith.muli %c6_i32, %c8_i32_91 : i32
    %451 = tpu.assume_multiple %450, 8 : i32
    %c8_i32_92 = arith.constant 8 : i32
    %452 = arith.muli %449, %c8_i32_92 : i32
    %453 = tpu.assume_multiple %452, 8 : i32
    %454 = arith.index_cast %451 : i32 to index
    %c0_93 = arith.constant 0 : index
    %455 = vector.load %arg15[%454, %c0_93] : memref<64x256xf32, #tpu.memory_space<vmem>>, vector<8x128xf32>
    %456 = arith.truncf %415 : vector<8x32xf32> to vector<8x32xbf16>
    %cst_94 = arith.constant dense<0.000000e+00> : vector<8x128xf32>
    %457 = tpu.matmul %456, %20, %cst_94 {dimension_numbers = #tpu.dot_dimension_numbers<[1], [0], [0], [1], [0, 0, 1, 1], [], []>} : vector<8x32xbf16>, vector<32x128xbf16>, vector<8x128xf32> -> vector<8x128xf32>
    %458 = arith.addf %455, %457 : vector<8x128xf32>
    %459 = arith.index_cast %453 : i32 to index
    %c128_95 = arith.constant 128 : index
    %460 = vector.load %arg15[%459, %c128_95] : memref<64x256xf32, #tpu.memory_space<vmem>>, vector<8x128xf32>
    %461 = arith.truncf %441 : vector<8x32xf32> to vector<8x32xbf16>
    %cst_96 = arith.constant dense<0.000000e+00> : vector<8x128xf32>
    %462 = tpu.matmul %461, %21, %cst_96 {dimension_numbers = #tpu.dot_dimension_numbers<[1], [0], [0], [1], [0, 0, 1, 1], [], []>} : vector<8x32xbf16>, vector<32x128xbf16>, vector<8x128xf32> -> vector<8x128xf32>
    %463 = arith.addf %460, %462 : vector<8x128xf32>
    %464 = arith.index_cast %451 : i32 to index
    %c0_97 = arith.constant 0 : index
    %465 = vector.load %arg1[%464, %c0_97] : memref<64x1xf32, #tpu.memory_space<vmem>>, vector<8x1xf32>
    %466 = vector.broadcast %8 : vector<1x128xf32> to vector<8x128xf32>
    %467 = arith.mulf %458, %466 : vector<8x128xf32>
    %468 = math.tanh %467 : vector<8x128xf32>
    %469 = vector.broadcast %8 : vector<1x128xf32> to vector<8x128xf32>
    %470 = arith.mulf %468, %469 : vector<8x128xf32>
    %471 = vector.broadcast %11 : vector<1x128xf32> to vector<8x128xf32>
    %472 = arith.addf %470, %471 : vector<8x128xf32>
    %473 = vector.extract_strided_slice %472 {offsets = [0, 0], sizes = [8, 32], strides = [1, 1]} : vector<8x128xf32> to vector<8x32xf32>
    %474 = vector.extract_strided_slice %472 {offsets = [0, 32], sizes = [8, 32], strides = [1, 1]} : vector<8x128xf32> to vector<8x32xf32>
    %475 = vector.extract_strided_slice %472 {offsets = [0, 64], sizes = [8, 32], strides = [1, 1]} : vector<8x128xf32> to vector<8x32xf32>
    %476 = vector.extract_strided_slice %472 {offsets = [0, 96], sizes = [8, 32], strides = [1, 1]} : vector<8x128xf32> to vector<8x32xf32>
    %477 = arith.mulf %474, %418 : vector<8x32xf32>
    %478 = arith.mulf %473, %475 : vector<8x32xf32>
    %479 = arith.addf %477, %478 : vector<8x32xf32>
    %480 = math.tanh %479 : vector<8x32xf32>
    %481 = arith.mulf %476, %480 : vector<8x32xf32>
    %cst_98 = arith.constant 0.000000e+00 : f32
    %482 = vector.broadcast %cst_98 : f32 to vector<8x1xf32>
    %483 = arith.cmpf ogt, %465, %482 : vector<8x1xf32>
    %484 = vector.shape_cast %483 : vector<8x1xi1> to vector<8x1xi1>
    %485 = vector.broadcast %484 : vector<8x1xi1> to vector<8x32xi1>
    %486 = arith.select %485, %481, %415 : vector<8x32xi1>, vector<8x32xf32>
    %487 = vector.shape_cast %483 : vector<8x1xi1> to vector<8x1xi1>
    %488 = vector.broadcast %487 : vector<8x1xi1> to vector<8x32xi1>
    %489 = arith.select %488, %479, %418 : vector<8x32xi1>, vector<8x32xf32>
    %490 = arith.index_cast %453 : i32 to index
    %c0_99 = arith.constant 0 : index
    %491 = vector.load %arg1[%490, %c0_99] : memref<64x1xf32, #tpu.memory_space<vmem>>, vector<8x1xf32>
    %492 = vector.broadcast %8 : vector<1x128xf32> to vector<8x128xf32>
    %493 = arith.mulf %463, %492 : vector<8x128xf32>
    %494 = math.tanh %493 : vector<8x128xf32>
    %495 = vector.broadcast %8 : vector<1x128xf32> to vector<8x128xf32>
    %496 = arith.mulf %494, %495 : vector<8x128xf32>
    %497 = vector.broadcast %11 : vector<1x128xf32> to vector<8x128xf32>
    %498 = arith.addf %496, %497 : vector<8x128xf32>
    %499 = vector.extract_strided_slice %498 {offsets = [0, 0], sizes = [8, 32], strides = [1, 1]} : vector<8x128xf32> to vector<8x32xf32>
    %500 = vector.extract_strided_slice %498 {offsets = [0, 32], sizes = [8, 32], strides = [1, 1]} : vector<8x128xf32> to vector<8x32xf32>
    %501 = vector.extract_strided_slice %498 {offsets = [0, 64], sizes = [8, 32], strides = [1, 1]} : vector<8x128xf32> to vector<8x32xf32>
    %502 = vector.extract_strided_slice %498 {offsets = [0, 96], sizes = [8, 32], strides = [1, 1]} : vector<8x128xf32> to vector<8x32xf32>
    %503 = arith.mulf %500, %444 : vector<8x32xf32>
    %504 = arith.mulf %499, %501 : vector<8x32xf32>
    %505 = arith.addf %503, %504 : vector<8x32xf32>
    %506 = math.tanh %505 : vector<8x32xf32>
    %507 = arith.mulf %502, %506 : vector<8x32xf32>
    %cst_100 = arith.constant 0.000000e+00 : f32
    %508 = vector.broadcast %cst_100 : f32 to vector<8x1xf32>
    %509 = arith.cmpf ogt, %491, %508 : vector<8x1xf32>
    %510 = vector.shape_cast %509 : vector<8x1xi1> to vector<8x1xi1>
    %511 = vector.broadcast %510 : vector<8x1xi1> to vector<8x32xi1>
    %512 = arith.select %511, %507, %441 : vector<8x32xi1>, vector<8x32xf32>
    %513 = vector.shape_cast %509 : vector<8x1xi1> to vector<8x1xi1>
    %514 = vector.broadcast %513 : vector<8x1xi1> to vector<8x32xi1>
    %515 = arith.select %514, %505, %444 : vector<8x32xi1>, vector<8x32xf32>
    %516 = arith.index_cast %451 : i32 to index
    %c0_101 = arith.constant 0 : index
    %517 = vector.load %arg13[%516, %c0_101] : memref<64x64xf32, #tpu.memory_space<vmem>>, vector<8x32xf32>
    tpu.vector_store %arg13[%516, %c0_101], %486 {strides = array<i32>} : memref<64x64xf32, #tpu.memory_space<vmem>>, vector<8x32xf32>,
    %518 = arith.index_cast %453 : i32 to index
    %c32_102 = arith.constant 32 : index
    %519 = vector.load %arg13[%518, %c32_102] : memref<64x64xf32, #tpu.memory_space<vmem>>, vector<8x32xf32>
    tpu.vector_store %arg13[%518, %c32_102], %512 {strides = array<i32>} : memref<64x64xf32, #tpu.memory_space<vmem>>, vector<8x32xf32>,
    %c7_i32_103 = arith.constant 7 : i32
    %c7_i32_104 = arith.constant 7 : i32
    %520 = arith.subi %c7_i32_104, %c7_i32_103 : i32
    %c8_i32_105 = arith.constant 8 : i32
    %521 = arith.muli %c7_i32_103, %c8_i32_105 : i32
    %522 = tpu.assume_multiple %521, 8 : i32
    %c8_i32_106 = arith.constant 8 : i32
    %523 = arith.muli %520, %c8_i32_106 : i32
    %524 = tpu.assume_multiple %523, 8 : i32
    %525 = arith.index_cast %522 : i32 to index
    %c0_107 = arith.constant 0 : index
    %526 = vector.load %arg15[%525, %c0_107] : memref<64x256xf32, #tpu.memory_space<vmem>>, vector<8x128xf32>
    %527 = arith.truncf %486 : vector<8x32xf32> to vector<8x32xbf16>
    %cst_108 = arith.constant dense<0.000000e+00> : vector<8x128xf32>
    %528 = tpu.matmul %527, %20, %cst_108 {dimension_numbers = #tpu.dot_dimension_numbers<[1], [0], [0], [1], [0, 0, 1, 1], [], []>} : vector<8x32xbf16>, vector<32x128xbf16>, vector<8x128xf32> -> vector<8x128xf32>
    %529 = arith.addf %526, %528 : vector<8x128xf32>
    %530 = arith.index_cast %524 : i32 to index
    %c128_109 = arith.constant 128 : index
    %531 = vector.load %arg15[%530, %c128_109] : memref<64x256xf32, #tpu.memory_space<vmem>>, vector<8x128xf32>
    %532 = arith.truncf %512 : vector<8x32xf32> to vector<8x32xbf16>
    %cst_110 = arith.constant dense<0.000000e+00> : vector<8x128xf32>
    %533 = tpu.matmul %532, %21, %cst_110 {dimension_numbers = #tpu.dot_dimension_numbers<[1], [0], [0], [1], [0, 0, 1, 1], [], []>} : vector<8x32xbf16>, vector<32x128xbf16>, vector<8x128xf32> -> vector<8x128xf32>
    %534 = arith.addf %531, %533 : vector<8x128xf32>
    %535 = arith.index_cast %522 : i32 to index
    %c0_111 = arith.constant 0 : index
    %536 = vector.load %arg1[%535, %c0_111] : memref<64x1xf32, #tpu.memory_space<vmem>>, vector<8x1xf32>
    %537 = vector.broadcast %8 : vector<1x128xf32> to vector<8x128xf32>
    %538 = arith.mulf %529, %537 : vector<8x128xf32>
    %539 = math.tanh %538 : vector<8x128xf32>
    %540 = vector.broadcast %8 : vector<1x128xf32> to vector<8x128xf32>
    %541 = arith.mulf %539, %540 : vector<8x128xf32>
    %542 = vector.broadcast %11 : vector<1x128xf32> to vector<8x128xf32>
    %543 = arith.addf %541, %542 : vector<8x128xf32>
    %544 = vector.extract_strided_slice %543 {offsets = [0, 0], sizes = [8, 32], strides = [1, 1]} : vector<8x128xf32> to vector<8x32xf32>
    %545 = vector.extract_strided_slice %543 {offsets = [0, 32], sizes = [8, 32], strides = [1, 1]} : vector<8x128xf32> to vector<8x32xf32>
    %546 = vector.extract_strided_slice %543 {offsets = [0, 64], sizes = [8, 32], strides = [1, 1]} : vector<8x128xf32> to vector<8x32xf32>
    %547 = vector.extract_strided_slice %543 {offsets = [0, 96], sizes = [8, 32], strides = [1, 1]} : vector<8x128xf32> to vector<8x32xf32>
    %548 = arith.mulf %545, %489 : vector<8x32xf32>
    %549 = arith.mulf %544, %546 : vector<8x32xf32>
    %550 = arith.addf %548, %549 : vector<8x32xf32>
    %551 = math.tanh %550 : vector<8x32xf32>
    %552 = arith.mulf %547, %551 : vector<8x32xf32>
    %cst_112 = arith.constant 0.000000e+00 : f32
    %553 = vector.broadcast %cst_112 : f32 to vector<8x1xf32>
    %554 = arith.cmpf ogt, %536, %553 : vector<8x1xf32>
    %555 = vector.shape_cast %554 : vector<8x1xi1> to vector<8x1xi1>
    %556 = vector.broadcast %555 : vector<8x1xi1> to vector<8x32xi1>
    %557 = arith.select %556, %552, %486 : vector<8x32xi1>, vector<8x32xf32>
    %558 = vector.shape_cast %554 : vector<8x1xi1> to vector<8x1xi1>
    %559 = vector.broadcast %558 : vector<8x1xi1> to vector<8x32xi1>
    %560 = arith.select %559, %550, %489 : vector<8x32xi1>, vector<8x32xf32>
    %561 = arith.index_cast %524 : i32 to index
    %c0_113 = arith.constant 0 : index
    %562 = vector.load %arg1[%561, %c0_113] : memref<64x1xf32, #tpu.memory_space<vmem>>, vector<8x1xf32>
    %563 = vector.broadcast %8 : vector<1x128xf32> to vector<8x128xf32>
    %564 = arith.mulf %534, %563 : vector<8x128xf32>
    %565 = math.tanh %564 : vector<8x128xf32>
    %566 = vector.broadcast %8 : vector<1x128xf32> to vector<8x128xf32>
    %567 = arith.mulf %565, %566 : vector<8x128xf32>
    %568 = vector.broadcast %11 : vector<1x128xf32> to vector<8x128xf32>
    %569 = arith.addf %567, %568 : vector<8x128xf32>
    %570 = vector.extract_strided_slice %569 {offsets = [0, 0], sizes = [8, 32], strides = [1, 1]} : vector<8x128xf32> to vector<8x32xf32>
    %571 = vector.extract_strided_slice %569 {offsets = [0, 32], sizes = [8, 32], strides = [1, 1]} : vector<8x128xf32> to vector<8x32xf32>
    %572 = vector.extract_strided_slice %569 {offsets = [0, 64], sizes = [8, 32], strides = [1, 1]} : vector<8x128xf32> to vector<8x32xf32>
    %573 = vector.extract_strided_slice %569 {offsets = [0, 96], sizes = [8, 32], strides = [1, 1]} : vector<8x128xf32> to vector<8x32xf32>
    %574 = arith.mulf %571, %515 : vector<8x32xf32>
    %575 = arith.mulf %570, %572 : vector<8x32xf32>
    %576 = arith.addf %574, %575 : vector<8x32xf32>
    %577 = math.tanh %576 : vector<8x32xf32>
    %578 = arith.mulf %573, %577 : vector<8x32xf32>
    %cst_114 = arith.constant 0.000000e+00 : f32
    %579 = vector.broadcast %cst_114 : f32 to vector<8x1xf32>
    %580 = arith.cmpf ogt, %562, %579 : vector<8x1xf32>
    %581 = vector.shape_cast %580 : vector<8x1xi1> to vector<8x1xi1>
    %582 = vector.broadcast %581 : vector<8x1xi1> to vector<8x32xi1>
    %583 = arith.select %582, %578, %512 : vector<8x32xi1>, vector<8x32xf32>
    %584 = vector.shape_cast %580 : vector<8x1xi1> to vector<8x1xi1>
    %585 = vector.broadcast %584 : vector<8x1xi1> to vector<8x32xi1>
    %586 = arith.select %585, %576, %515 : vector<8x32xi1>, vector<8x32xf32>
    %587 = arith.index_cast %522 : i32 to index
    %c0_115 = arith.constant 0 : index
    %588 = vector.load %arg13[%587, %c0_115] : memref<64x64xf32, #tpu.memory_space<vmem>>, vector<8x32xf32>
    tpu.vector_store %arg13[%587, %c0_115], %557 {strides = array<i32>} : memref<64x64xf32, #tpu.memory_space<vmem>>, vector<8x32xf32>,
    %589 = arith.index_cast %524 : i32 to index
    %c32_116 = arith.constant 32 : index
    %590 = vector.load %arg13[%589, %c32_116] : memref<64x64xf32, #tpu.memory_space<vmem>>, vector<8x32xf32>
    tpu.vector_store %arg13[%589, %c32_116], %583 {strides = array<i32>} : memref<64x64xf32, #tpu.memory_space<vmem>>, vector<8x32xf32>,
    %c8_i32_117 = arith.constant 8 : i32
    %c0_118 = arith.constant 0 : index
    %c0_119 = arith.constant 0 : index
    %591 = vector.load %arg13[%c0_118, %c0_119] : memref<64x64xf32, #tpu.memory_space<vmem>>, vector<64x64xf32>
    %592 = arith.truncf %591 : vector<64x64xf32> to vector<64x64xbf16>
    %c0_120 = arith.constant 0 : index
    %c0_121 = arith.constant 0 : index
    %593 = vector.load %arg6[%c0_120, %c0_121] : memref<64x256xbf16, #tpu.memory_space<vmem>>, vector<64x256xbf16>
    %cst_122 = arith.constant dense<0.000000e+00> : vector<64x256xf32>
    %594 = tpu.matmul %592, %593, %cst_122 {dimension_numbers = #tpu.dot_dimension_numbers<[1], [0], [0], [1], [0, 0, 1, 1], [], []>} : vector<64x64xbf16>, vector<64x256xbf16>, vector<64x256xf32> -> vector<64x256xf32>
    %c0_123 = arith.constant 0 : index
    %c0_124 = arith.constant 0 : index
    %595 = vector.load %arg7[%c0_123, %c0_124] : memref<1x256xf32, #tpu.memory_space<vmem>>, vector<1x256xf32>
    %596 = vector.broadcast %595 : vector<1x256xf32> to vector<64x256xf32>
    %597 = arith.addf %594, %596 : vector<64x256xf32>
    %c0_125 = arith.constant 0 : index
    %c0_126 = arith.constant 0 : index
    %598 = vector.load %arg15[%c0_125, %c0_126] : memref<64x256xf32, #tpu.memory_space<vmem>>, vector<64x256xf32>
    tpu.vector_store %arg15[%c0_125, %c0_126], %597 {strides = array<i32>} : memref<64x256xf32, #tpu.memory_space<vmem>>, vector<64x256xf32>,
    %c0_127 = arith.constant 0 : index
    %c0_128 = arith.constant 0 : index
    %599 = vector.load %arg8[%c0_127, %c0_128] : memref<32x128xbf16, #tpu.memory_space<vmem>>, vector<32x128xbf16>
    %c0_129 = arith.constant 0 : index
    %c0_130 = arith.constant 0 : index
    %600 = vector.load %arg9[%c0_129, %c0_130] : memref<32x128xbf16, #tpu.memory_space<vmem>>, vector<32x128xbf16>
    %cst_131 = arith.constant 0.000000e+00 : f32
    %601 = vector.broadcast %cst_131 : f32 to vector<8x32xf32>
    %c0_i32_132 = arith.constant 0 : i32
    %c7_i32_133 = arith.constant 7 : i32
    %602 = arith.subi %c7_i32_133, %c0_i32_132 : i32
    %c8_i32_134 = arith.constant 8 : i32
    %603 = arith.muli %c0_i32_132, %c8_i32_134 : i32
    %604 = tpu.assume_multiple %603, 8 : i32
    %c8_i32_135 = arith.constant 8 : i32
    %605 = arith.muli %602, %c8_i32_135 : i32
    %606 = tpu.assume_multiple %605, 8 : i32
    %607 = arith.index_cast %604 : i32 to index
    %c0_136 = arith.constant 0 : index
    %608 = vector.load %arg15[%607, %c0_136] : memref<64x256xf32, #tpu.memory_space<vmem>>, vector<8x128xf32>
    %609 = arith.truncf %601 : vector<8x32xf32> to vector<8x32xbf16>
    %cst_137 = arith.constant dense<0.000000e+00> : vector<8x128xf32>
    %610 = tpu.matmul %609, %599, %cst_137 {dimension_numbers = #tpu.dot_dimension_numbers<[1], [0], [0], [1], [0, 0, 1, 1], [], []>} : vector<8x32xbf16>, vector<32x128xbf16>, vector<8x128xf32> -> vector<8x128xf32>
    %611 = arith.addf %608, %610 : vector<8x128xf32>
    %612 = arith.index_cast %606 : i32 to index
    %c128_138 = arith.constant 128 : index
    %613 = vector.load %arg15[%612, %c128_138] : memref<64x256xf32, #tpu.memory_space<vmem>>, vector<8x128xf32>
    %614 = arith.truncf %601 : vector<8x32xf32> to vector<8x32xbf16>
    %cst_139 = arith.constant dense<0.000000e+00> : vector<8x128xf32>
    %615 = tpu.matmul %614, %600, %cst_139 {dimension_numbers = #tpu.dot_dimension_numbers<[1], [0], [0], [1], [0, 0, 1, 1], [], []>} : vector<8x32xbf16>, vector<32x128xbf16>, vector<8x128xf32> -> vector<8x128xf32>
    %616 = arith.addf %613, %615 : vector<8x128xf32>
    %617 = arith.index_cast %604 : i32 to index
    %c0_140 = arith.constant 0 : index
    %618 = vector.load %arg1[%617, %c0_140] : memref<64x1xf32, #tpu.memory_space<vmem>>, vector<8x1xf32>
    %619 = vector.broadcast %8 : vector<1x128xf32> to vector<8x128xf32>
    %620 = arith.mulf %611, %619 : vector<8x128xf32>
    %621 = math.tanh %620 : vector<8x128xf32>
    %622 = vector.broadcast %8 : vector<1x128xf32> to vector<8x128xf32>
    %623 = arith.mulf %621, %622 : vector<8x128xf32>
    %624 = vector.broadcast %11 : vector<1x128xf32> to vector<8x128xf32>
    %625 = arith.addf %623, %624 : vector<8x128xf32>
    %626 = vector.extract_strided_slice %625 {offsets = [0, 0], sizes = [8, 32], strides = [1, 1]} : vector<8x128xf32> to vector<8x32xf32>
    %627 = vector.extract_strided_slice %625 {offsets = [0, 32], sizes = [8, 32], strides = [1, 1]} : vector<8x128xf32> to vector<8x32xf32>
    %628 = vector.extract_strided_slice %625 {offsets = [0, 64], sizes = [8, 32], strides = [1, 1]} : vector<8x128xf32> to vector<8x32xf32>
    %629 = vector.extract_strided_slice %625 {offsets = [0, 96], sizes = [8, 32], strides = [1, 1]} : vector<8x128xf32> to vector<8x32xf32>
    %630 = arith.mulf %627, %601 : vector<8x32xf32>
    %631 = arith.mulf %626, %628 : vector<8x32xf32>
    %632 = arith.addf %630, %631 : vector<8x32xf32>
    %633 = math.tanh %632 : vector<8x32xf32>
    %634 = arith.mulf %629, %633 : vector<8x32xf32>
    %cst_141 = arith.constant 0.000000e+00 : f32
    %635 = vector.broadcast %cst_141 : f32 to vector<8x1xf32>
    %636 = arith.cmpf ogt, %618, %635 : vector<8x1xf32>
    %637 = vector.shape_cast %636 : vector<8x1xi1> to vector<8x1xi1>
    %638 = vector.broadcast %637 : vector<8x1xi1> to vector<8x32xi1>
    %639 = arith.select %638, %634, %601 : vector<8x32xi1>, vector<8x32xf32>
    %640 = vector.shape_cast %636 : vector<8x1xi1> to vector<8x1xi1>
    %641 = vector.broadcast %640 : vector<8x1xi1> to vector<8x32xi1>
    %642 = arith.select %641, %632, %601 : vector<8x32xi1>, vector<8x32xf32>
    %643 = arith.index_cast %606 : i32 to index
    %c0_142 = arith.constant 0 : index
    %644 = vector.load %arg1[%643, %c0_142] : memref<64x1xf32, #tpu.memory_space<vmem>>, vector<8x1xf32>
    %645 = vector.broadcast %8 : vector<1x128xf32> to vector<8x128xf32>
    %646 = arith.mulf %616, %645 : vector<8x128xf32>
    %647 = math.tanh %646 : vector<8x128xf32>
    %648 = vector.broadcast %8 : vector<1x128xf32> to vector<8x128xf32>
    %649 = arith.mulf %647, %648 : vector<8x128xf32>
    %650 = vector.broadcast %11 : vector<1x128xf32> to vector<8x128xf32>
    %651 = arith.addf %649, %650 : vector<8x128xf32>
    %652 = vector.extract_strided_slice %651 {offsets = [0, 0], sizes = [8, 32], strides = [1, 1]} : vector<8x128xf32> to vector<8x32xf32>
    %653 = vector.extract_strided_slice %651 {offsets = [0, 32], sizes = [8, 32], strides = [1, 1]} : vector<8x128xf32> to vector<8x32xf32>
    %654 = vector.extract_strided_slice %651 {offsets = [0, 64], sizes = [8, 32], strides = [1, 1]} : vector<8x128xf32> to vector<8x32xf32>
    %655 = vector.extract_strided_slice %651 {offsets = [0, 96], sizes = [8, 32], strides = [1, 1]} : vector<8x128xf32> to vector<8x32xf32>
    %656 = arith.mulf %653, %601 : vector<8x32xf32>
    %657 = arith.mulf %652, %654 : vector<8x32xf32>
    %658 = arith.addf %656, %657 : vector<8x32xf32>
    %659 = math.tanh %658 : vector<8x32xf32>
    %660 = arith.mulf %655, %659 : vector<8x32xf32>
    %cst_143 = arith.constant 0.000000e+00 : f32
    %661 = vector.broadcast %cst_143 : f32 to vector<8x1xf32>
    %662 = arith.cmpf ogt, %644, %661 : vector<8x1xf32>
    %663 = vector.shape_cast %662 : vector<8x1xi1> to vector<8x1xi1>
    %664 = vector.broadcast %663 : vector<8x1xi1> to vector<8x32xi1>
    %665 = arith.select %664, %660, %601 : vector<8x32xi1>, vector<8x32xf32>
    %666 = vector.shape_cast %662 : vector<8x1xi1> to vector<8x1xi1>
    %667 = vector.broadcast %666 : vector<8x1xi1> to vector<8x32xi1>
    %668 = arith.select %667, %658, %601 : vector<8x32xi1>, vector<8x32xf32>
    %669 = arith.index_cast %604 : i32 to index
    %c0_144 = arith.constant 0 : index
    %670 = vector.load %arg14[%669, %c0_144] : memref<64x64xf32, #tpu.memory_space<vmem>>, vector<8x32xf32>
    tpu.vector_store %arg14[%669, %c0_144], %639 {strides = array<i32>} : memref<64x64xf32, #tpu.memory_space<vmem>>, vector<8x32xf32>,
    %671 = arith.index_cast %606 : i32 to index
    %c32_145 = arith.constant 32 : index
    %672 = vector.load %arg14[%671, %c32_145] : memref<64x64xf32, #tpu.memory_space<vmem>>, vector<8x32xf32>
    tpu.vector_store %arg14[%671, %c32_145], %665 {strides = array<i32>} : memref<64x64xf32, #tpu.memory_space<vmem>>, vector<8x32xf32>,
    %c1_i32_146 = arith.constant 1 : i32
    %c7_i32_147 = arith.constant 7 : i32
    %673 = arith.subi %c7_i32_147, %c1_i32_146 : i32
    %c8_i32_148 = arith.constant 8 : i32
    %674 = arith.muli %c1_i32_146, %c8_i32_148 : i32
    %675 = tpu.assume_multiple %674, 8 : i32
    %c8_i32_149 = arith.constant 8 : i32
    %676 = arith.muli %673, %c8_i32_149 : i32
    %677 = tpu.assume_multiple %676, 8 : i32
    %678 = arith.index_cast %675 : i32 to index
    %c0_150 = arith.constant 0 : index
    %679 = vector.load %arg15[%678, %c0_150] : memref<64x256xf32, #tpu.memory_space<vmem>>, vector<8x128xf32>
    %680 = arith.truncf %639 : vector<8x32xf32> to vector<8x32xbf16>
    %cst_151 = arith.constant dense<0.000000e+00> : vector<8x128xf32>
    %681 = tpu.matmul %680, %599, %cst_151 {dimension_numbers = #tpu.dot_dimension_numbers<[1], [0], [0], [1], [0, 0, 1, 1], [], []>} : vector<8x32xbf16>, vector<32x128xbf16>, vector<8x128xf32> -> vector<8x128xf32>
    %682 = arith.addf %679, %681 : vector<8x128xf32>
    %683 = arith.index_cast %677 : i32 to index
    %c128_152 = arith.constant 128 : index
    %684 = vector.load %arg15[%683, %c128_152] : memref<64x256xf32, #tpu.memory_space<vmem>>, vector<8x128xf32>
    %685 = arith.truncf %665 : vector<8x32xf32> to vector<8x32xbf16>
    %cst_153 = arith.constant dense<0.000000e+00> : vector<8x128xf32>
    %686 = tpu.matmul %685, %600, %cst_153 {dimension_numbers = #tpu.dot_dimension_numbers<[1], [0], [0], [1], [0, 0, 1, 1], [], []>} : vector<8x32xbf16>, vector<32x128xbf16>, vector<8x128xf32> -> vector<8x128xf32>
    %687 = arith.addf %684, %686 : vector<8x128xf32>
    %688 = arith.index_cast %675 : i32 to index
    %c0_154 = arith.constant 0 : index
    %689 = vector.load %arg1[%688, %c0_154] : memref<64x1xf32, #tpu.memory_space<vmem>>, vector<8x1xf32>
    %690 = vector.broadcast %8 : vector<1x128xf32> to vector<8x128xf32>
    %691 = arith.mulf %682, %690 : vector<8x128xf32>
    %692 = math.tanh %691 : vector<8x128xf32>
    %693 = vector.broadcast %8 : vector<1x128xf32> to vector<8x128xf32>
    %694 = arith.mulf %692, %693 : vector<8x128xf32>
    %695 = vector.broadcast %11 : vector<1x128xf32> to vector<8x128xf32>
    %696 = arith.addf %694, %695 : vector<8x128xf32>
    %697 = vector.extract_strided_slice %696 {offsets = [0, 0], sizes = [8, 32], strides = [1, 1]} : vector<8x128xf32> to vector<8x32xf32>
    %698 = vector.extract_strided_slice %696 {offsets = [0, 32], sizes = [8, 32], strides = [1, 1]} : vector<8x128xf32> to vector<8x32xf32>
    %699 = vector.extract_strided_slice %696 {offsets = [0, 64], sizes = [8, 32], strides = [1, 1]} : vector<8x128xf32> to vector<8x32xf32>
    %700 = vector.extract_strided_slice %696 {offsets = [0, 96], sizes = [8, 32], strides = [1, 1]} : vector<8x128xf32> to vector<8x32xf32>
    %701 = arith.mulf %698, %642 : vector<8x32xf32>
    %702 = arith.mulf %697, %699 : vector<8x32xf32>
    %703 = arith.addf %701, %702 : vector<8x32xf32>
    %704 = math.tanh %703 : vector<8x32xf32>
    %705 = arith.mulf %700, %704 : vector<8x32xf32>
    %cst_155 = arith.constant 0.000000e+00 : f32
    %706 = vector.broadcast %cst_155 : f32 to vector<8x1xf32>
    %707 = arith.cmpf ogt, %689, %706 : vector<8x1xf32>
    %708 = vector.shape_cast %707 : vector<8x1xi1> to vector<8x1xi1>
    %709 = vector.broadcast %708 : vector<8x1xi1> to vector<8x32xi1>
    %710 = arith.select %709, %705, %639 : vector<8x32xi1>, vector<8x32xf32>
    %711 = vector.shape_cast %707 : vector<8x1xi1> to vector<8x1xi1>
    %712 = vector.broadcast %711 : vector<8x1xi1> to vector<8x32xi1>
    %713 = arith.select %712, %703, %642 : vector<8x32xi1>, vector<8x32xf32>
    %714 = arith.index_cast %677 : i32 to index
    %c0_156 = arith.constant 0 : index
    %715 = vector.load %arg1[%714, %c0_156] : memref<64x1xf32, #tpu.memory_space<vmem>>, vector<8x1xf32>
    %716 = vector.broadcast %8 : vector<1x128xf32> to vector<8x128xf32>
    %717 = arith.mulf %687, %716 : vector<8x128xf32>
    %718 = math.tanh %717 : vector<8x128xf32>
    %719 = vector.broadcast %8 : vector<1x128xf32> to vector<8x128xf32>
    %720 = arith.mulf %718, %719 : vector<8x128xf32>
    %721 = vector.broadcast %11 : vector<1x128xf32> to vector<8x128xf32>
    %722 = arith.addf %720, %721 : vector<8x128xf32>
    %723 = vector.extract_strided_slice %722 {offsets = [0, 0], sizes = [8, 32], strides = [1, 1]} : vector<8x128xf32> to vector<8x32xf32>
    %724 = vector.extract_strided_slice %722 {offsets = [0, 32], sizes = [8, 32], strides = [1, 1]} : vector<8x128xf32> to vector<8x32xf32>
    %725 = vector.extract_strided_slice %722 {offsets = [0, 64], sizes = [8, 32], strides = [1, 1]} : vector<8x128xf32> to vector<8x32xf32>
    %726 = vector.extract_strided_slice %722 {offsets = [0, 96], sizes = [8, 32], strides = [1, 1]} : vector<8x128xf32> to vector<8x32xf32>
    %727 = arith.mulf %724, %668 : vector<8x32xf32>
    %728 = arith.mulf %723, %725 : vector<8x32xf32>
    %729 = arith.addf %727, %728 : vector<8x32xf32>
    %730 = math.tanh %729 : vector<8x32xf32>
    %731 = arith.mulf %726, %730 : vector<8x32xf32>
    %cst_157 = arith.constant 0.000000e+00 : f32
    %732 = vector.broadcast %cst_157 : f32 to vector<8x1xf32>
    %733 = arith.cmpf ogt, %715, %732 : vector<8x1xf32>
    %734 = vector.shape_cast %733 : vector<8x1xi1> to vector<8x1xi1>
    %735 = vector.broadcast %734 : vector<8x1xi1> to vector<8x32xi1>
    %736 = arith.select %735, %731, %665 : vector<8x32xi1>, vector<8x32xf32>
    %737 = vector.shape_cast %733 : vector<8x1xi1> to vector<8x1xi1>
    %738 = vector.broadcast %737 : vector<8x1xi1> to vector<8x32xi1>
    %739 = arith.select %738, %729, %668 : vector<8x32xi1>, vector<8x32xf32>
    %740 = arith.index_cast %675 : i32 to index
    %c0_158 = arith.constant 0 : index
    %741 = vector.load %arg14[%740, %c0_158] : memref<64x64xf32, #tpu.memory_space<vmem>>, vector<8x32xf32>
    tpu.vector_store %arg14[%740, %c0_158], %710 {strides = array<i32>} : memref<64x64xf32, #tpu.memory_space<vmem>>, vector<8x32xf32>,
    %742 = arith.index_cast %677 : i32 to index
    %c32_159 = arith.constant 32 : index
    %743 = vector.load %arg14[%742, %c32_159] : memref<64x64xf32, #tpu.memory_space<vmem>>, vector<8x32xf32>
    tpu.vector_store %arg14[%742, %c32_159], %736 {strides = array<i32>} : memref<64x64xf32, #tpu.memory_space<vmem>>, vector<8x32xf32>,
    %c2_i32_160 = arith.constant 2 : i32
    %c7_i32_161 = arith.constant 7 : i32
    %744 = arith.subi %c7_i32_161, %c2_i32_160 : i32
    %c8_i32_162 = arith.constant 8 : i32
    %745 = arith.muli %c2_i32_160, %c8_i32_162 : i32
    %746 = tpu.assume_multiple %745, 8 : i32
    %c8_i32_163 = arith.constant 8 : i32
    %747 = arith.muli %744, %c8_i32_163 : i32
    %748 = tpu.assume_multiple %747, 8 : i32
    %749 = arith.index_cast %746 : i32 to index
    %c0_164 = arith.constant 0 : index
    %750 = vector.load %arg15[%749, %c0_164] : memref<64x256xf32, #tpu.memory_space<vmem>>, vector<8x128xf32>
    %751 = arith.truncf %710 : vector<8x32xf32> to vector<8x32xbf16>
    %cst_165 = arith.constant dense<0.000000e+00> : vector<8x128xf32>
    %752 = tpu.matmul %751, %599, %cst_165 {dimension_numbers = #tpu.dot_dimension_numbers<[1], [0], [0], [1], [0, 0, 1, 1], [], []>} : vector<8x32xbf16>, vector<32x128xbf16>, vector<8x128xf32> -> vector<8x128xf32>
    %753 = arith.addf %750, %752 : vector<8x128xf32>
    %754 = arith.index_cast %748 : i32 to index
    %c128_166 = arith.constant 128 : index
    %755 = vector.load %arg15[%754, %c128_166] : memref<64x256xf32, #tpu.memory_space<vmem>>, vector<8x128xf32>
    %756 = arith.truncf %736 : vector<8x32xf32> to vector<8x32xbf16>
    %cst_167 = arith.constant dense<0.000000e+00> : vector<8x128xf32>
    %757 = tpu.matmul %756, %600, %cst_167 {dimension_numbers = #tpu.dot_dimension_numbers<[1], [0], [0], [1], [0, 0, 1, 1], [], []>} : vector<8x32xbf16>, vector<32x128xbf16>, vector<8x128xf32> -> vector<8x128xf32>
    %758 = arith.addf %755, %757 : vector<8x128xf32>
    %759 = arith.index_cast %746 : i32 to index
    %c0_168 = arith.constant 0 : index
    %760 = vector.load %arg1[%759, %c0_168] : memref<64x1xf32, #tpu.memory_space<vmem>>, vector<8x1xf32>
    %761 = vector.broadcast %8 : vector<1x128xf32> to vector<8x128xf32>
    %762 = arith.mulf %753, %761 : vector<8x128xf32>
    %763 = math.tanh %762 : vector<8x128xf32>
    %764 = vector.broadcast %8 : vector<1x128xf32> to vector<8x128xf32>
    %765 = arith.mulf %763, %764 : vector<8x128xf32>
    %766 = vector.broadcast %11 : vector<1x128xf32> to vector<8x128xf32>
    %767 = arith.addf %765, %766 : vector<8x128xf32>
    %768 = vector.extract_strided_slice %767 {offsets = [0, 0], sizes = [8, 32], strides = [1, 1]} : vector<8x128xf32> to vector<8x32xf32>
    %769 = vector.extract_strided_slice %767 {offsets = [0, 32], sizes = [8, 32], strides = [1, 1]} : vector<8x128xf32> to vector<8x32xf32>
    %770 = vector.extract_strided_slice %767 {offsets = [0, 64], sizes = [8, 32], strides = [1, 1]} : vector<8x128xf32> to vector<8x32xf32>
    %771 = vector.extract_strided_slice %767 {offsets = [0, 96], sizes = [8, 32], strides = [1, 1]} : vector<8x128xf32> to vector<8x32xf32>
    %772 = arith.mulf %769, %713 : vector<8x32xf32>
    %773 = arith.mulf %768, %770 : vector<8x32xf32>
    %774 = arith.addf %772, %773 : vector<8x32xf32>
    %775 = math.tanh %774 : vector<8x32xf32>
    %776 = arith.mulf %771, %775 : vector<8x32xf32>
    %cst_169 = arith.constant 0.000000e+00 : f32
    %777 = vector.broadcast %cst_169 : f32 to vector<8x1xf32>
    %778 = arith.cmpf ogt, %760, %777 : vector<8x1xf32>
    %779 = vector.shape_cast %778 : vector<8x1xi1> to vector<8x1xi1>
    %780 = vector.broadcast %779 : vector<8x1xi1> to vector<8x32xi1>
    %781 = arith.select %780, %776, %710 : vector<8x32xi1>, vector<8x32xf32>
    %782 = vector.shape_cast %778 : vector<8x1xi1> to vector<8x1xi1>
    %783 = vector.broadcast %782 : vector<8x1xi1> to vector<8x32xi1>
    %784 = arith.select %783, %774, %713 : vector<8x32xi1>, vector<8x32xf32>
    %785 = arith.index_cast %748 : i32 to index
    %c0_170 = arith.constant 0 : index
    %786 = vector.load %arg1[%785, %c0_170] : memref<64x1xf32, #tpu.memory_space<vmem>>, vector<8x1xf32>
    %787 = vector.broadcast %8 : vector<1x128xf32> to vector<8x128xf32>
    %788 = arith.mulf %758, %787 : vector<8x128xf32>
    %789 = math.tanh %788 : vector<8x128xf32>
    %790 = vector.broadcast %8 : vector<1x128xf32> to vector<8x128xf32>
    %791 = arith.mulf %789, %790 : vector<8x128xf32>
    %792 = vector.broadcast %11 : vector<1x128xf32> to vector<8x128xf32>
    %793 = arith.addf %791, %792 : vector<8x128xf32>
    %794 = vector.extract_strided_slice %793 {offsets = [0, 0], sizes = [8, 32], strides = [1, 1]} : vector<8x128xf32> to vector<8x32xf32>
    %795 = vector.extract_strided_slice %793 {offsets = [0, 32], sizes = [8, 32], strides = [1, 1]} : vector<8x128xf32> to vector<8x32xf32>
    %796 = vector.extract_strided_slice %793 {offsets = [0, 64], sizes = [8, 32], strides = [1, 1]} : vector<8x128xf32> to vector<8x32xf32>
    %797 = vector.extract_strided_slice %793 {offsets = [0, 96], sizes = [8, 32], strides = [1, 1]} : vector<8x128xf32> to vector<8x32xf32>
    %798 = arith.mulf %795, %739 : vector<8x32xf32>
    %799 = arith.mulf %794, %796 : vector<8x32xf32>
    %800 = arith.addf %798, %799 : vector<8x32xf32>
    %801 = math.tanh %800 : vector<8x32xf32>
    %802 = arith.mulf %797, %801 : vector<8x32xf32>
    %cst_171 = arith.constant 0.000000e+00 : f32
    %803 = vector.broadcast %cst_171 : f32 to vector<8x1xf32>
    %804 = arith.cmpf ogt, %786, %803 : vector<8x1xf32>
    %805 = vector.shape_cast %804 : vector<8x1xi1> to vector<8x1xi1>
    %806 = vector.broadcast %805 : vector<8x1xi1> to vector<8x32xi1>
    %807 = arith.select %806, %802, %736 : vector<8x32xi1>, vector<8x32xf32>
    %808 = vector.shape_cast %804 : vector<8x1xi1> to vector<8x1xi1>
    %809 = vector.broadcast %808 : vector<8x1xi1> to vector<8x32xi1>
    %810 = arith.select %809, %800, %739 : vector<8x32xi1>, vector<8x32xf32>
    %811 = arith.index_cast %746 : i32 to index
    %c0_172 = arith.constant 0 : index
    %812 = vector.load %arg14[%811, %c0_172] : memref<64x64xf32, #tpu.memory_space<vmem>>, vector<8x32xf32>
    tpu.vector_store %arg14[%811, %c0_172], %781 {strides = array<i32>} : memref<64x64xf32, #tpu.memory_space<vmem>>, vector<8x32xf32>,
    %813 = arith.index_cast %748 : i32 to index
    %c32_173 = arith.constant 32 : index
    %814 = vector.load %arg14[%813, %c32_173] : memref<64x64xf32, #tpu.memory_space<vmem>>, vector<8x32xf32>
    tpu.vector_store %arg14[%813, %c32_173], %807 {strides = array<i32>} : memref<64x64xf32, #tpu.memory_space<vmem>>, vector<8x32xf32>,
    %c3_i32_174 = arith.constant 3 : i32
    %c7_i32_175 = arith.constant 7 : i32
    %815 = arith.subi %c7_i32_175, %c3_i32_174 : i32
    %c8_i32_176 = arith.constant 8 : i32
    %816 = arith.muli %c3_i32_174, %c8_i32_176 : i32
    %817 = tpu.assume_multiple %816, 8 : i32
    %c8_i32_177 = arith.constant 8 : i32
    %818 = arith.muli %815, %c8_i32_177 : i32
    %819 = tpu.assume_multiple %818, 8 : i32
    %820 = arith.index_cast %817 : i32 to index
    %c0_178 = arith.constant 0 : index
    %821 = vector.load %arg15[%820, %c0_178] : memref<64x256xf32, #tpu.memory_space<vmem>>, vector<8x128xf32>
    %822 = arith.truncf %781 : vector<8x32xf32> to vector<8x32xbf16>
    %cst_179 = arith.constant dense<0.000000e+00> : vector<8x128xf32>
    %823 = tpu.matmul %822, %599, %cst_179 {dimension_numbers = #tpu.dot_dimension_numbers<[1], [0], [0], [1], [0, 0, 1, 1], [], []>} : vector<8x32xbf16>, vector<32x128xbf16>, vector<8x128xf32> -> vector<8x128xf32>
    %824 = arith.addf %821, %823 : vector<8x128xf32>
    %825 = arith.index_cast %819 : i32 to index
    %c128_180 = arith.constant 128 : index
    %826 = vector.load %arg15[%825, %c128_180] : memref<64x256xf32, #tpu.memory_space<vmem>>, vector<8x128xf32>
    %827 = arith.truncf %807 : vector<8x32xf32> to vector<8x32xbf16>
    %cst_181 = arith.constant dense<0.000000e+00> : vector<8x128xf32>
    %828 = tpu.matmul %827, %600, %cst_181 {dimension_numbers = #tpu.dot_dimension_numbers<[1], [0], [0], [1], [0, 0, 1, 1], [], []>} : vector<8x32xbf16>, vector<32x128xbf16>, vector<8x128xf32> -> vector<8x128xf32>
    %829 = arith.addf %826, %828 : vector<8x128xf32>
    %830 = arith.index_cast %817 : i32 to index
    %c0_182 = arith.constant 0 : index
    %831 = vector.load %arg1[%830, %c0_182] : memref<64x1xf32, #tpu.memory_space<vmem>>, vector<8x1xf32>
    %832 = vector.broadcast %8 : vector<1x128xf32> to vector<8x128xf32>
    %833 = arith.mulf %824, %832 : vector<8x128xf32>
    %834 = math.tanh %833 : vector<8x128xf32>
    %835 = vector.broadcast %8 : vector<1x128xf32> to vector<8x128xf32>
    %836 = arith.mulf %834, %835 : vector<8x128xf32>
    %837 = vector.broadcast %11 : vector<1x128xf32> to vector<8x128xf32>
    %838 = arith.addf %836, %837 : vector<8x128xf32>
    %839 = vector.extract_strided_slice %838 {offsets = [0, 0], sizes = [8, 32], strides = [1, 1]} : vector<8x128xf32> to vector<8x32xf32>
    %840 = vector.extract_strided_slice %838 {offsets = [0, 32], sizes = [8, 32], strides = [1, 1]} : vector<8x128xf32> to vector<8x32xf32>
    %841 = vector.extract_strided_slice %838 {offsets = [0, 64], sizes = [8, 32], strides = [1, 1]} : vector<8x128xf32> to vector<8x32xf32>
    %842 = vector.extract_strided_slice %838 {offsets = [0, 96], sizes = [8, 32], strides = [1, 1]} : vector<8x128xf32> to vector<8x32xf32>
    %843 = arith.mulf %840, %784 : vector<8x32xf32>
    %844 = arith.mulf %839, %841 : vector<8x32xf32>
    %845 = arith.addf %843, %844 : vector<8x32xf32>
    %846 = math.tanh %845 : vector<8x32xf32>
    %847 = arith.mulf %842, %846 : vector<8x32xf32>
    %cst_183 = arith.constant 0.000000e+00 : f32
    %848 = vector.broadcast %cst_183 : f32 to vector<8x1xf32>
    %849 = arith.cmpf ogt, %831, %848 : vector<8x1xf32>
    %850 = vector.shape_cast %849 : vector<8x1xi1> to vector<8x1xi1>
    %851 = vector.broadcast %850 : vector<8x1xi1> to vector<8x32xi1>
    %852 = arith.select %851, %847, %781 : vector<8x32xi1>, vector<8x32xf32>
    %853 = vector.shape_cast %849 : vector<8x1xi1> to vector<8x1xi1>
    %854 = vector.broadcast %853 : vector<8x1xi1> to vector<8x32xi1>
    %855 = arith.select %854, %845, %784 : vector<8x32xi1>, vector<8x32xf32>
    %856 = arith.index_cast %819 : i32 to index
    %c0_184 = arith.constant 0 : index
    %857 = vector.load %arg1[%856, %c0_184] : memref<64x1xf32, #tpu.memory_space<vmem>>, vector<8x1xf32>
    %858 = vector.broadcast %8 : vector<1x128xf32> to vector<8x128xf32>
    %859 = arith.mulf %829, %858 : vector<8x128xf32>
    %860 = math.tanh %859 : vector<8x128xf32>
    %861 = vector.broadcast %8 : vector<1x128xf32> to vector<8x128xf32>
    %862 = arith.mulf %860, %861 : vector<8x128xf32>
    %863 = vector.broadcast %11 : vector<1x128xf32> to vector<8x128xf32>
    %864 = arith.addf %862, %863 : vector<8x128xf32>
    %865 = vector.extract_strided_slice %864 {offsets = [0, 0], sizes = [8, 32], strides = [1, 1]} : vector<8x128xf32> to vector<8x32xf32>
    %866 = vector.extract_strided_slice %864 {offsets = [0, 32], sizes = [8, 32], strides = [1, 1]} : vector<8x128xf32> to vector<8x32xf32>
    %867 = vector.extract_strided_slice %864 {offsets = [0, 64], sizes = [8, 32], strides = [1, 1]} : vector<8x128xf32> to vector<8x32xf32>
    %868 = vector.extract_strided_slice %864 {offsets = [0, 96], sizes = [8, 32], strides = [1, 1]} : vector<8x128xf32> to vector<8x32xf32>
    %869 = arith.mulf %866, %810 : vector<8x32xf32>
    %870 = arith.mulf %865, %867 : vector<8x32xf32>
    %871 = arith.addf %869, %870 : vector<8x32xf32>
    %872 = math.tanh %871 : vector<8x32xf32>
    %873 = arith.mulf %868, %872 : vector<8x32xf32>
    %cst_185 = arith.constant 0.000000e+00 : f32
    %874 = vector.broadcast %cst_185 : f32 to vector<8x1xf32>
    %875 = arith.cmpf ogt, %857, %874 : vector<8x1xf32>
    %876 = vector.shape_cast %875 : vector<8x1xi1> to vector<8x1xi1>
    %877 = vector.broadcast %876 : vector<8x1xi1> to vector<8x32xi1>
    %878 = arith.select %877, %873, %807 : vector<8x32xi1>, vector<8x32xf32>
    %879 = vector.shape_cast %875 : vector<8x1xi1> to vector<8x1xi1>
    %880 = vector.broadcast %879 : vector<8x1xi1> to vector<8x32xi1>
    %881 = arith.select %880, %871, %810 : vector<8x32xi1>, vector<8x32xf32>
    %882 = arith.index_cast %817 : i32 to index
    %c0_186 = arith.constant 0 : index
    %883 = vector.load %arg14[%882, %c0_186] : memref<64x64xf32, #tpu.memory_space<vmem>>, vector<8x32xf32>
    tpu.vector_store %arg14[%882, %c0_186], %852 {strides = array<i32>} : memref<64x64xf32, #tpu.memory_space<vmem>>, vector<8x32xf32>,
    %884 = arith.index_cast %819 : i32 to index
    %c32_187 = arith.constant 32 : index
    %885 = vector.load %arg14[%884, %c32_187] : memref<64x64xf32, #tpu.memory_space<vmem>>, vector<8x32xf32>
    tpu.vector_store %arg14[%884, %c32_187], %878 {strides = array<i32>} : memref<64x64xf32, #tpu.memory_space<vmem>>, vector<8x32xf32>,
    %c4_i32_188 = arith.constant 4 : i32
    %c7_i32_189 = arith.constant 7 : i32
    %886 = arith.subi %c7_i32_189, %c4_i32_188 : i32
    %c8_i32_190 = arith.constant 8 : i32
    %887 = arith.muli %c4_i32_188, %c8_i32_190 : i32
    %888 = tpu.assume_multiple %887, 8 : i32
    %c8_i32_191 = arith.constant 8 : i32
    %889 = arith.muli %886, %c8_i32_191 : i32
    %890 = tpu.assume_multiple %889, 8 : i32
    %891 = arith.index_cast %888 : i32 to index
    %c0_192 = arith.constant 0 : index
    %892 = vector.load %arg15[%891, %c0_192] : memref<64x256xf32, #tpu.memory_space<vmem>>, vector<8x128xf32>
    %893 = arith.truncf %852 : vector<8x32xf32> to vector<8x32xbf16>
    %cst_193 = arith.constant dense<0.000000e+00> : vector<8x128xf32>
    %894 = tpu.matmul %893, %599, %cst_193 {dimension_numbers = #tpu.dot_dimension_numbers<[1], [0], [0], [1], [0, 0, 1, 1], [], []>} : vector<8x32xbf16>, vector<32x128xbf16>, vector<8x128xf32> -> vector<8x128xf32>
    %895 = arith.addf %892, %894 : vector<8x128xf32>
    %896 = arith.index_cast %890 : i32 to index
    %c128_194 = arith.constant 128 : index
    %897 = vector.load %arg15[%896, %c128_194] : memref<64x256xf32, #tpu.memory_space<vmem>>, vector<8x128xf32>
    %898 = arith.truncf %878 : vector<8x32xf32> to vector<8x32xbf16>
    %cst_195 = arith.constant dense<0.000000e+00> : vector<8x128xf32>
    %899 = tpu.matmul %898, %600, %cst_195 {dimension_numbers = #tpu.dot_dimension_numbers<[1], [0], [0], [1], [0, 0, 1, 1], [], []>} : vector<8x32xbf16>, vector<32x128xbf16>, vector<8x128xf32> -> vector<8x128xf32>
    %900 = arith.addf %897, %899 : vector<8x128xf32>
    %901 = arith.index_cast %888 : i32 to index
    %c0_196 = arith.constant 0 : index
    %902 = vector.load %arg1[%901, %c0_196] : memref<64x1xf32, #tpu.memory_space<vmem>>, vector<8x1xf32>
    %903 = vector.broadcast %8 : vector<1x128xf32> to vector<8x128xf32>
    %904 = arith.mulf %895, %903 : vector<8x128xf32>
    %905 = math.tanh %904 : vector<8x128xf32>
    %906 = vector.broadcast %8 : vector<1x128xf32> to vector<8x128xf32>
    %907 = arith.mulf %905, %906 : vector<8x128xf32>
    %908 = vector.broadcast %11 : vector<1x128xf32> to vector<8x128xf32>
    %909 = arith.addf %907, %908 : vector<8x128xf32>
    %910 = vector.extract_strided_slice %909 {offsets = [0, 0], sizes = [8, 32], strides = [1, 1]} : vector<8x128xf32> to vector<8x32xf32>
    %911 = vector.extract_strided_slice %909 {offsets = [0, 32], sizes = [8, 32], strides = [1, 1]} : vector<8x128xf32> to vector<8x32xf32>
    %912 = vector.extract_strided_slice %909 {offsets = [0, 64], sizes = [8, 32], strides = [1, 1]} : vector<8x128xf32> to vector<8x32xf32>
    %913 = vector.extract_strided_slice %909 {offsets = [0, 96], sizes = [8, 32], strides = [1, 1]} : vector<8x128xf32> to vector<8x32xf32>
    %914 = arith.mulf %911, %855 : vector<8x32xf32>
    %915 = arith.mulf %910, %912 : vector<8x32xf32>
    %916 = arith.addf %914, %915 : vector<8x32xf32>
    %917 = math.tanh %916 : vector<8x32xf32>
    %918 = arith.mulf %913, %917 : vector<8x32xf32>
    %cst_197 = arith.constant 0.000000e+00 : f32
    %919 = vector.broadcast %cst_197 : f32 to vector<8x1xf32>
    %920 = arith.cmpf ogt, %902, %919 : vector<8x1xf32>
    %921 = vector.shape_cast %920 : vector<8x1xi1> to vector<8x1xi1>
    %922 = vector.broadcast %921 : vector<8x1xi1> to vector<8x32xi1>
    %923 = arith.select %922, %918, %852 : vector<8x32xi1>, vector<8x32xf32>
    %924 = vector.shape_cast %920 : vector<8x1xi1> to vector<8x1xi1>
    %925 = vector.broadcast %924 : vector<8x1xi1> to vector<8x32xi1>
    %926 = arith.select %925, %916, %855 : vector<8x32xi1>, vector<8x32xf32>
    %927 = arith.index_cast %890 : i32 to index
    %c0_198 = arith.constant 0 : index
    %928 = vector.load %arg1[%927, %c0_198] : memref<64x1xf32, #tpu.memory_space<vmem>>, vector<8x1xf32>
    %929 = vector.broadcast %8 : vector<1x128xf32> to vector<8x128xf32>
    %930 = arith.mulf %900, %929 : vector<8x128xf32>
    %931 = math.tanh %930 : vector<8x128xf32>
    %932 = vector.broadcast %8 : vector<1x128xf32> to vector<8x128xf32>
    %933 = arith.mulf %931, %932 : vector<8x128xf32>
    %934 = vector.broadcast %11 : vector<1x128xf32> to vector<8x128xf32>
    %935 = arith.addf %933, %934 : vector<8x128xf32>
    %936 = vector.extract_strided_slice %935 {offsets = [0, 0], sizes = [8, 32], strides = [1, 1]} : vector<8x128xf32> to vector<8x32xf32>
    %937 = vector.extract_strided_slice %935 {offsets = [0, 32], sizes = [8, 32], strides = [1, 1]} : vector<8x128xf32> to vector<8x32xf32>
    %938 = vector.extract_strided_slice %935 {offsets = [0, 64], sizes = [8, 32], strides = [1, 1]} : vector<8x128xf32> to vector<8x32xf32>
    %939 = vector.extract_strided_slice %935 {offsets = [0, 96], sizes = [8, 32], strides = [1, 1]} : vector<8x128xf32> to vector<8x32xf32>
    %940 = arith.mulf %937, %881 : vector<8x32xf32>
    %941 = arith.mulf %936, %938 : vector<8x32xf32>
    %942 = arith.addf %940, %941 : vector<8x32xf32>
    %943 = math.tanh %942 : vector<8x32xf32>
    %944 = arith.mulf %939, %943 : vector<8x32xf32>
    %cst_199 = arith.constant 0.000000e+00 : f32
    %945 = vector.broadcast %cst_199 : f32 to vector<8x1xf32>
    %946 = arith.cmpf ogt, %928, %945 : vector<8x1xf32>
    %947 = vector.shape_cast %946 : vector<8x1xi1> to vector<8x1xi1>
    %948 = vector.broadcast %947 : vector<8x1xi1> to vector<8x32xi1>
    %949 = arith.select %948, %944, %878 : vector<8x32xi1>, vector<8x32xf32>
    %950 = vector.shape_cast %946 : vector<8x1xi1> to vector<8x1xi1>
    %951 = vector.broadcast %950 : vector<8x1xi1> to vector<8x32xi1>
    %952 = arith.select %951, %942, %881 : vector<8x32xi1>, vector<8x32xf32>
    %953 = arith.index_cast %888 : i32 to index
    %c0_200 = arith.constant 0 : index
    %954 = vector.load %arg14[%953, %c0_200] : memref<64x64xf32, #tpu.memory_space<vmem>>, vector<8x32xf32>
    tpu.vector_store %arg14[%953, %c0_200], %923 {strides = array<i32>} : memref<64x64xf32, #tpu.memory_space<vmem>>, vector<8x32xf32>,
    %955 = arith.index_cast %890 : i32 to index
    %c32_201 = arith.constant 32 : index
    %956 = vector.load %arg14[%955, %c32_201] : memref<64x64xf32, #tpu.memory_space<vmem>>, vector<8x32xf32>
    tpu.vector_store %arg14[%955, %c32_201], %949 {strides = array<i32>} : memref<64x64xf32, #tpu.memory_space<vmem>>, vector<8x32xf32>,
    %c5_i32_202 = arith.constant 5 : i32
    %c7_i32_203 = arith.constant 7 : i32
    %957 = arith.subi %c7_i32_203, %c5_i32_202 : i32
    %c8_i32_204 = arith.constant 8 : i32
    %958 = arith.muli %c5_i32_202, %c8_i32_204 : i32
    %959 = tpu.assume_multiple %958, 8 : i32
    %c8_i32_205 = arith.constant 8 : i32
    %960 = arith.muli %957, %c8_i32_205 : i32
    %961 = tpu.assume_multiple %960, 8 : i32
    %962 = arith.index_cast %959 : i32 to index
    %c0_206 = arith.constant 0 : index
    %963 = vector.load %arg15[%962, %c0_206] : memref<64x256xf32, #tpu.memory_space<vmem>>, vector<8x128xf32>
    %964 = arith.truncf %923 : vector<8x32xf32> to vector<8x32xbf16>
    %cst_207 = arith.constant dense<0.000000e+00> : vector<8x128xf32>
    %965 = tpu.matmul %964, %599, %cst_207 {dimension_numbers = #tpu.dot_dimension_numbers<[1], [0], [0], [1], [0, 0, 1, 1], [], []>} : vector<8x32xbf16>, vector<32x128xbf16>, vector<8x128xf32> -> vector<8x128xf32>
    %966 = arith.addf %963, %965 : vector<8x128xf32>
    %967 = arith.index_cast %961 : i32 to index
    %c128_208 = arith.constant 128 : index
    %968 = vector.load %arg15[%967, %c128_208] : memref<64x256xf32, #tpu.memory_space<vmem>>, vector<8x128xf32>
    %969 = arith.truncf %949 : vector<8x32xf32> to vector<8x32xbf16>
    %cst_209 = arith.constant dense<0.000000e+00> : vector<8x128xf32>
    %970 = tpu.matmul %969, %600, %cst_209 {dimension_numbers = #tpu.dot_dimension_numbers<[1], [0], [0], [1], [0, 0, 1, 1], [], []>} : vector<8x32xbf16>, vector<32x128xbf16>, vector<8x128xf32> -> vector<8x128xf32>
    %971 = arith.addf %968, %970 : vector<8x128xf32>
    %972 = arith.index_cast %959 : i32 to index
    %c0_210 = arith.constant 0 : index
    %973 = vector.load %arg1[%972, %c0_210] : memref<64x1xf32, #tpu.memory_space<vmem>>, vector<8x1xf32>
    %974 = vector.broadcast %8 : vector<1x128xf32> to vector<8x128xf32>
    %975 = arith.mulf %966, %974 : vector<8x128xf32>
    %976 = math.tanh %975 : vector<8x128xf32>
    %977 = vector.broadcast %8 : vector<1x128xf32> to vector<8x128xf32>
    %978 = arith.mulf %976, %977 : vector<8x128xf32>
    %979 = vector.broadcast %11 : vector<1x128xf32> to vector<8x128xf32>
    %980 = arith.addf %978, %979 : vector<8x128xf32>
    %981 = vector.extract_strided_slice %980 {offsets = [0, 0], sizes = [8, 32], strides = [1, 1]} : vector<8x128xf32> to vector<8x32xf32>
    %982 = vector.extract_strided_slice %980 {offsets = [0, 32], sizes = [8, 32], strides = [1, 1]} : vector<8x128xf32> to vector<8x32xf32>
    %983 = vector.extract_strided_slice %980 {offsets = [0, 64], sizes = [8, 32], strides = [1, 1]} : vector<8x128xf32> to vector<8x32xf32>
    %984 = vector.extract_strided_slice %980 {offsets = [0, 96], sizes = [8, 32], strides = [1, 1]} : vector<8x128xf32> to vector<8x32xf32>
    %985 = arith.mulf %982, %926 : vector<8x32xf32>
    %986 = arith.mulf %981, %983 : vector<8x32xf32>
    %987 = arith.addf %985, %986 : vector<8x32xf32>
    %988 = math.tanh %987 : vector<8x32xf32>
    %989 = arith.mulf %984, %988 : vector<8x32xf32>
    %cst_211 = arith.constant 0.000000e+00 : f32
    %990 = vector.broadcast %cst_211 : f32 to vector<8x1xf32>
    %991 = arith.cmpf ogt, %973, %990 : vector<8x1xf32>
    %992 = vector.shape_cast %991 : vector<8x1xi1> to vector<8x1xi1>
    %993 = vector.broadcast %992 : vector<8x1xi1> to vector<8x32xi1>
    %994 = arith.select %993, %989, %923 : vector<8x32xi1>, vector<8x32xf32>
    %995 = vector.shape_cast %991 : vector<8x1xi1> to vector<8x1xi1>
    %996 = vector.broadcast %995 : vector<8x1xi1> to vector<8x32xi1>
    %997 = arith.select %996, %987, %926 : vector<8x32xi1>, vector<8x32xf32>
    %998 = arith.index_cast %961 : i32 to index
    %c0_212 = arith.constant 0 : index
    %999 = vector.load %arg1[%998, %c0_212] : memref<64x1xf32, #tpu.memory_space<vmem>>, vector<8x1xf32>
    %1000 = vector.broadcast %8 : vector<1x128xf32> to vector<8x128xf32>
    %1001 = arith.mulf %971, %1000 : vector<8x128xf32>
    %1002 = math.tanh %1001 : vector<8x128xf32>
    %1003 = vector.broadcast %8 : vector<1x128xf32> to vector<8x128xf32>
    %1004 = arith.mulf %1002, %1003 : vector<8x128xf32>
    %1005 = vector.broadcast %11 : vector<1x128xf32> to vector<8x128xf32>
    %1006 = arith.addf %1004, %1005 : vector<8x128xf32>
    %1007 = vector.extract_strided_slice %1006 {offsets = [0, 0], sizes = [8, 32], strides = [1, 1]} : vector<8x128xf32> to vector<8x32xf32>
    %1008 = vector.extract_strided_slice %1006 {offsets = [0, 32], sizes = [8, 32], strides = [1, 1]} : vector<8x128xf32> to vector<8x32xf32>
    %1009 = vector.extract_strided_slice %1006 {offsets = [0, 64], sizes = [8, 32], strides = [1, 1]} : vector<8x128xf32> to vector<8x32xf32>
    %1010 = vector.extract_strided_slice %1006 {offsets = [0, 96], sizes = [8, 32], strides = [1, 1]} : vector<8x128xf32> to vector<8x32xf32>
    %1011 = arith.mulf %1008, %952 : vector<8x32xf32>
    %1012 = arith.mulf %1007, %1009 : vector<8x32xf32>
    %1013 = arith.addf %1011, %1012 : vector<8x32xf32>
    %1014 = math.tanh %1013 : vector<8x32xf32>
    %1015 = arith.mulf %1010, %1014 : vector<8x32xf32>
    %cst_213 = arith.constant 0.000000e+00 : f32
    %1016 = vector.broadcast %cst_213 : f32 to vector<8x1xf32>
    %1017 = arith.cmpf ogt, %999, %1016 : vector<8x1xf32>
    %1018 = vector.shape_cast %1017 : vector<8x1xi1> to vector<8x1xi1>
    %1019 = vector.broadcast %1018 : vector<8x1xi1> to vector<8x32xi1>
    %1020 = arith.select %1019, %1015, %949 : vector<8x32xi1>, vector<8x32xf32>
    %1021 = vector.shape_cast %1017 : vector<8x1xi1> to vector<8x1xi1>
    %1022 = vector.broadcast %1021 : vector<8x1xi1> to vector<8x32xi1>
    %1023 = arith.select %1022, %1013, %952 : vector<8x32xi1>, vector<8x32xf32>
    %1024 = arith.index_cast %959 : i32 to index
    %c0_214 = arith.constant 0 : index
    %1025 = vector.load %arg14[%1024, %c0_214] : memref<64x64xf32, #tpu.memory_space<vmem>>, vector<8x32xf32>
    tpu.vector_store %arg14[%1024, %c0_214], %994 {strides = array<i32>} : memref<64x64xf32, #tpu.memory_space<vmem>>, vector<8x32xf32>,
    %1026 = arith.index_cast %961 : i32 to index
    %c32_215 = arith.constant 32 : index
    %1027 = vector.load %arg14[%1026, %c32_215] : memref<64x64xf32, #tpu.memory_space<vmem>>, vector<8x32xf32>
    tpu.vector_store %arg14[%1026, %c32_215], %1020 {strides = array<i32>} : memref<64x64xf32, #tpu.memory_space<vmem>>, vector<8x32xf32>,
    %c6_i32_216 = arith.constant 6 : i32
    %c7_i32_217 = arith.constant 7 : i32
    %1028 = arith.subi %c7_i32_217, %c6_i32_216 : i32
    %c8_i32_218 = arith.constant 8 : i32
    %1029 = arith.muli %c6_i32_216, %c8_i32_218 : i32
    %1030 = tpu.assume_multiple %1029, 8 : i32
    %c8_i32_219 = arith.constant 8 : i32
    %1031 = arith.muli %1028, %c8_i32_219 : i32
    %1032 = tpu.assume_multiple %1031, 8 : i32
    %1033 = arith.index_cast %1030 : i32 to index
    %c0_220 = arith.constant 0 : index
    %1034 = vector.load %arg15[%1033, %c0_220] : memref<64x256xf32, #tpu.memory_space<vmem>>, vector<8x128xf32>
    %1035 = arith.truncf %994 : vector<8x32xf32> to vector<8x32xbf16>
    %cst_221 = arith.constant dense<0.000000e+00> : vector<8x128xf32>
    %1036 = tpu.matmul %1035, %599, %cst_221 {dimension_numbers = #tpu.dot_dimension_numbers<[1], [0], [0], [1], [0, 0, 1, 1], [], []>} : vector<8x32xbf16>, vector<32x128xbf16>, vector<8x128xf32> -> vector<8x128xf32>
    %1037 = arith.addf %1034, %1036 : vector<8x128xf32>
    %1038 = arith.index_cast %1032 : i32 to index
    %c128_222 = arith.constant 128 : index
    %1039 = vector.load %arg15[%1038, %c128_222] : memref<64x256xf32, #tpu.memory_space<vmem>>, vector<8x128xf32>
    %1040 = arith.truncf %1020 : vector<8x32xf32> to vector<8x32xbf16>
    %cst_223 = arith.constant dense<0.000000e+00> : vector<8x128xf32>
    %1041 = tpu.matmul %1040, %600, %cst_223 {dimension_numbers = #tpu.dot_dimension_numbers<[1], [0], [0], [1], [0, 0, 1, 1], [], []>} : vector<8x32xbf16>, vector<32x128xbf16>, vector<8x128xf32> -> vector<8x128xf32>
    %1042 = arith.addf %1039, %1041 : vector<8x128xf32>
    %1043 = arith.index_cast %1030 : i32 to index
    %c0_224 = arith.constant 0 : index
    %1044 = vector.load %arg1[%1043, %c0_224] : memref<64x1xf32, #tpu.memory_space<vmem>>, vector<8x1xf32>
    %1045 = vector.broadcast %8 : vector<1x128xf32> to vector<8x128xf32>
    %1046 = arith.mulf %1037, %1045 : vector<8x128xf32>
    %1047 = math.tanh %1046 : vector<8x128xf32>
    %1048 = vector.broadcast %8 : vector<1x128xf32> to vector<8x128xf32>
    %1049 = arith.mulf %1047, %1048 : vector<8x128xf32>
    %1050 = vector.broadcast %11 : vector<1x128xf32> to vector<8x128xf32>
    %1051 = arith.addf %1049, %1050 : vector<8x128xf32>
    %1052 = vector.extract_strided_slice %1051 {offsets = [0, 0], sizes = [8, 32], strides = [1, 1]} : vector<8x128xf32> to vector<8x32xf32>
    %1053 = vector.extract_strided_slice %1051 {offsets = [0, 32], sizes = [8, 32], strides = [1, 1]} : vector<8x128xf32> to vector<8x32xf32>
    %1054 = vector.extract_strided_slice %1051 {offsets = [0, 64], sizes = [8, 32], strides = [1, 1]} : vector<8x128xf32> to vector<8x32xf32>
    %1055 = vector.extract_strided_slice %1051 {offsets = [0, 96], sizes = [8, 32], strides = [1, 1]} : vector<8x128xf32> to vector<8x32xf32>
    %1056 = arith.mulf %1053, %997 : vector<8x32xf32>
    %1057 = arith.mulf %1052, %1054 : vector<8x32xf32>
    %1058 = arith.addf %1056, %1057 : vector<8x32xf32>
    %1059 = math.tanh %1058 : vector<8x32xf32>
    %1060 = arith.mulf %1055, %1059 : vector<8x32xf32>
    %cst_225 = arith.constant 0.000000e+00 : f32
    %1061 = vector.broadcast %cst_225 : f32 to vector<8x1xf32>
    %1062 = arith.cmpf ogt, %1044, %1061 : vector<8x1xf32>
    %1063 = vector.shape_cast %1062 : vector<8x1xi1> to vector<8x1xi1>
    %1064 = vector.broadcast %1063 : vector<8x1xi1> to vector<8x32xi1>
    %1065 = arith.select %1064, %1060, %994 : vector<8x32xi1>, vector<8x32xf32>
    %1066 = vector.shape_cast %1062 : vector<8x1xi1> to vector<8x1xi1>
    %1067 = vector.broadcast %1066 : vector<8x1xi1> to vector<8x32xi1>
    %1068 = arith.select %1067, %1058, %997 : vector<8x32xi1>, vector<8x32xf32>
    %1069 = arith.index_cast %1032 : i32 to index
    %c0_226 = arith.constant 0 : index
    %1070 = vector.load %arg1[%1069, %c0_226] : memref<64x1xf32, #tpu.memory_space<vmem>>, vector<8x1xf32>
    %1071 = vector.broadcast %8 : vector<1x128xf32> to vector<8x128xf32>
    %1072 = arith.mulf %1042, %1071 : vector<8x128xf32>
    %1073 = math.tanh %1072 : vector<8x128xf32>
    %1074 = vector.broadcast %8 : vector<1x128xf32> to vector<8x128xf32>
    %1075 = arith.mulf %1073, %1074 : vector<8x128xf32>
    %1076 = vector.broadcast %11 : vector<1x128xf32> to vector<8x128xf32>
    %1077 = arith.addf %1075, %1076 : vector<8x128xf32>
    %1078 = vector.extract_strided_slice %1077 {offsets = [0, 0], sizes = [8, 32], strides = [1, 1]} : vector<8x128xf32> to vector<8x32xf32>
    %1079 = vector.extract_strided_slice %1077 {offsets = [0, 32], sizes = [8, 32], strides = [1, 1]} : vector<8x128xf32> to vector<8x32xf32>
    %1080 = vector.extract_strided_slice %1077 {offsets = [0, 64], sizes = [8, 32], strides = [1, 1]} : vector<8x128xf32> to vector<8x32xf32>
    %1081 = vector.extract_strided_slice %1077 {offsets = [0, 96], sizes = [8, 32], strides = [1, 1]} : vector<8x128xf32> to vector<8x32xf32>
    %1082 = arith.mulf %1079, %1023 : vector<8x32xf32>
    %1083 = arith.mulf %1078, %1080 : vector<8x32xf32>
    %1084 = arith.addf %1082, %1083 : vector<8x32xf32>
    %1085 = math.tanh %1084 : vector<8x32xf32>
    %1086 = arith.mulf %1081, %1085 : vector<8x32xf32>
    %cst_227 = arith.constant 0.000000e+00 : f32
    %1087 = vector.broadcast %cst_227 : f32 to vector<8x1xf32>
    %1088 = arith.cmpf ogt, %1070, %1087 : vector<8x1xf32>
    %1089 = vector.shape_cast %1088 : vector<8x1xi1> to vector<8x1xi1>
    %1090 = vector.broadcast %1089 : vector<8x1xi1> to vector<8x32xi1>
    %1091 = arith.select %1090, %1086, %1020 : vector<8x32xi1>, vector<8x32xf32>
    %1092 = vector.shape_cast %1088 : vector<8x1xi1> to vector<8x1xi1>
    %1093 = vector.broadcast %1092 : vector<8x1xi1> to vector<8x32xi1>
    %1094 = arith.select %1093, %1084, %1023 : vector<8x32xi1>, vector<8x32xf32>
    %1095 = arith.index_cast %1030 : i32 to index
    %c0_228 = arith.constant 0 : index
    %1096 = vector.load %arg14[%1095, %c0_228] : memref<64x64xf32, #tpu.memory_space<vmem>>, vector<8x32xf32>
    tpu.vector_store %arg14[%1095, %c0_228], %1065 {strides = array<i32>} : memref<64x64xf32, #tpu.memory_space<vmem>>, vector<8x32xf32>,
    %1097 = arith.index_cast %1032 : i32 to index
    %c32_229 = arith.constant 32 : index
    %1098 = vector.load %arg14[%1097, %c32_229] : memref<64x64xf32, #tpu.memory_space<vmem>>, vector<8x32xf32>
    tpu.vector_store %arg14[%1097, %c32_229], %1091 {strides = array<i32>} : memref<64x64xf32, #tpu.memory_space<vmem>>, vector<8x32xf32>,
    %c7_i32_230 = arith.constant 7 : i32
    %c7_i32_231 = arith.constant 7 : i32
    %1099 = arith.subi %c7_i32_231, %c7_i32_230 : i32
    %c8_i32_232 = arith.constant 8 : i32
    %1100 = arith.muli %c7_i32_230, %c8_i32_232 : i32
    %1101 = tpu.assume_multiple %1100, 8 : i32
    %c8_i32_233 = arith.constant 8 : i32
    %1102 = arith.muli %1099, %c8_i32_233 : i32
    %1103 = tpu.assume_multiple %1102, 8 : i32
    %1104 = arith.index_cast %1101 : i32 to index
    %c0_234 = arith.constant 0 : index
    %1105 = vector.load %arg15[%1104, %c0_234] : memref<64x256xf32, #tpu.memory_space<vmem>>, vector<8x128xf32>
    %1106 = arith.truncf %1065 : vector<8x32xf32> to vector<8x32xbf16>
    %cst_235 = arith.constant dense<0.000000e+00> : vector<8x128xf32>
    %1107 = tpu.matmul %1106, %599, %cst_235 {dimension_numbers = #tpu.dot_dimension_numbers<[1], [0], [0], [1], [0, 0, 1, 1], [], []>} : vector<8x32xbf16>, vector<32x128xbf16>, vector<8x128xf32> -> vector<8x128xf32>
    %1108 = arith.addf %1105, %1107 : vector<8x128xf32>
    %1109 = arith.index_cast %1103 : i32 to index
    %c128_236 = arith.constant 128 : index
    %1110 = vector.load %arg15[%1109, %c128_236] : memref<64x256xf32, #tpu.memory_space<vmem>>, vector<8x128xf32>
    %1111 = arith.truncf %1091 : vector<8x32xf32> to vector<8x32xbf16>
    %cst_237 = arith.constant dense<0.000000e+00> : vector<8x128xf32>
    %1112 = tpu.matmul %1111, %600, %cst_237 {dimension_numbers = #tpu.dot_dimension_numbers<[1], [0], [0], [1], [0, 0, 1, 1], [], []>} : vector<8x32xbf16>, vector<32x128xbf16>, vector<8x128xf32> -> vector<8x128xf32>
    %1113 = arith.addf %1110, %1112 : vector<8x128xf32>
    %1114 = arith.index_cast %1101 : i32 to index
    %c0_238 = arith.constant 0 : index
    %1115 = vector.load %arg1[%1114, %c0_238] : memref<64x1xf32, #tpu.memory_space<vmem>>, vector<8x1xf32>
    %1116 = vector.broadcast %8 : vector<1x128xf32> to vector<8x128xf32>
    %1117 = arith.mulf %1108, %1116 : vector<8x128xf32>
    %1118 = math.tanh %1117 : vector<8x128xf32>
    %1119 = vector.broadcast %8 : vector<1x128xf32> to vector<8x128xf32>
    %1120 = arith.mulf %1118, %1119 : vector<8x128xf32>
    %1121 = vector.broadcast %11 : vector<1x128xf32> to vector<8x128xf32>
    %1122 = arith.addf %1120, %1121 : vector<8x128xf32>
    %1123 = vector.extract_strided_slice %1122 {offsets = [0, 0], sizes = [8, 32], strides = [1, 1]} : vector<8x128xf32> to vector<8x32xf32>
    %1124 = vector.extract_strided_slice %1122 {offsets = [0, 32], sizes = [8, 32], strides = [1, 1]} : vector<8x128xf32> to vector<8x32xf32>
    %1125 = vector.extract_strided_slice %1122 {offsets = [0, 64], sizes = [8, 32], strides = [1, 1]} : vector<8x128xf32> to vector<8x32xf32>
    %1126 = vector.extract_strided_slice %1122 {offsets = [0, 96], sizes = [8, 32], strides = [1, 1]} : vector<8x128xf32> to vector<8x32xf32>
    %1127 = arith.mulf %1124, %1068 : vector<8x32xf32>
    %1128 = arith.mulf %1123, %1125 : vector<8x32xf32>
    %1129 = arith.addf %1127, %1128 : vector<8x32xf32>
    %1130 = math.tanh %1129 : vector<8x32xf32>
    %1131 = arith.mulf %1126, %1130 : vector<8x32xf32>
    %cst_239 = arith.constant 0.000000e+00 : f32
    %1132 = vector.broadcast %cst_239 : f32 to vector<8x1xf32>
    %1133 = arith.cmpf ogt, %1115, %1132 : vector<8x1xf32>
    %1134 = vector.shape_cast %1133 : vector<8x1xi1> to vector<8x1xi1>
    %1135 = vector.broadcast %1134 : vector<8x1xi1> to vector<8x32xi1>
    %1136 = arith.select %1135, %1131, %1065 : vector<8x32xi1>, vector<8x32xf32>
    %1137 = vector.shape_cast %1133 : vector<8x1xi1> to vector<8x1xi1>
    %1138 = vector.broadcast %1137 : vector<8x1xi1> to vector<8x32xi1>
    %1139 = arith.select %1138, %1129, %1068 : vector<8x32xi1>, vector<8x32xf32>
    %1140 = arith.index_cast %1103 : i32 to index
    %c0_240 = arith.constant 0 : index
    %1141 = vector.load %arg1[%1140, %c0_240] : memref<64x1xf32, #tpu.memory_space<vmem>>, vector<8x1xf32>
    %1142 = vector.broadcast %8 : vector<1x128xf32> to vector<8x128xf32>
    %1143 = arith.mulf %1113, %1142 : vector<8x128xf32>
    %1144 = math.tanh %1143 : vector<8x128xf32>
    %1145 = vector.broadcast %8 : vector<1x128xf32> to vector<8x128xf32>
    %1146 = arith.mulf %1144, %1145 : vector<8x128xf32>
    %1147 = vector.broadcast %11 : vector<1x128xf32> to vector<8x128xf32>
    %1148 = arith.addf %1146, %1147 : vector<8x128xf32>
    %1149 = vector.extract_strided_slice %1148 {offsets = [0, 0], sizes = [8, 32], strides = [1, 1]} : vector<8x128xf32> to vector<8x32xf32>
    %1150 = vector.extract_strided_slice %1148 {offsets = [0, 32], sizes = [8, 32], strides = [1, 1]} : vector<8x128xf32> to vector<8x32xf32>
    %1151 = vector.extract_strided_slice %1148 {offsets = [0, 64], sizes = [8, 32], strides = [1, 1]} : vector<8x128xf32> to vector<8x32xf32>
    %1152 = vector.extract_strided_slice %1148 {offsets = [0, 96], sizes = [8, 32], strides = [1, 1]} : vector<8x128xf32> to vector<8x32xf32>
    %1153 = arith.mulf %1150, %1094 : vector<8x32xf32>
    %1154 = arith.mulf %1149, %1151 : vector<8x32xf32>
    %1155 = arith.addf %1153, %1154 : vector<8x32xf32>
    %1156 = math.tanh %1155 : vector<8x32xf32>
    %1157 = arith.mulf %1152, %1156 : vector<8x32xf32>
    %cst_241 = arith.constant 0.000000e+00 : f32
    %1158 = vector.broadcast %cst_241 : f32 to vector<8x1xf32>
    %1159 = arith.cmpf ogt, %1141, %1158 : vector<8x1xf32>
    %1160 = vector.shape_cast %1159 : vector<8x1xi1> to vector<8x1xi1>
    %1161 = vector.broadcast %1160 : vector<8x1xi1> to vector<8x32xi1>
    %1162 = arith.select %1161, %1157, %1091 : vector<8x32xi1>, vector<8x32xf32>
    %1163 = vector.shape_cast %1159 : vector<8x1xi1> to vector<8x1xi1>
    %1164 = vector.broadcast %1163 : vector<8x1xi1> to vector<8x32xi1>
    %1165 = arith.select %1164, %1155, %1094 : vector<8x32xi1>, vector<8x32xf32>
    %1166 = arith.index_cast %1101 : i32 to index
    %c0_242 = arith.constant 0 : index
    %1167 = vector.load %arg14[%1166, %c0_242] : memref<64x64xf32, #tpu.memory_space<vmem>>, vector<8x32xf32>
    tpu.vector_store %arg14[%1166, %c0_242], %1136 {strides = array<i32>} : memref<64x64xf32, #tpu.memory_space<vmem>>, vector<8x32xf32>,
    %1168 = arith.index_cast %1103 : i32 to index
    %c32_243 = arith.constant 32 : index
    %1169 = vector.load %arg14[%1168, %c32_243] : memref<64x64xf32, #tpu.memory_space<vmem>>, vector<8x32xf32>
    tpu.vector_store %arg14[%1168, %c32_243], %1162 {strides = array<i32>} : memref<64x64xf32, #tpu.memory_space<vmem>>, vector<8x32xf32>,
    %c8_i32_244 = arith.constant 8 : i32
    %c0_245 = arith.constant 0 : index
    %c0_246 = arith.constant 0 : index
    %1170 = vector.load %arg14[%c0_245, %c0_246] : memref<64x64xf32, #tpu.memory_space<vmem>>, vector<64x64xf32>
    %1171 = arith.truncf %1170 : vector<64x64xf32> to vector<64x64xbf16>
    %c0_247 = arith.constant 0 : index
    %c0_248 = arith.constant 0 : index
    %1172 = vector.load %arg10[%c0_247, %c0_248] : memref<64x128xbf16, #tpu.memory_space<vmem>>, vector<64x128xbf16>
    %cst_249 = arith.constant dense<0.000000e+00> : vector<64x128xf32>
    %1173 = tpu.matmul %1171, %1172, %cst_249 {dimension_numbers = #tpu.dot_dimension_numbers<[1], [0], [0], [1], [0, 0, 1, 1], [], []>} : vector<64x64xbf16>, vector<64x128xbf16>, vector<64x128xf32> -> vector<64x128xf32>
    %c0_250 = arith.constant 0 : index
    %c0_251 = arith.constant 0 : index
    %1174 = vector.load %arg11[%c0_250, %c0_251] : memref<1x128xf32, #tpu.memory_space<vmem>>, vector<1x128xf32>
    %1175 = vector.broadcast %1174 : vector<1x128xf32> to vector<64x128xf32>
    %1176 = arith.addf %1173, %1175 : vector<64x128xf32>
    %c0_252 = arith.constant 0 : index
    %c0_253 = arith.constant 0 : index
    %1177 = vector.load %arg1[%c0_252, %c0_253] : memref<64x1xf32, #tpu.memory_space<vmem>>, vector<64x1xf32>
    %1178 = vector.broadcast %1177 : vector<64x1xf32> to vector<64x128xf32>
    %1179 = arith.mulf %1176, %1178 : vector<64x128xf32>
    %1180 = arith.truncf %1179 : vector<64x128xf32> to vector<64x128xbf16>
    %c0_254 = arith.constant 0 : index
    %c0_255 = arith.constant 0 : index
    %1181 = vector.load %arg12[%c0_254, %c0_255] : memref<64x128xbf16, #tpu.memory_space<vmem>>, vector<64x128xbf16>
    tpu.vector_store %arg12[%c0_254, %c0_255], %1180 {strides = array<i32>} : memref<64x128xbf16, #tpu.memory_space<vmem>>, vector<64x128xbf16>,
    return
  }
}

</mosaic_0001>

<llo_original>
// kernel: tpu_custom_call.1
$region0: #{tpu_custom_call.1}
  #allocation0 [shape = 'u32[]', space=smem, size = 0x4, offset = 0x4, fixed_abs, tag = 'smem constant byte address 0x4 - core index']
  #allocation1 [shape = 'u32[144,128]{1,0:T(1,128)}', space=vmem, size = 0x12000, scoped, tag = 'internal scratch']
  #allocation2 [shape = 'f32[64,64]{1,0:T(8,128)}', space=vmem, size = 0x8000, scoped, tag = 'scratch operand']
  #allocation3 [shape = 'f32[64,64]{1,0:T(8,128)}', space=vmem, size = 0x8000, scoped, tag = 'scratch operand']
  #allocation4 [shape = 'f32[64,256]{1,0:T(8,128)}', space=vmem, size = 0x10000, scoped, tag = 'scratch operand']
  %s0 = inlined_call_operand.vmem [shape: f32[64,32], index: 0, kind: input, shape index: {}]
  %s1 = inlined_call_operand.vmem [shape: f32[64,1], index: 1, kind: input, shape index: {}]
  %s2 = inlined_call_operand.vmem [shape: bf16[32,256], index: 2, kind: input, shape index: {}]
  %s3 = inlined_call_operand.hbm [shape: f32[1,256], index: 3, kind: input, shape index: {}]
  %s4 = inlined_call_operand.vmem [shape: bf16[32,128], index: 4, kind: input, shape index: {}]
  %s5 = inlined_call_operand.vmem [shape: bf16[32,128], index: 5, kind: input, shape index: {}]
  %s6 = inlined_call_operand.vmem [shape: bf16[64,256], index: 6, kind: input, shape index: {}]
  %s7 = inlined_call_operand.vmem [shape: f32[1,256], index: 7, kind: input, shape index: {}]
  %s8 = inlined_call_operand.vmem [shape: bf16[32,128], index: 8, kind: input, shape index: {}]
  %s9 = inlined_call_operand.vmem [shape: bf16[32,128], index: 9, kind: input, shape index: {}]
  %s10 = inlined_call_operand.vmem [shape: bf16[64,128], index: 10, kind: input, shape index: {}]
  %s11 = inlined_call_operand.vmem [shape: f32[1,128], index: 11, kind: input, shape index: {}]
  %s12 = inlined_call_operand.hbm [shape: bf16[64,128], index: 12, kind: output, shape index: {}]
  %s13 = sld [smem:[#allocation0]]
  $region62: #{tpu_custom_call.1} parent=0
    _
  %s15 = ssub.s32 1, %s13
  %s16 = scalar_select 0, %s15, %s13
  $region1: #{tpu_custom_call.1} parent=0
    #allocation5 [shape = 'u8[1024]{0}', space=vmem, size = 0x400, scoped, tag = 'input window, operand 3, single buffered']
    #allocation6 [shape = 's32[1]{0}', space=sflag, size = 0x4, scoped, tag = 'scoped memory for tpu_custom_call.1']
    #allocation7 [shape = 's32[1]{0}', space=sflag, size = 0x4, scoped, tag = 'scoped memory for tpu_custom_call.1']
    #allocation8 [shape = 'u8[16384]{0}', space=vmem, size = 0x4000, scoped, tag = 'output window, operand 0, single buffered']
    %17 = vsyncpa [#allocation6], 0
    %18 = vsyncpa [#allocation7], 0
    // Predicated region
    $region2: #{tpu_custom_call.1} parent=1 // pred_check
      _
    $region3: #{tpu_custom_call.1} parent=1 // pred_check_branch
      %20 = sbr.rel (0) target = $region5
    $region4: #{tpu_custom_call.1} parent=1 // pred_region
      _
    $region5: #{tpu_custom_call.1} parent=1 // pred_fallthru
      _
    // Predicated region
    $region6: #{tpu_custom_call.1} parent=1 // pred_check
      _
    $region7: #{tpu_custom_call.1} parent=1 // pred_check_branch
      %22 = sbr.rel (0) target = $region9
    $region8: #{tpu_custom_call.1} parent=1 // pred_region
      _
    $region9: #{tpu_custom_call.1} parent=1 // pred_fallthru
      _
    // Predicated region
    $region10: #{tpu_custom_call.1} parent=1 // pred_check
      _
    $region11: #{tpu_custom_call.1} parent=1 // pred_check_branch
      %24 = sbr.rel (0) target = $region13
    $region12: #{tpu_custom_call.1} parent=1 // pred_region
      _
    $region13: #{tpu_custom_call.1} parent=1 // pred_fallthru
      _
    // Predicated region
    $region14: #{tpu_custom_call.1} parent=1 // pred_check
      _
    $region15: #{tpu_custom_call.1} parent=1 // pred_check_branch
      %26 = sbr.rel (0) target = $region17
    $region16: #{tpu_custom_call.1} parent=1 // pred_region
      %s28 = ssub.s32 32, 32
      %29 = vsyncadd [#allocation6], %s28
      %s31 = sshll.u32 [#allocation5], 4
      %s32 = int_to_ptr.vmem [resolvable:$true] %s31
      %34 = dma.hbm_to_vmem [thread:$0]  %s3, 32, %s32, [#allocation6]
    $region17: #{tpu_custom_call.1} parent=1 // pred_fallthru
      _
    // Predicated region
    $region18: #{tpu_custom_call.1} parent=1 // pred_check
      _
    $region19: #{tpu_custom_call.1} parent=1 // pred_check_branch
      %36 = sbr.rel (0) target = $region21
    $region20: #{tpu_custom_call.1} parent=1 // pred_region
      _
    $region21: #{tpu_custom_call.1} parent=1 // pred_fallthru
      _
    // Predicated region
    $region22: #{tpu_custom_call.1} parent=1 // pred_check
      _
    $region23: #{tpu_custom_call.1} parent=1 // pred_check_branch
      %38 = sbr.rel (0) target = $region25
    $region24: #{tpu_custom_call.1} parent=1 // pred_region
      _
    $region25: #{tpu_custom_call.1} parent=1 // pred_fallthru
      _
    // Predicated region
    $region26: #{tpu_custom_call.1} parent=1 // pred_check
      _
    $region27: #{tpu_custom_call.1} parent=1 // pred_check_branch
      %40 = sbr.rel (0) target = $region29
    $region28: #{tpu_custom_call.1} parent=1 // pred_region
      _
    $region29: #{tpu_custom_call.1} parent=1 // pred_fallthru
      _
    // Predicated region
    $region30: #{tpu_custom_call.1} parent=1 // pred_check
      _
    $region31: #{tpu_custom_call.1} parent=1 // pred_check_branch
      %42 = sbr.rel (0) target = $region33
    $region32: #{tpu_custom_call.1} parent=1 // pred_region
      _
    $region33: #{tpu_custom_call.1} parent=1 // pred_fallthru
      _
    // Predicated region
    $region34: #{tpu_custom_call.1} parent=1 // pred_check
      _
    $region35: #{tpu_custom_call.1} parent=1 // pred_check_branch
      %44 = sbr.rel (0) target = $region37
    $region36: #{tpu_custom_call.1} parent=1 // pred_region
      _
    $region37: #{tpu_custom_call.1} parent=1 // pred_fallthru
      _
    // Predicated region
    $region38: #{tpu_custom_call.1} parent=1 // pred_check
      _
    $region39: #{tpu_custom_call.1} parent=1 // pred_check_branch
      %46 = sbr.rel (0) target = $region41
    $region40: #{tpu_custom_call.1} parent=1 // pred_region
      _
    $region41: #{tpu_custom_call.1} parent=1 // pred_fallthru
      _
    // Predicated region
    $region42: #{tpu_custom_call.1} parent=1 // pred_check
      _
    $region43: #{tpu_custom_call.1} parent=1 // pred_check_branch
      %48 = sbr.rel (0) target = $region45
    $region44: #{tpu_custom_call.1} parent=1 // pred_region
      _
    $region45: #{tpu_custom_call.1} parent=1 // pred_fallthru
      _
    // Predicated region
    $region46: #{tpu_custom_call.1} parent=1 // pred_check
      _
    $region47: #{tpu_custom_call.1} parent=1 // pred_check_branch
      %50 = sbr.rel (0) target = $region49
    $region48: #{tpu_custom_call.1} parent=1 // pred_region
      _
    $region49: #{tpu_custom_call.1} parent=1 // pred_fallthru
      _
    // Predicated region
    $region50: #{tpu_custom_call.1} parent=1 // pred_check
      _
    $region51: #{tpu_custom_call.1} parent=1 // pred_check_branch
      %52 = sbr.rel (0) target = $region53
    $region52: #{tpu_custom_call.1} parent=1 // pred_region
      %53 = dma.done [#allocation6], 32
    $region53: #{tpu_custom_call.1} parent=1 // pred_fallthru
      _
    %v55 = vlaneseq
    %v56 = vand.u32 %v55, 127
    %vm57 = vcmp.ge.s32.totalorder %v56, 64
    %vm58 = vcmp.lt.s32.totalorder %v56, 96
    %vm59 = vmand %vm57, %vm58
    %v60 = vsel %vm59, 1.0, 0.5
    %v61 = vsel %vm59, 0.0, 0.5
    %v62 = vld [vmem:[%s0] sm:$0xff]
    %v63 = vld [vmem:[%s0 + $0x8] sm:$0xff]
    %v64 = vld [vmem:[%s0 + $0x10] sm:$0xff]
    %v65 = vld [vmem:[%s0 + $0x18] sm:$0xff]
    %v66 = vld [vmem:[%s0 + $0x20] sm:$0xff]
    %v67 = vld [vmem:[%s0 + $0x28] sm:$0xff]
    %v68 = vld [vmem:[%s0 + $0x30] sm:$0xff]
    %v69 = vld [vmem:[%s0 + $0x38] sm:$0xff]
    %v70 = vpack.c.bf16 %v63, %v62
    %v71 = vpack.c.bf16 %v65, %v64
    %v72 = vpack.c.bf16 %v67, %v66
    %v73 = vpack.c.bf16 %v69, %v68
    %v74 = vld [vmem:[%s2] sm:$0xff]
    %v75 = vld [vmem:[%s2 + $0x8] sm:$0xff]
    %v76 = vld [vmem:[%s2 + $0x10] sm:$0xff]
    %v77 = vld [vmem:[%s2 + $0x18] sm:$0xff]
    %v78 = vld [vmem:[#allocation5] sm:$0x3]
    %v80 = vlaneseq
    %v81 = vshrl.u32 %v80, 7
    %v82 = vsub.s32 0, %v81
    %v83 = vrot.slane %v78, %v82
    %v84 = vlaneseq
    %v85 = vshrl.u32 %v84, 7
    %v86 = vsub.s32 1, %v85
    %v87 = vrot.slane %v78, %v86
    %v94 = vunpack.c.l.b16 %v74
    %v95 = vunpack.c.h.b16 %v74
    %v96 = vunpack.c.l.b16 %v75
    %v97 = vunpack.c.h.b16 %v75
    %v98 = vunpack.c.l.b16 %v76
    %v99 = vunpack.c.h.b16 %v76
    %v100 = vunpack.c.l.b16 %v77
    %v101 = vunpack.c.h.b16 %v77
    %v102 = vpack.c.b16 %v96, %v94
    %v103 = vpack.c.b16 %v97, %v95
    %v104 = vpack.c.b16 %v100, %v98
    %v105 = vpack.c.b16 %v101, %v99
    %vm110 = vcmask 261120
    %v112 = vsel %vm110, %v70, 0
    %v115 = vsel %vm110, %v71, 0
    %v118 = vsel %vm110, %v72, 0
    %v121 = vsel %vm110, %v73, 0
    %123 = vmatprep.subr.bf16.mxu0 %v103
    %124 = vmatpush1.bf16.msra.mxu0 %v102
    %125 = vmatprep.subr.bf16.mxu0 %v105
    %126 = vmatpush1.bf16.msra.mxu0 %v104
    %127 = vmatprep.subr.bf16.mxu0 0
    %128 = vmatpush1.bf16.msra.mxu0 0
    %129 = vmatprep.subr.bf16.mxu0 0
    %130 = vmatpush1.bf16.msra.mxu0 0
    %131 = vmatprep.subr.bf16.mxu0 0
    %132 = vmatpush1.bf16.msra.mxu0 0
    %133 = vmatprep.subr.bf16.mxu0 0
    %134 = vmatpush1.bf16.msra.mxu0 0
    %135 = vmatprep.subr.bf16.mxu0 0
    %136 = vmatpush1.bf16.msra.mxu0 0
    %137 = vmatprep.subr.bf16.mxu0 0
    %138 = vmatpush1.bf16.msra.mxu0 0
    %139 = vmatprep.subr.bf16.mxu0 0
    %140 = vmatpush1.bf16.msra.mxu0 0
    %141 = vmatprep.subr.bf16.mxu0 0
    %142 = vmatpush1.bf16.msra.mxu0 0
    %143 = vmatprep.subr.bf16.mxu0 0
    %144 = vmatpush1.bf16.msra.mxu0 0
    %145 = vmatprep.subr.bf16.mxu0 0
    %146 = vmatpush1.bf16.msra.mxu0 0
    %147 = vmatprep.subr.bf16.mxu0 0
    %148 = vmatpush1.bf16.msra.mxu0 0
    %149 = vmatprep.subr.bf16.mxu0 0
    %150 = vmatpush1.bf16.msra.mxu0 0
    %151 = vmatprep.subr.bf16.mxu0 0
    %152 = vmatpush1.bf16.msra.mxu0 0
    %153 = vmatprep.subr.bf16.mxu0 0
    %154 = vmatpush1.bf16.msra.mxu0 0
    %155 = vmatprep.mubr.bf16.mxu0 0
    %156 = vmatmul.mubr.bf16.gmra.mrb[0].mxu0 %v112
    %v157 = vpop.f32.mrb[0].mxu0
    %v158 = vadd.f32 %v83, %v157
    %v159 = vpop.f32.mrb[0].mxu0
    %v160 = vadd.f32 %v87, %v159
    %v161 = vpop.f32.mrb[0].mxu0
    %v162 = vadd.f32 %v83, %v161
    %v163 = vpop.f32.mrb[0].mxu0
    %v164 = vadd.f32 %v87, %v163
    %165 = vmatprep.mubr.bf16.mxu0 0
    %166 = vmatmul.mubr.bf16.gmra.mrb[0].mxu0 %v115
    %v167 = vpop.f32.mrb[0].mxu0
    %v168 = vadd.f32 %v83, %v167
    %v169 = vpop.f32.mrb[0].mxu0
    %v170 = vadd.f32 %v87, %v169
    %v171 = vpop.f32.mrb[0].mxu0
    %v172 = vadd.f32 %v83, %v171
    %v173 = vpop.f32.mrb[0].mxu0
    %v174 = vadd.f32 %v87, %v173
    %175 = vmatprep.mubr.bf16.mxu0 0
    %176 = vmatmul.mubr.bf16.gmra.mrb[0].mxu0 %v118
    %v177 = vpop.f32.mrb[0].mxu0
    %v178 = vadd.f32 %v83, %v177
    %v179 = vpop.f32.mrb[0].mxu0
    %v180 = vadd.f32 %v87, %v179
    %v181 = vpop.f32.mrb[0].mxu0
    %v182 = vadd.f32 %v83, %v181
    %v183 = vpop.f32.mrb[0].mxu0
    %v184 = vadd.f32 %v87, %v183
    %185 = vmatprep.mubr.bf16.mxu0 0
    %186 = vmatmul.mubr.bf16.gmra.mrb[0].mxu0 %v121
    %v187 = vpop.f32.mrb[0].mxu0
    %v188 = vadd.f32 %v83, %v187
    %v189 = vpop.f32.mrb[0].mxu0
    %v190 = vadd.f32 %v87, %v189
    %v191 = vpop.f32.mrb[0].mxu0
    %v192 = vadd.f32 %v83, %v191
    %v193 = vpop.f32.mrb[0].mxu0
    %v194 = vadd.f32 %v87, %v193
    %195 = vdwg.mxu0
    %196 = vst [vmem:[#allocation4] sm:$0xff] %v158
    %197 = vst [vmem:[#allocation4 + $0x8] sm:$0xff] %v160
    %198 = vst [vmem:[#allocation4 + $0x10] sm:$0xff] %v162
    %199 = vst [vmem:[#allocation4 + $0x18] sm:$0xff] %v164
    %200 = vst [vmem:[#allocation4 + $0x20] sm:$0xff] %v168
    %201 = vst [vmem:[#allocation4 + $0x28] sm:$0xff] %v170
    %202 = vst [vmem:[#allocation4 + $0x30] sm:$0xff] %v172
    %203 = vst [vmem:[#allocation4 + $0x38] sm:$0xff] %v174
    %204 = vst [vmem:[#allocation4 + $0x40] sm:$0xff] %v178
    %205 = vst [vmem:[#allocation4 + $0x48] sm:$0xff] %v180
    %206 = vst [vmem:[#allocation4 + $0x50] sm:$0xff] %v182
    %207 = vst [vmem:[#allocation4 + $0x58] sm:$0xff] %v184
    %208 = vst [vmem:[#allocation4 + $0x60] sm:$0xff] %v188
    %209 = vst [vmem:[#allocation4 + $0x68] sm:$0xff] %v190
    %210 = vst [vmem:[#allocation4 + $0x70] sm:$0xff] %v192
    %211 = vst [vmem:[#allocation4 + $0x78] sm:$0xff] %v194
    %v212 = vld [vmem:[%s4] sm:$0xf]
    %v213 = vld [vmem:[%s4 + $0x4] sm:$0xf]
    %v214 = vld [vmem:[%s4 + $0x8] sm:$0xf]
    %v215 = vld [vmem:[%s4 + $0xc] sm:$0xf]
    %v216 = vld [vmem:[%s5] sm:$0xf]
    %v217 = vld [vmem:[%s5 + $0x4] sm:$0xf]
    %v218 = vld [vmem:[%s5 + $0x8] sm:$0xf]
    %v219 = vld [vmem:[%s5 + $0xc] sm:$0xf]
    %s220 = smul.u32 0, 2
    %s221 = smul.addr %s220, 8
    %s222 = scalar_lea.vmem [#allocation4], %s221
    %v223 = vld [vmem:[%s222] sm:$0xff]
    %v228 = vunpack.c.l.b16 %v212
    %v229 = vunpack.c.l.b16 %v213
    %v230 = vunpack.c.l.b16 %v214
    %v231 = vunpack.c.l.b16 %v215
    %v232 = vpack.c.b16 %v229, %v228
    %v233 = vpack.c.b16 %v231, %v230
    %v237 = vsel %vm110, 0, 0
    %239 = vmatprep.subr.bf16.mxu0 0
    %240 = vmatpush1.bf16.msra.mxu0 %v232
    %241 = vmatprep.subr.bf16.mxu0 0
    %242 = vmatpush1.bf16.msra.mxu0 %v233
    %243 = vmatprep.subr.bf16.mxu0 0
    %244 = vmatpush1.bf16.msra.mxu0 0
    %245 = vmatprep.subr.bf16.mxu0 0
    %246 = vmatpush1.bf16.msra.mxu0 0
    %247 = vmatprep.subr.bf16.mxu0 0
    %248 = vmatpush1.bf16.msra.mxu0 0
    %249 = vmatprep.subr.bf16.mxu0 0
    %250 = vmatpush1.bf16.msra.mxu0 0
    %251 = vmatprep.subr.bf16.mxu0 0
    %252 = vmatpush1.bf16.msra.mxu0 0
    %253 = vmatprep.subr.bf16.mxu0 0
    %254 = vmatpush1.bf16.msra.mxu0 0
    %255 = vmatprep.subr.bf16.mxu0 0
    %256 = vmatpush1.bf16.msra.mxu0 0
    %257 = vmatprep.subr.bf16.mxu0 0
    %258 = vmatpush1.bf16.msra.mxu0 0
    %259 = vmatprep.subr.bf16.mxu0 0
    %260 = vmatpush1.bf16.msra.mxu0 0
    %261 = vmatprep.subr.bf16.mxu0 0
    %262 = vmatpush1.bf16.msra.mxu0 0
    %263 = vmatprep.subr.bf16.mxu0 0
    %264 = vmatpush1.bf16.msra.mxu0 0
    %265 = vmatprep.subr.bf16.mxu0 0
    %266 = vmatpush1.bf16.msra.mxu0 0
    %267 = vmatprep.subr.bf16.mxu0 0
    %268 = vmatpush1.bf16.msra.mxu0 0
    %269 = vmatprep.subr.bf16.mxu0 0
    %270 = vmatpush1.bf16.msra.mxu0 0
    %271 = vmatprep.mubr.bf16.mxu0 0
    %272 = vmatmul.mubr.bf16.gmra.mrb[0].mxu0 %v237
    %v273 = vpop.f32.mrb[0].mxu0
    %v274 = vadd.f32 0.0, %v273
    %v275 = vpop.f32.mrb[0].mxu0
    %v276 = vpop.f32.mrb[0].mxu0
    %v277 = vpop.f32.mrb[0].mxu0
    %278 = vdwg.mxu0
    %v279 = vadd.f32 %v223, %v274
    %s280 = smul.u32 7, 2
    %s281 = smul.addr %s280, 8
    %s282 = scalar_lea.vmem [#allocation4], %s281
    %v283 = vld [vmem:[%s282 + $0x8] sm:$0xff]
    %v288 = vunpack.c.l.b16 %v216
    %v289 = vunpack.c.l.b16 %v217
    %v290 = vunpack.c.l.b16 %v218
    %v291 = vunpack.c.l.b16 %v219
    %v292 = vpack.c.b16 %v289, %v288
    %v293 = vpack.c.b16 %v291, %v290
    %296 = vmatprep.subr.bf16.mxu0 0
    %297 = vmatpush1.bf16.msra.mxu0 %v292
    %298 = vmatprep.subr.bf16.mxu0 0
    %299 = vmatpush1.bf16.msra.mxu0 %v293
    %300 = vmatprep.subr.bf16.mxu0 0
    %301 = vmatpush1.bf16.msra.mxu0 0
    %302 = vmatprep.subr.bf16.mxu0 0
    %303 = vmatpush1.bf16.msra.mxu0 0
    %304 = vmatprep.subr.bf16.mxu0 0
    %305 = vmatpush1.bf16.msra.mxu0 0
    %306 = vmatprep.subr.bf16.mxu0 0
    %307 = vmatpush1.bf16.msra.mxu0 0
    %308 = vmatprep.subr.bf16.mxu0 0
    %309 = vmatpush1.bf16.msra.mxu0 0
    %310 = vmatprep.subr.bf16.mxu0 0
    %311 = vmatpush1.bf16.msra.mxu0 0
    %312 = vmatprep.subr.bf16.mxu0 0
    %313 = vmatpush1.bf16.msra.mxu0 0
    %314 = vmatprep.subr.bf16.mxu0 0
    %315 = vmatpush1.bf16.msra.mxu0 0
    %316 = vmatprep.subr.bf16.mxu0 0
    %317 = vmatpush1.bf16.msra.mxu0 0
    %318 = vmatprep.subr.bf16.mxu0 0
    %319 = vmatpush1.bf16.msra.mxu0 0
    %320 = vmatprep.subr.bf16.mxu0 0
    %321 = vmatpush1.bf16.msra.mxu0 0
    %322 = vmatprep.subr.bf16.mxu0 0
    %323 = vmatpush1.bf16.msra.mxu0 0
    %324 = vmatprep.subr.bf16.mxu0 0
    %325 = vmatpush1.bf16.msra.mxu0 0
    %326 = vmatprep.subr.bf16.mxu0 0
    %327 = vmatpush1.bf16.msra.mxu0 0
    %328 = vmatprep.mubr.bf16.mxu0 0
    %329 = vmatmul.mubr.bf16.gmra.mrb[0].mxu0 %v237
    %v330 = vpop.f32.mrb[0].mxu0
    %v331 = vadd.f32 0.0, %v330
    %v332 = vpop.f32.mrb[0].mxu0
    %v333 = vpop.f32.mrb[0].mxu0
    %v334 = vpop.f32.mrb[0].mxu0
    %335 = vdwg.mxu0
    %v336 = vadd.f32 %v283, %v331
    %v337 = vld [vmem:[%s1] sm:$0xff]
    %v338 = vmul.f32 %v279, %v60
    %v339 = vtanh.pop %v338
    %v340 = vmul.f32 %v339, %v60
    %v341 = vadd.f32 %v340, %v61
    %v342 = vmul.f32 %v341, 0.0
    %344 = vrot.lane.b32.xlu0 %v341, 64
    %v345 = vpop.permute.xlu0 %344
    %v347 = vmul.f32 %v341, %v345
    %349 = vrot.lane.b32.xlu0 %v347, 32
    %v350 = vpop.permute.xlu0 %349
    %v352 = vadd.f32 %v342, %v350
    %v353 = vtanh.pop %v352
    %355 = vrot.lane.b32.xlu0 %v353, 64
    %v356 = vpop.permute.xlu0 %355
    %v358 = vmul.f32 %v341, %v356
    %vm359 = vcmp.gt.f32.partialorder %v337, 0.0
    %v360 = vsel %vm359, 1, 0
    %361 = vset.pattern.permute.xlu0 0
    %362 = vperm.xlu0 %361, %v360
    %v363 = vpop.permute.xlu0 %362
    %vm364 = vcmp.eq.s32.totalorder %v363, 1
    %v365 = vsel %vm364, %v358, 0.0
    %v366 = vsel %vm364, %v352, 0.0
    %s367 = scalar_lea.vmem %s1, 56
    %v368 = vld [vmem:[%s367] sm:$0xff]
    %v369 = vmul.f32 %v336, %v60
    %v370 = vtanh.pop %v369
    %v371 = vmul.f32 %v370, %v60
    %v372 = vadd.f32 %v371, %v61
    %v373 = vmul.f32 %v372, 0.0
    %375 = vrot.lane.b32.xlu0 %v372, 64
    %v376 = vpop.permute.xlu0 %375
    %v378 = vmul.f32 %v372, %v376
    %380 = vrot.lane.b32.xlu0 %v378, 32
    %v381 = vpop.permute.xlu0 %380
    %v383 = vadd.f32 %v373, %v381
    %v384 = vtanh.pop %v383
    %386 = vrot.lane.b32.xlu0 %v384, 64
    %v387 = vpop.permute.xlu0 %386
    %v389 = vmul.f32 %v372, %v387
    %vm390 = vcmp.gt.f32.partialorder %v368, 0.0
    %v391 = vsel %vm390, 1, 0
    %392 = vset.pattern.permute.xlu0 0
    %393 = vperm.xlu0 %392, %v391
    %v394 = vpop.permute.xlu0 %393
    %vm395 = vcmp.eq.s32.totalorder %v394, 1
    %v396 = vsel %vm395, %v389, 0.0
    %v397 = vsel %vm395, %v383, 0.0
    %399 = vrot.lane.b32.xlu0 %v365, 32
    %v400 = vpop.permute.xlu0 %399
    %402 = vst.msk [vmem:[#allocation2] sm:$0xff] %vm110, %v400
    %404 = vrot.lane.b32.xlu0 %v396, 64
    %v405 = vpop.permute.xlu0 %404
    %s407 = scalar_lea.vmem [#allocation2], 56
    %vm408 = vcmask 523520
    %409 = vst.msk [vmem:[%s407] sm:$0xff] %vm408, %v405
    %s410 = smul.u32 1, 2
    %s411 = smul.addr %s410, 8
    %s412 = scalar_lea.vmem [#allocation4], %s411
    %v413 = vld [vmem:[%s412] sm:$0xff]
    %v414 = vpack.c.bf16 %v365, %v365
    %416 = vrot.lane.b32.xlu0 %v414, 32
    %v417 = vpop.permute.xlu0 %416
    %v419 = vsel %vm110, %v417, 0
    %421 = vmatprep.subr.bf16.mxu0 0
    %422 = vmatpush1.bf16.msra.mxu0 %v232
    %423 = vmatprep.subr.bf16.mxu0 0
    %424 = vmatpush1.bf16.msra.mxu0 %v233
    %425 = vmatprep.subr.bf16.mxu0 0
    %426 = vmatpush1.bf16.msra.mxu0 0
    %427 = vmatprep.subr.bf16.mxu0 0
    %428 = vmatpush1.bf16.msra.mxu0 0
    %429 = vmatprep.subr.bf16.mxu0 0
    %430 = vmatpush1.bf16.msra.mxu0 0
    %431 = vmatprep.subr.bf16.mxu0 0
    %432 = vmatpush1.bf16.msra.mxu0 0
    %433 = vmatprep.subr.bf16.mxu0 0
    %434 = vmatpush1.bf16.msra.mxu0 0
    %435 = vmatprep.subr.bf16.mxu0 0
    %436 = vmatpush1.bf16.msra.mxu0 0
    %437 = vmatprep.subr.bf16.mxu0 0
    %438 = vmatpush1.bf16.msra.mxu0 0
    %439 = vmatprep.subr.bf16.mxu0 0
    %440 = vmatpush1.bf16.msra.mxu0 0
    %441 = vmatprep.subr.bf16.mxu0 0
    %442 = vmatpush1.bf16.msra.mxu0 0
    %443 = vmatprep.subr.bf16.mxu0 0
    %444 = vmatpush1.bf16.msra.mxu0 0
    %445 = vmatprep.subr.bf16.mxu0 0
    %446 = vmatpush1.bf16.msra.mxu0 0
    %447 = vmatprep.subr.bf16.mxu0 0
    %448 = vmatpush1.bf16.msra.mxu0 0
    %449 = vmatprep.subr.bf16.mxu0 0
    %450 = vmatpush1.bf16.msra.mxu0 0
    %451 = vmatprep.subr.bf16.mxu0 0
    %452 = vmatpush1.bf16.msra.mxu0 0
    %453 = vmatprep.mubr.bf16.mxu0 0
    %454 = vmatmul.mubr.bf16.gmra.mrb[0].mxu0 %v419
    %v455 = vpop.f32.mrb[0].mxu0
    %v456 = vadd.f32 0.0, %v455
    %v457 = vpop.f32.mrb[0].mxu0
    %v458 = vpop.f32.mrb[0].mxu0
    %v459 = vpop.f32.mrb[0].mxu0
    %460 = vdwg.mxu0
    %v461 = vadd.f32 %v413, %v456
    %s462 = smul.u32 6, 2
    %s463 = smul.addr %s462, 8
    %s464 = scalar_lea.vmem [#allocation4], %s463
    %v465 = vld [vmem:[%s464 + $0x8] sm:$0xff]
    %v466 = vpack.c.bf16 %v396, %v396
    %468 = vrot.lane.b32.xlu0 %v466, 32
    %v469 = vpop.permute.xlu0 %468
    %v471 = vsel %vm110, %v469, 0
    %473 = vmatprep.subr.bf16.mxu0 0
    %474 = vmatpush1.bf16.msra.mxu0 %v292
    %475 = vmatprep.subr.bf16.mxu0 0
    %476 = vmatpush1.bf16.msra.mxu0 %v293
    %477 = vmatprep.subr.bf16.mxu0 0
    %478 = vmatpush1.bf16.msra.mxu0 0
    %479 = vmatprep.subr.bf16.mxu0 0
    %480 = vmatpush1.bf16.msra.mxu0 0
    %481 = vmatprep.subr.bf16.mxu0 0
    %482 = vmatpush1.bf16.msra.mxu0 0
    %483 = vmatprep.subr.bf16.mxu0 0
    %484 = vmatpush1.bf16.msra.mxu0 0
    %485 = vmatprep.subr.bf16.mxu0 0
    %486 = vmatpush1.bf16.msra.mxu0 0
    %487 = vmatprep.subr.bf16.mxu0 0
    %488 = vmatpush1.bf16.msra.mxu0 0
    %489 = vmatprep.subr.bf16.mxu0 0
    %490 = vmatpush1.bf16.msra.mxu0 0
    %491 = vmatprep.subr.bf16.mxu0 0
    %492 = vmatpush1.bf16.msra.mxu0 0
    %493 = vmatprep.subr.bf16.mxu0 0
    %494 = vmatpush1.bf16.msra.mxu0 0
    %495 = vmatprep.subr.bf16.mxu0 0
    %496 = vmatpush1.bf16.msra.mxu0 0
    %497 = vmatprep.subr.bf16.mxu0 0
    %498 = vmatpush1.bf16.msra.mxu0 0
    %499 = vmatprep.subr.bf16.mxu0 0
    %500 = vmatpush1.bf16.msra.mxu0 0
    %501 = vmatprep.subr.bf16.mxu0 0
    %502 = vmatpush1.bf16.msra.mxu0 0
    %503 = vmatprep.subr.bf16.mxu0 0
    %504 = vmatpush1.bf16.msra.mxu0 0
    %505 = vmatprep.mubr.bf16.mxu0 0
    %506 = vmatmul.mubr.bf16.gmra.mrb[0].mxu0 %v471
    %v507 = vpop.f32.mrb[0].mxu0
    %v508 = vadd.f32 0.0, %v507
    %v509 = vpop.f32.mrb[0].mxu0
    %v510 = vpop.f32.mrb[0].mxu0
    %v511 = vpop.f32.mrb[0].mxu0
    %512 = vdwg.mxu0
    %v513 = vadd.f32 %v465, %v508
    %s514 = scalar_lea.vmem %s1, 8
    %v515 = vld [vmem:[%s514] sm:$0xff]
    %v516 = vmul.f32 %v461, %v60
    %v517 = vtanh.pop %v516
    %v518 = vmul.f32 %v517, %v60
    %v519 = vadd.f32 %v518, %v61
    %v520 = vmul.f32 %v519, %v366
    %522 = vrot.lane.b32.xlu0 %v519, 64
    %v523 = vpop.permute.xlu0 %522
    %v525 = vmul.f32 %v519, %v523
    %527 = vrot.lane.b32.xlu0 %v525, 32
    %v528 = vpop.permute.xlu0 %527
    %v530 = vadd.f32 %v520, %v528
    %v531 = vtanh.pop %v530
    %533 = vrot.lane.b32.xlu0 %v531, 64
    %v534 = vpop.permute.xlu0 %533
    %v536 = vmul.f32 %v519, %v534
    %vm537 = vcmp.gt.f32.partialorder %v515, 0.0
    %v538 = vsel %vm537, 1, 0
    %539 = vset.pattern.permute.xlu0 0
    %540 = vperm.xlu0 %539, %v538
    %v541 = vpop.permute.xlu0 %540
    %vm542 = vcmp.eq.s32.totalorder %v541, 1
    %v543 = vsel %vm542, %v536, %v365
    %v544 = vsel %vm542, %v530, %v366
    %s545 = scalar_lea.vmem %s1, 48
    %v546 = vld [vmem:[%s545] sm:$0xff]
    %v547 = vmul.f32 %v513, %v60
    %v548 = vtanh.pop %v547
    %v549 = vmul.f32 %v548, %v60
    %v550 = vadd.f32 %v549, %v61
    %v551 = vmul.f32 %v550, %v397
    %553 = vrot.lane.b32.xlu0 %v550, 64
    %v554 = vpop.permute.xlu0 %553
    %v556 = vmul.f32 %v550, %v554
    %558 = vrot.lane.b32.xlu0 %v556, 32
    %v559 = vpop.permute.xlu0 %558
    %v561 = vadd.f32 %v551, %v559
    %v562 = vtanh.pop %v561
    %564 = vrot.lane.b32.xlu0 %v562, 64
    %v565 = vpop.permute.xlu0 %564
    %v567 = vmul.f32 %v550, %v565
    %vm568 = vcmp.gt.f32.partialorder %v546, 0.0
    %v569 = vsel %vm568, 1, 0
    %570 = vset.pattern.permute.xlu0 0
    %571 = vperm.xlu0 %570, %v569
    %v572 = vpop.permute.xlu0 %571
    %vm573 = vcmp.eq.s32.totalorder %v572, 1
    %v574 = vsel %vm573, %v567, %v396
    %v575 = vsel %vm573, %v561, %v397
    %577 = vrot.lane.b32.xlu0 %v543, 32
    %v578 = vpop.permute.xlu0 %577
    %s580 = scalar_lea.vmem [#allocation2], 8
    %581 = vst.msk [vmem:[%s580] sm:$0xff] %vm110, %v578
    %583 = vrot.lane.b32.xlu0 %v574, 64
    %v584 = vpop.permute.xlu0 %583
    %s586 = scalar_lea.vmem [#allocation2], 48
    %587 = vst.msk [vmem:[%s586] sm:$0xff] %vm408, %v584
    %s588 = smul.u32 2, 2
    %s589 = smul.addr %s588, 8
    %s590 = scalar_lea.vmem [#allocation4], %s589
    %v591 = vld [vmem:[%s590] sm:$0xff]
    %v592 = vpack.c.bf16 %v543, %v543
    %594 = vrot.lane.b32.xlu0 %v592, 32
    %v595 = vpop.permute.xlu0 %594
    %v597 = vsel %vm110, %v595, 0
    %599 = vmatprep.subr.bf16.mxu0 0
    %600 = vmatpush1.bf16.msra.mxu0 %v232
    %601 = vmatprep.subr.bf16.mxu0 0
    %602 = vmatpush1.bf16.msra.mxu0 %v233
    %603 = vmatprep.subr.bf16.mxu0 0
    %604 = vmatpush1.bf16.msra.mxu0 0
    %605 = vmatprep.subr.bf16.mxu0 0
    %606 = vmatpush1.bf16.msra.mxu0 0
    %607 = vmatprep.subr.bf16.mxu0 0
    %608 = vmatpush1.bf16.msra.mxu0 0
    %609 = vmatprep.subr.bf16.mxu0 0
    %610 = vmatpush1.bf16.msra.mxu0 0
    %611 = vmatprep.subr.bf16.mxu0 0
    %612 = vmatpush1.bf16.msra.mxu0 0
    %613 = vmatprep.subr.bf16.mxu0 0
    %614 = vmatpush1.bf16.msra.mxu0 0
    %615 = vmatprep.subr.bf16.mxu0 0
    %616 = vmatpush1.bf16.msra.mxu0 0
    %617 = vmatprep.subr.bf16.mxu0 0
    %618 = vmatpush1.bf16.msra.mxu0 0
    %619 = vmatprep.subr.bf16.mxu0 0
    %620 = vmatpush1.bf16.msra.mxu0 0
    %621 = vmatprep.subr.bf16.mxu0 0
    %622 = vmatpush1.bf16.msra.mxu0 0
    %623 = vmatprep.subr.bf16.mxu0 0
    %624 = vmatpush1.bf16.msra.mxu0 0
    %625 = vmatprep.subr.bf16.mxu0 0
    %626 = vmatpush1.bf16.msra.mxu0 0
    %627 = vmatprep.subr.bf16.mxu0 0
    %628 = vmatpush1.bf16.msra.mxu0 0
    %629 = vmatprep.subr.bf16.mxu0 0
    %630 = vmatpush1.bf16.msra.mxu0 0
    %631 = vmatprep.mubr.bf16.mxu0 0
    %632 = vmatmul.mubr.bf16.gmra.mrb[0].mxu0 %v597
    %v633 = vpop.f32.mrb[0].mxu0
    %v634 = vadd.f32 0.0, %v633
    %v635 = vpop.f32.mrb[0].mxu0
    %v636 = vpop.f32.mrb[0].mxu0
    %v637 = vpop.f32.mrb[0].mxu0
    %638 = vdwg.mxu0
    %v639 = vadd.f32 %v591, %v634
    %s640 = smul.u32 5, 2
    %s641 = smul.addr %s640, 8
    %s642 = scalar_lea.vmem [#allocation4], %s641
    %v643 = vld [vmem:[%s642 + $0x8] sm:$0xff]
    %v644 = vpack.c.bf16 %v574, %v574
    %646 = vrot.lane.b32.xlu0 %v644, 32
    %v647 = vpop.permute.xlu0 %646
    %v649 = vsel %vm110, %v647, 0
    %651 = vmatprep.subr.bf16.mxu0 0
    %652 = vmatpush1.bf16.msra.mxu0 %v292
    %653 = vmatprep.subr.bf16.mxu0 0
    %654 = vmatpush1.bf16.msra.mxu0 %v293
    %655 = vmatprep.subr.bf16.mxu0 0
    %656 = vmatpush1.bf16.msra.mxu0 0
    %657 = vmatprep.subr.bf16.mxu0 0
    %658 = vmatpush1.bf16.msra.mxu0 0
    %659 = vmatprep.subr.bf16.mxu0 0
    %660 = vmatpush1.bf16.msra.mxu0 0
    %661 = vmatprep.subr.bf16.mxu0 0
    %662 = vmatpush1.bf16.msra.mxu0 0
    %663 = vmatprep.subr.bf16.mxu0 0
    %664 = vmatpush1.bf16.msra.mxu0 0
    %665 = vmatprep.subr.bf16.mxu0 0
    %666 = vmatpush1.bf16.msra.mxu0 0
    %667 = vmatprep.subr.bf16.mxu0 0
    %668 = vmatpush1.bf16.msra.mxu0 0
    %669 = vmatprep.subr.bf16.mxu0 0
    %670 = vmatpush1.bf16.msra.mxu0 0
    %671 = vmatprep.subr.bf16.mxu0 0
    %672 = vmatpush1.bf16.msra.mxu0 0
    %673 = vmatprep.subr.bf16.mxu0 0
    %674 = vmatpush1.bf16.msra.mxu0 0
    %675 = vmatprep.subr.bf16.mxu0 0
    %676 = vmatpush1.bf16.msra.mxu0 0
    %677 = vmatprep.subr.bf16.mxu0 0
    %678 = vmatpush1.bf16.msra.mxu0 0
    %679 = vmatprep.subr.bf16.mxu0 0
    %680 = vmatpush1.bf16.msra.mxu0 0
    %681 = vmatprep.subr.bf16.mxu0 0
    %682 = vmatpush1.bf16.msra.mxu0 0
    %683 = vmatprep.mubr.bf16.mxu0 0
    %684 = vmatmul.mubr.bf16.gmra.mrb[0].mxu0 %v649
    %v685 = vpop.f32.mrb[0].mxu0
    %v686 = vadd.f32 0.0, %v685
    %v687 = vpop.f32.mrb[0].mxu0
    %v688 = vpop.f32.mrb[0].mxu0
    %v689 = vpop.f32.mrb[0].mxu0
    %690 = vdwg.mxu0
    %v691 = vadd.f32 %v643, %v686
    %s692 = scalar_lea.vmem %s1, 16
    %v693 = vld [vmem:[%s692] sm:$0xff]
    %v694 = vmul.f32 %v639, %v60
    %v695 = vtanh.pop %v694
    %v696 = vmul.f32 %v695, %v60
    %v697 = vadd.f32 %v696, %v61
    %v698 = vmul.f32 %v697, %v544
    %700 = vrot.lane.b32.xlu0 %v697, 64
    %v701 = vpop.permute.xlu0 %700
    %v703 = vmul.f32 %v697, %v701
    %705 = vrot.lane.b32.xlu0 %v703, 32
    %v706 = vpop.permute.xlu0 %705
    %v708 = vadd.f32 %v698, %v706
    %v709 = vtanh.pop %v708
    %711 = vrot.lane.b32.xlu0 %v709, 64
    %v712 = vpop.permute.xlu0 %711
    %v714 = vmul.f32 %v697, %v712
    %vm715 = vcmp.gt.f32.partialorder %v693, 0.0
    %v716 = vsel %vm715, 1, 0
    %717 = vset.pattern.permute.xlu0 0
    %718 = vperm.xlu0 %717, %v716
    %v719 = vpop.permute.xlu0 %718
    %vm720 = vcmp.eq.s32.totalorder %v719, 1
    %v721 = vsel %vm720, %v714, %v543
    %v722 = vsel %vm720, %v708, %v544
    %s723 = scalar_lea.vmem %s1, 40
    %v724 = vld [vmem:[%s723] sm:$0xff]
    %v725 = vmul.f32 %v691, %v60
    %v726 = vtanh.pop %v725
    %v727 = vmul.f32 %v726, %v60
    %v728 = vadd.f32 %v727, %v61
    %v729 = vmul.f32 %v728, %v575
    %731 = vrot.lane.b32.xlu0 %v728, 64
    %v732 = vpop.permute.xlu0 %731
    %v734 = vmul.f32 %v728, %v732
    %736 = vrot.lane.b32.xlu0 %v734, 32
    %v737 = vpop.permute.xlu0 %736
    %v739 = vadd.f32 %v729, %v737
    %v740 = vtanh.pop %v739
    %742 = vrot.lane.b32.xlu0 %v740, 64
    %v743 = vpop.permute.xlu0 %742
    %v745 = vmul.f32 %v728, %v743
    %vm746 = vcmp.gt.f32.partialorder %v724, 0.0
    %v747 = vsel %vm746, 1, 0
    %748 = vset.pattern.permute.xlu0 0
    %749 = vperm.xlu0 %748, %v747
    %v750 = vpop.permute.xlu0 %749
    %vm751 = vcmp.eq.s32.totalorder %v750, 1
    %v752 = vsel %vm751, %v745, %v574
    %v753 = vsel %vm751, %v739, %v575
    %755 = vrot.lane.b32.xlu0 %v721, 32
    %v756 = vpop.permute.xlu0 %755
    %s758 = scalar_lea.vmem [#allocation2], 16
    %759 = vst.msk [vmem:[%s758] sm:$0xff] %vm110, %v756
    %761 = vrot.lane.b32.xlu0 %v752, 64
    %v762 = vpop.permute.xlu0 %761
    %s764 = scalar_lea.vmem [#allocation2], 40
    %765 = vst.msk [vmem:[%s764] sm:$0xff] %vm408, %v762
    %s766 = smul.u32 3, 2
    %s767 = smul.addr %s766, 8
    %s768 = scalar_lea.vmem [#allocation4], %s767
    %v769 = vld [vmem:[%s768] sm:$0xff]
    %v770 = vpack.c.bf16 %v721, %v721
    %772 = vrot.lane.b32.xlu0 %v770, 32
    %v773 = vpop.permute.xlu0 %772
    %v775 = vsel %vm110, %v773, 0
    %777 = vmatprep.subr.bf16.mxu0 0
    %778 = vmatpush1.bf16.msra.mxu0 %v232
    %779 = vmatprep.subr.bf16.mxu0 0
    %780 = vmatpush1.bf16.msra.mxu0 %v233
    %781 = vmatprep.subr.bf16.mxu0 0
    %782 = vmatpush1.bf16.msra.mxu0 0
    %783 = vmatprep.subr.bf16.mxu0 0
    %784 = vmatpush1.bf16.msra.mxu0 0
    %785 = vmatprep.subr.bf16.mxu0 0
    %786 = vmatpush1.bf16.msra.mxu0 0
    %787 = vmatprep.subr.bf16.mxu0 0
    %788 = vmatpush1.bf16.msra.mxu0 0
    %789 = vmatprep.subr.bf16.mxu0 0
    %790 = vmatpush1.bf16.msra.mxu0 0
    %791 = vmatprep.subr.bf16.mxu0 0
    %792 = vmatpush1.bf16.msra.mxu0 0
    %793 = vmatprep.subr.bf16.mxu0 0
    %794 = vmatpush1.bf16.msra.mxu0 0
    %795 = vmatprep.subr.bf16.mxu0 0
    %796 = vmatpush1.bf16.msra.mxu0 0
    %797 = vmatprep.subr.bf16.mxu0 0
    %798 = vmatpush1.bf16.msra.mxu0 0
    %799 = vmatprep.subr.bf16.mxu0 0
    %800 = vmatpush1.bf16.msra.mxu0 0
    %801 = vmatprep.subr.bf16.mxu0 0
    %802 = vmatpush1.bf16.msra.mxu0 0
    %803 = vmatprep.subr.bf16.mxu0 0
    %804 = vmatpush1.bf16.msra.mxu0 0
    %805 = vmatprep.subr.bf16.mxu0 0
    %806 = vmatpush1.bf16.msra.mxu0 0
    %807 = vmatprep.subr.bf16.mxu0 0
    %808 = vmatpush1.bf16.msra.mxu0 0
    %809 = vmatprep.mubr.bf16.mxu0 0
    %810 = vmatmul.mubr.bf16.gmra.mrb[0].mxu0 %v775
    %v811 = vpop.f32.mrb[0].mxu0
    %v812 = vadd.f32 0.0, %v811
    %v813 = vpop.f32.mrb[0].mxu0
    %v814 = vpop.f32.mrb[0].mxu0
    %v815 = vpop.f32.mrb[0].mxu0
    %816 = vdwg.mxu0
    %v817 = vadd.f32 %v769, %v812
    %s818 = smul.u32 4, 2
    %s819 = smul.addr %s818, 8
    %s820 = scalar_lea.vmem [#allocation4], %s819
    %v821 = vld [vmem:[%s820 + $0x8] sm:$0xff]
    %v822 = vpack.c.bf16 %v752, %v752
    %824 = vrot.lane.b32.xlu0 %v822, 32
    %v825 = vpop.permute.xlu0 %824
    %v827 = vsel %vm110, %v825, 0
    %829 = vmatprep.subr.bf16.mxu0 0
    %830 = vmatpush1.bf16.msra.mxu0 %v292
    %831 = vmatprep.subr.bf16.mxu0 0
    %832 = vmatpush1.bf16.msra.mxu0 %v293
    %833 = vmatprep.subr.bf16.mxu0 0
    %834 = vmatpush1.bf16.msra.mxu0 0
    %835 = vmatprep.subr.bf16.mxu0 0
    %836 = vmatpush1.bf16.msra.mxu0 0
    %837 = vmatprep.subr.bf16.mxu0 0
    %838 = vmatpush1.bf16.msra.mxu0 0
    %839 = vmatprep.subr.bf16.mxu0 0
    %840 = vmatpush1.bf16.msra.mxu0 0
    %841 = vmatprep.subr.bf16.mxu0 0
    %842 = vmatpush1.bf16.msra.mxu0 0
    %843 = vmatprep.subr.bf16.mxu0 0
    %844 = vmatpush1.bf16.msra.mxu0 0
    %845 = vmatprep.subr.bf16.mxu0 0
    %846 = vmatpush1.bf16.msra.mxu0 0
    %847 = vmatprep.subr.bf16.mxu0 0
    %848 = vmatpush1.bf16.msra.mxu0 0
    %849 = vmatprep.subr.bf16.mxu0 0
    %850 = vmatpush1.bf16.msra.mxu0 0
    %851 = vmatprep.subr.bf16.mxu0 0
    %852 = vmatpush1.bf16.msra.mxu0 0
    %853 = vmatprep.subr.bf16.mxu0 0
    %854 = vmatpush1.bf16.msra.mxu0 0
    %855 = vmatprep.subr.bf16.mxu0 0
    %856 = vmatpush1.bf16.msra.mxu0 0
    %857 = vmatprep.subr.bf16.mxu0 0
    %858 = vmatpush1.bf16.msra.mxu0 0
    %859 = vmatprep.subr.bf16.mxu0 0
    %860 = vmatpush1.bf16.msra.mxu0 0
    %861 = vmatprep.mubr.bf16.mxu0 0
    %862 = vmatmul.mubr.bf16.gmra.mrb[0].mxu0 %v827
    %v863 = vpop.f32.mrb[0].mxu0
    %v864 = vadd.f32 0.0, %v863
    %v865 = vpop.f32.mrb[0].mxu0
    %v866 = vpop.f32.mrb[0].mxu0
    %v867 = vpop.f32.mrb[0].mxu0
    %868 = vdwg.mxu0
    %v869 = vadd.f32 %v821, %v864
    %s870 = scalar_lea.vmem %s1, 24
    %v871 = vld [vmem:[%s870] sm:$0xff]
    %v872 = vmul.f32 %v817, %v60
    %v873 = vtanh.pop %v872
    %v874 = vmul.f32 %v873, %v60
    %v875 = vadd.f32 %v874, %v61
    %v876 = vmul.f32 %v875, %v722
    %878 = vrot.lane.b32.xlu0 %v875, 64
    %v879 = vpop.permute.xlu0 %878
    %v881 = vmul.f32 %v875, %v879
    %883 = vrot.lane.b32.xlu0 %v881, 32
    %v884 = vpop.permute.xlu0 %883
    %v886 = vadd.f32 %v876, %v884
    %v887 = vtanh.pop %v886
    %889 = vrot.lane.b32.xlu0 %v887, 64
    %v890 = vpop.permute.xlu0 %889
    %v892 = vmul.f32 %v875, %v890
    %vm893 = vcmp.gt.f32.partialorder %v871, 0.0
    %v894 = vsel %vm893, 1, 0
    %895 = vset.pattern.permute.xlu0 0
    %896 = vperm.xlu0 %895, %v894
    %v897 = vpop.permute.xlu0 %896
    %vm898 = vcmp.eq.s32.totalorder %v897, 1
    %v899 = vsel %vm898, %v892, %v721
    %v900 = vsel %vm898, %v886, %v722
    %s901 = scalar_lea.vmem %s1, 32
    %v902 = vld [vmem:[%s901] sm:$0xff]
    %v903 = vmul.f32 %v869, %v60
    %v904 = vtanh.pop %v903
    %v905 = vmul.f32 %v904, %v60
    %v906 = vadd.f32 %v905, %v61
    %v907 = vmul.f32 %v906, %v753
    %909 = vrot.lane.b32.xlu0 %v906, 64
    %v910 = vpop.permute.xlu0 %909
    %v912 = vmul.f32 %v906, %v910
    %914 = vrot.lane.b32.xlu0 %v912, 32
    %v915 = vpop.permute.xlu0 %914
    %v917 = vadd.f32 %v907, %v915
    %v918 = vtanh.pop %v917
    %920 = vrot.lane.b32.xlu0 %v918, 64
    %v921 = vpop.permute.xlu0 %920
    %v923 = vmul.f32 %v906, %v921
    %vm924 = vcmp.gt.f32.partialorder %v902, 0.0
    %v925 = vsel %vm924, 1, 0
    %926 = vset.pattern.permute.xlu0 0
    %927 = vperm.xlu0 %926, %v925
    %v928 = vpop.permute.xlu0 %927
    %vm929 = vcmp.eq.s32.totalorder %v928, 1
    %v930 = vsel %vm929, %v923, %v752
    %v931 = vsel %vm929, %v917, %v753
    %933 = vrot.lane.b32.xlu0 %v899, 32
    %v934 = vpop.permute.xlu0 %933
    %s936 = scalar_lea.vmem [#allocation2], 24
    %937 = vst.msk [vmem:[%s936] sm:$0xff] %vm110, %v934
    %939 = vrot.lane.b32.xlu0 %v930, 64
    %v940 = vpop.permute.xlu0 %939
    %s942 = scalar_lea.vmem [#allocation2], 32
    %943 = vst.msk [vmem:[%s942] sm:$0xff] %vm408, %v940
    %v944 = vld [vmem:[%s820] sm:$0xff]
    %v945 = vpack.c.bf16 %v899, %v899
    %947 = vrot.lane.b32.xlu0 %v945, 32
    %v948 = vpop.permute.xlu0 %947
    %v950 = vsel %vm110, %v948, 0
    %952 = vmatprep.subr.bf16.mxu0 0
    %953 = vmatpush1.bf16.msra.mxu0 %v232
    %954 = vmatprep.subr.bf16.mxu0 0
    %955 = vmatpush1.bf16.msra.mxu0 %v233
    %956 = vmatprep.subr.bf16.mxu0 0
    %957 = vmatpush1.bf16.msra.mxu0 0
    %958 = vmatprep.subr.bf16.mxu0 0
    %959 = vmatpush1.bf16.msra.mxu0 0
    %960 = vmatprep.subr.bf16.mxu0 0
    %961 = vmatpush1.bf16.msra.mxu0 0
    %962 = vmatprep.subr.bf16.mxu0 0
    %963 = vmatpush1.bf16.msra.mxu0 0
    %964 = vmatprep.subr.bf16.mxu0 0
    %965 = vmatpush1.bf16.msra.mxu0 0
    %966 = vmatprep.subr.bf16.mxu0 0
    %967 = vmatpush1.bf16.msra.mxu0 0
    %968 = vmatprep.subr.bf16.mxu0 0
    %969 = vmatpush1.bf16.msra.mxu0 0
    %970 = vmatprep.subr.bf16.mxu0 0
    %971 = vmatpush1.bf16.msra.mxu0 0
    %972 = vmatprep.subr.bf16.mxu0 0
    %973 = vmatpush1.bf16.msra.mxu0 0
    %974 = vmatprep.subr.bf16.mxu0 0
    %975 = vmatpush1.bf16.msra.mxu0 0
    %976 = vmatprep.subr.bf16.mxu0 0
    %977 = vmatpush1.bf16.msra.mxu0 0
    %978 = vmatprep.subr.bf16.mxu0 0
    %979 = vmatpush1.bf16.msra.mxu0 0
    %980 = vmatprep.subr.bf16.mxu0 0
    %981 = vmatpush1.bf16.msra.mxu0 0
    %982 = vmatprep.subr.bf16.mxu0 0
    %983 = vmatpush1.bf16.msra.mxu0 0
    %984 = vmatprep.mubr.bf16.mxu0 0
    %985 = vmatmul.mubr.bf16.gmra.mrb[0].mxu0 %v950
    %v986 = vpop.f32.mrb[0].mxu0
    %v987 = vadd.f32 0.0, %v986
    %v988 = vpop.f32.mrb[0].mxu0
    %v989 = vpop.f32.mrb[0].mxu0
    %v990 = vpop.f32.mrb[0].mxu0
    %991 = vdwg.mxu0
    %v992 = vadd.f32 %v944, %v987
    %v993 = vld [vmem:[%s768 + $0x8] sm:$0xff]
    %v994 = vpack.c.bf16 %v930, %v930
    %996 = vrot.lane.b32.xlu0 %v994, 32
    %v997 = vpop.permute.xlu0 %996
    %v999 = vsel %vm110, %v997, 0
    %1001 = vmatprep.subr.bf16.mxu0 0
    %1002 = vmatpush1.bf16.msra.mxu0 %v292
    %1003 = vmatprep.subr.bf16.mxu0 0
    %1004 = vmatpush1.bf16.msra.mxu0 %v293
    %1005 = vmatprep.subr.bf16.mxu0 0
    %1006 = vmatpush1.bf16.msra.mxu0 0
    %1007 = vmatprep.subr.bf16.mxu0 0
    %1008 = vmatpush1.bf16.msra.mxu0 0
    %1009 = vmatprep.subr.bf16.mxu0 0
    %1010 = vmatpush1.bf16.msra.mxu0 0
    %1011 = vmatprep.subr.bf16.mxu0 0
    %1012 = vmatpush1.bf16.msra.mxu0 0
    %1013 = vmatprep.subr.bf16.mxu0 0
    %1014 = vmatpush1.bf16.msra.mxu0 0
    %1015 = vmatprep.subr.bf16.mxu0 0
    %1016 = vmatpush1.bf16.msra.mxu0 0
    %1017 = vmatprep.subr.bf16.mxu0 0
    %1018 = vmatpush1.bf16.msra.mxu0 0
    %1019 = vmatprep.subr.bf16.mxu0 0
    %1020 = vmatpush1.bf16.msra.mxu0 0
    %1021 = vmatprep.subr.bf16.mxu0 0
    %1022 = vmatpush1.bf16.msra.mxu0 0
    %1023 = vmatprep.subr.bf16.mxu0 0
    %1024 = vmatpush1.bf16.msra.mxu0 0
    %1025 = vmatprep.subr.bf16.mxu0 0
    %1026 = vmatpush1.bf16.msra.mxu0 0
    %1027 = vmatprep.subr.bf16.mxu0 0
    %1028 = vmatpush1.bf16.msra.mxu0 0
    %1029 = vmatprep.subr.bf16.mxu0 0
    %1030 = vmatpush1.bf16.msra.mxu0 0
    %1031 = vmatprep.subr.bf16.mxu0 0
    %1032 = vmatpush1.bf16.msra.mxu0 0
    %1033 = vmatprep.mubr.bf16.mxu0 0
    %1034 = vmatmul.mubr.bf16.gmra.mrb[0].mxu0 %v999
    %v1035 = vpop.f32.mrb[0].mxu0
    %v1036 = vadd.f32 0.0, %v1035
    %v1037 = vpop.f32.mrb[0].mxu0
    %v1038 = vpop.f32.mrb[0].mxu0
    %v1039 = vpop.f32.mrb[0].mxu0
    %1040 = vdwg.mxu0
    %v1041 = vadd.f32 %v993, %v1036
    %v1042 = vld [vmem:[%s901] sm:$0xff]
    %v1043 = vmul.f32 %v992, %v60
    %v1044 = vtanh.pop %v1043
    %v1045 = vmul.f32 %v1044, %v60
    %v1046 = vadd.f32 %v1045, %v61
    %v1047 = vmul.f32 %v1046, %v900
    %1049 = vrot.lane.b32.xlu0 %v1046, 64
    %v1050 = vpop.permute.xlu0 %1049
    %v1052 = vmul.f32 %v1046, %v1050
    %1054 = vrot.lane.b32.xlu0 %v1052, 32
    %v1055 = vpop.permute.xlu0 %1054
    %v1057 = vadd.f32 %v1047, %v1055
    %v1058 = vtanh.pop %v1057
    %1060 = vrot.lane.b32.xlu0 %v1058, 64
    %v1061 = vpop.permute.xlu0 %1060
    %v1063 = vmul.f32 %v1046, %v1061
    %vm1064 = vcmp.gt.f32.partialorder %v1042, 0.0
    %v1065 = vsel %vm1064, 1, 0
    %1066 = vset.pattern.permute.xlu0 0
    %1067 = vperm.xlu0 %1066, %v1065
    %v1068 = vpop.permute.xlu0 %1067
    %vm1069 = vcmp.eq.s32.totalorder %v1068, 1
    %v1070 = vsel %vm1069, %v1063, %v899
    %v1071 = vsel %vm1069, %v1057, %v900
    %v1072 = vld [vmem:[%s870] sm:$0xff]
    %v1073 = vmul.f32 %v1041, %v60
    %v1074 = vtanh.pop %v1073
    %v1075 = vmul.f32 %v1074, %v60
    %v1076 = vadd.f32 %v1075, %v61
    %v1077 = vmul.f32 %v1076, %v931
    %1079 = vrot.lane.b32.xlu0 %v1076, 64
    %v1080 = vpop.permute.xlu0 %1079
    %v1082 = vmul.f32 %v1076, %v1080
    %1084 = vrot.lane.b32.xlu0 %v1082, 32
    %v1085 = vpop.permute.xlu0 %1084
    %v1087 = vadd.f32 %v1077, %v1085
    %v1088 = vtanh.pop %v1087
    %1090 = vrot.lane.b32.xlu0 %v1088, 64
    %v1091 = vpop.permute.xlu0 %1090
    %v1093 = vmul.f32 %v1076, %v1091
    %vm1094 = vcmp.gt.f32.partialorder %v1072, 0.0
    %v1095 = vsel %vm1094, 1, 0
    %1096 = vset.pattern.permute.xlu0 0
    %1097 = vperm.xlu0 %1096, %v1095
    %v1098 = vpop.permute.xlu0 %1097
    %vm1099 = vcmp.eq.s32.totalorder %v1098, 1
    %v1100 = vsel %vm1099, %v1093, %v930
    %v1101 = vsel %vm1099, %v1087, %v931
    %1103 = vrot.lane.b32.xlu0 %v1070, 32
    %v1104 = vpop.permute.xlu0 %1103
    %1106 = vst.msk [vmem:[%s942] sm:$0xff] %vm110, %v1104
    %1108 = vrot.lane.b32.xlu0 %v1100, 64
    %v1109 = vpop.permute.xlu0 %1108
    %1111 = vst.msk [vmem:[%s936] sm:$0xff] %vm408, %v1109
    %v1112 = vld [vmem:[%s642] sm:$0xff]
    %v1113 = vpack.c.bf16 %v1070, %v1070
    %1115 = vrot.lane.b32.xlu0 %v1113, 32
    %v1116 = vpop.permute.xlu0 %1115
    %v1118 = vsel %vm110, %v1116, 0
    %1120 = vmatprep.subr.bf16.mxu0 0
    %1121 = vmatpush1.bf16.msra.mxu0 %v232
    %1122 = vmatprep.subr.bf16.mxu0 0
    %1123 = vmatpush1.bf16.msra.mxu0 %v233
    %1124 = vmatprep.subr.bf16.mxu0 0
    %1125 = vmatpush1.bf16.msra.mxu0 0
    %1126 = vmatprep.subr.bf16.mxu0 0
    %1127 = vmatpush1.bf16.msra.mxu0 0
    %1128 = vmatprep.subr.bf16.mxu0 0
    %1129 = vmatpush1.bf16.msra.mxu0 0
    %1130 = vmatprep.subr.bf16.mxu0 0
    %1131 = vmatpush1.bf16.msra.mxu0 0
    %1132 = vmatprep.subr.bf16.mxu0 0
    %1133 = vmatpush1.bf16.msra.mxu0 0
    %1134 = vmatprep.subr.bf16.mxu0 0
    %1135 = vmatpush1.bf16.msra.mxu0 0
    %1136 = vmatprep.subr.bf16.mxu0 0
    %1137 = vmatpush1.bf16.msra.mxu0 0
    %1138 = vmatprep.subr.bf16.mxu0 0
    %1139 = vmatpush1.bf16.msra.mxu0 0
    %1140 = vmatprep.subr.bf16.mxu0 0
    %1141 = vmatpush1.bf16.msra.mxu0 0
    %1142 = vmatprep.subr.bf16.mxu0 0
    %1143 = vmatpush1.bf16.msra.mxu0 0
    %1144 = vmatprep.subr.bf16.mxu0 0
    %1145 = vmatpush1.bf16.msra.mxu0 0
    %1146 = vmatprep.subr.bf16.mxu0 0
    %1147 = vmatpush1.bf16.msra.mxu0 0
    %1148 = vmatprep.subr.bf16.mxu0 0
    %1149 = vmatpush1.bf16.msra.mxu0 0
    %1150 = vmatprep.subr.bf16.mxu0 0
    %1151 = vmatpush1.bf16.msra.mxu0 0
    %1152 = vmatprep.mubr.bf16.mxu0 0
    %1153 = vmatmul.mubr.bf16.gmra.mrb[0].mxu0 %v1118
    %v1154 = vpop.f32.mrb[0].mxu0
    %v1155 = vadd.f32 0.0, %v1154
    %v1156 = vpop.f32.mrb[0].mxu0
    %v1157 = vpop.f32.mrb[0].mxu0
    %v1158 = vpop.f32.mrb[0].mxu0
    %1159 = vdwg.mxu0
    %v1160 = vadd.f32 %v1112, %v1155
    %v1161 = vld [vmem:[%s590 + $0x8] sm:$0xff]
    %v1162 = vpack.c.bf16 %v1100, %v1100
    %1164 = vrot.lane.b32.xlu0 %v1162, 32
    %v1165 = vpop.permute.xlu0 %1164
    %v1167 = vsel %vm110, %v1165, 0
    %1169 = vmatprep.subr.bf16.mxu0 0
    %1170 = vmatpush1.bf16.msra.mxu0 %v292
    %1171 = vmatprep.subr.bf16.mxu0 0
    %1172 = vmatpush1.bf16.msra.mxu0 %v293
    %1173 = vmatprep.subr.bf16.mxu0 0
    %1174 = vmatpush1.bf16.msra.mxu0 0
    %1175 = vmatprep.subr.bf16.mxu0 0
    %1176 = vmatpush1.bf16.msra.mxu0 0
    %1177 = vmatprep.subr.bf16.mxu0 0
    %1178 = vmatpush1.bf16.msra.mxu0 0
    %1179 = vmatprep.subr.bf16.mxu0 0
    %1180 = vmatpush1.bf16.msra.mxu0 0
    %1181 = vmatprep.subr.bf16.mxu0 0
    %1182 = vmatpush1.bf16.msra.mxu0 0
    %1183 = vmatprep.subr.bf16.mxu0 0
    %1184 = vmatpush1.bf16.msra.mxu0 0
    %1185 = vmatprep.subr.bf16.mxu0 0
    %1186 = vmatpush1.bf16.msra.mxu0 0
    %1187 = vmatprep.subr.bf16.mxu0 0
    %1188 = vmatpush1.bf16.msra.mxu0 0
    %1189 = vmatprep.subr.bf16.mxu0 0
    %1190 = vmatpush1.bf16.msra.mxu0 0
    %1191 = vmatprep.subr.bf16.mxu0 0
    %1192 = vmatpush1.bf16.msra.mxu0 0
    %1193 = vmatprep.subr.bf16.mxu0 0
    %1194 = vmatpush1.bf16.msra.mxu0 0
    %1195 = vmatprep.subr.bf16.mxu0 0
    %1196 = vmatpush1.bf16.msra.mxu0 0
    %1197 = vmatprep.subr.bf16.mxu0 0
    %1198 = vmatpush1.bf16.msra.mxu0 0
    %1199 = vmatprep.subr.bf16.mxu0 0
    %1200 = vmatpush1.bf16.msra.mxu0 0
    %1201 = vmatprep.mubr.bf16.mxu0 0
    %1202 = vmatmul.mubr.bf16.gmra.mrb[0].mxu0 %v1167
    %v1203 = vpop.f32.mrb[0].mxu0
    %v1204 = vadd.f32 0.0, %v1203
    %v1205 = vpop.f32.mrb[0].mxu0
    %v1206 = vpop.f32.mrb[0].mxu0
    %v1207 = vpop.f32.mrb[0].mxu0
    %1208 = vdwg.mxu0
    %v1209 = vadd.f32 %v1161, %v1204
    %v1210 = vld [vmem:[%s723] sm:$0xff]
    %v1211 = vmul.f32 %v1160, %v60
    %v1212 = vtanh.pop %v1211
    %v1213 = vmul.f32 %v1212, %v60
    %v1214 = vadd.f32 %v1213, %v61
    %v1215 = vmul.f32 %v1214, %v1071
    %1217 = vrot.lane.b32.xlu0 %v1214, 64
    %v1218 = vpop.permute.xlu0 %1217
    %v1220 = vmul.f32 %v1214, %v1218
    %1222 = vrot.lane.b32.xlu0 %v1220, 32
    %v1223 = vpop.permute.xlu0 %1222
    %v1225 = vadd.f32 %v1215, %v1223
    %v1226 = vtanh.pop %v1225
    %1228 = vrot.lane.b32.xlu0 %v1226, 64
    %v1229 = vpop.permute.xlu0 %1228
    %v1231 = vmul.f32 %v1214, %v1229
    %vm1232 = vcmp.gt.f32.partialorder %v1210, 0.0
    %v1233 = vsel %vm1232, 1, 0
    %1234 = vset.pattern.permute.xlu0 0
    %1235 = vperm.xlu0 %1234, %v1233
    %v1236 = vpop.permute.xlu0 %1235
    %vm1237 = vcmp.eq.s32.totalorder %v1236, 1
    %v1238 = vsel %vm1237, %v1231, %v1070
    %v1239 = vsel %vm1237, %v1225, %v1071
    %v1240 = vld [vmem:[%s692] sm:$0xff]
    %v1241 = vmul.f32 %v1209, %v60
    %v1242 = vtanh.pop %v1241
    %v1243 = vmul.f32 %v1242, %v60
    %v1244 = vadd.f32 %v1243, %v61
    %v1245 = vmul.f32 %v1244, %v1101
    %1247 = vrot.lane.b32.xlu0 %v1244, 64
    %v1248 = vpop.permute.xlu0 %1247
    %v1250 = vmul.f32 %v1244, %v1248
    %1252 = vrot.lane.b32.xlu0 %v1250, 32
    %v1253 = vpop.permute.xlu0 %1252
    %v1255 = vadd.f32 %v1245, %v1253
    %v1256 = vtanh.pop %v1255
    %1258 = vrot.lane.b32.xlu0 %v1256, 64
    %v1259 = vpop.permute.xlu0 %1258
    %v1261 = vmul.f32 %v1244, %v1259
    %vm1262 = vcmp.gt.f32.partialorder %v1240, 0.0
    %v1263 = vsel %vm1262, 1, 0
    %1264 = vset.pattern.permute.xlu0 0
    %1265 = vperm.xlu0 %1264, %v1263
    %v1266 = vpop.permute.xlu0 %1265
    %vm1267 = vcmp.eq.s32.totalorder %v1266, 1
    %v1268 = vsel %vm1267, %v1261, %v1100
    %v1269 = vsel %vm1267, %v1255, %v1101
    %1271 = vrot.lane.b32.xlu0 %v1238, 32
    %v1272 = vpop.permute.xlu0 %1271
    %1274 = vst.msk [vmem:[%s764] sm:$0xff] %vm110, %v1272
    %1276 = vrot.lane.b32.xlu0 %v1268, 64
    %v1277 = vpop.permute.xlu0 %1276
    %1279 = vst.msk [vmem:[%s758] sm:$0xff] %vm408, %v1277
    %v1280 = vld [vmem:[%s464] sm:$0xff]
    %v1281 = vpack.c.bf16 %v1238, %v1238
    %1283 = vrot.lane.b32.xlu0 %v1281, 32
    %v1284 = vpop.permute.xlu0 %1283
    %v1286 = vsel %vm110, %v1284, 0
    %1288 = vmatprep.subr.bf16.mxu0 0
    %1289 = vmatpush1.bf16.msra.mxu0 %v232
    %1290 = vmatprep.subr.bf16.mxu0 0
    %1291 = vmatpush1.bf16.msra.mxu0 %v233
    %1292 = vmatprep.subr.bf16.mxu0 0
    %1293 = vmatpush1.bf16.msra.mxu0 0
    %1294 = vmatprep.subr.bf16.mxu0 0
    %1295 = vmatpush1.bf16.msra.mxu0 0
    %1296 = vmatprep.subr.bf16.mxu0 0
    %1297 = vmatpush1.bf16.msra.mxu0 0
    %1298 = vmatprep.subr.bf16.mxu0 0
    %1299 = vmatpush1.bf16.msra.mxu0 0
    %1300 = vmatprep.subr.bf16.mxu0 0
    %1301 = vmatpush1.bf16.msra.mxu0 0
    %1302 = vmatprep.subr.bf16.mxu0 0
    %1303 = vmatpush1.bf16.msra.mxu0 0
    %1304 = vmatprep.subr.bf16.mxu0 0
    %1305 = vmatpush1.bf16.msra.mxu0 0
    %1306 = vmatprep.subr.bf16.mxu0 0
    %1307 = vmatpush1.bf16.msra.mxu0 0
    %1308 = vmatprep.subr.bf16.mxu0 0
    %1309 = vmatpush1.bf16.msra.mxu0 0
    %1310 = vmatprep.subr.bf16.mxu0 0
    %1311 = vmatpush1.bf16.msra.mxu0 0
    %1312 = vmatprep.subr.bf16.mxu0 0
    %1313 = vmatpush1.bf16.msra.mxu0 0
    %1314 = vmatprep.subr.bf16.mxu0 0
    %1315 = vmatpush1.bf16.msra.mxu0 0
    %1316 = vmatprep.subr.bf16.mxu0 0
    %1317 = vmatpush1.bf16.msra.mxu0 0
    %1318 = vmatprep.subr.bf16.mxu0 0
    %1319 = vmatpush1.bf16.msra.mxu0 0
    %1320 = vmatprep.mubr.bf16.mxu0 0
    %1321 = vmatmul.mubr.bf16.gmra.mrb[0].mxu0 %v1286
    %v1322 = vpop.f32.mrb[0].mxu0
    %v1323 = vadd.f32 0.0, %v1322
    %v1324 = vpop.f32.mrb[0].mxu0
    %v1325 = vpop.f32.mrb[0].mxu0
    %v1326 = vpop.f32.mrb[0].mxu0
    %1327 = vdwg.mxu0
    %v1328 = vadd.f32 %v1280, %v1323
    %v1329 = vld [vmem:[%s412 + $0x8] sm:$0xff]
    %v1330 = vpack.c.bf16 %v1268, %v1268
    %1332 = vrot.lane.b32.xlu0 %v1330, 32
    %v1333 = vpop.permute.xlu0 %1332
    %v1335 = vsel %vm110, %v1333, 0
    %1337 = vmatprep.subr.bf16.mxu0 0
    %1338 = vmatpush1.bf16.msra.mxu0 %v292
    %1339 = vmatprep.subr.bf16.mxu0 0
    %1340 = vmatpush1.bf16.msra.mxu0 %v293
    %1341 = vmatprep.subr.bf16.mxu0 0
    %1342 = vmatpush1.bf16.msra.mxu0 0
    %1343 = vmatprep.subr.bf16.mxu0 0
    %1344 = vmatpush1.bf16.msra.mxu0 0
    %1345 = vmatprep.subr.bf16.mxu0 0
    %1346 = vmatpush1.bf16.msra.mxu0 0
    %1347 = vmatprep.subr.bf16.mxu0 0
    %1348 = vmatpush1.bf16.msra.mxu0 0
    %1349 = vmatprep.subr.bf16.mxu0 0
    %1350 = vmatpush1.bf16.msra.mxu0 0
    %1351 = vmatprep.subr.bf16.mxu0 0
    %1352 = vmatpush1.bf16.msra.mxu0 0
    %1353 = vmatprep.subr.bf16.mxu0 0
    %1354 = vmatpush1.bf16.msra.mxu0 0
    %1355 = vmatprep.subr.bf16.mxu0 0
    %1356 = vmatpush1.bf16.msra.mxu0 0
    %1357 = vmatprep.subr.bf16.mxu0 0
    %1358 = vmatpush1.bf16.msra.mxu0 0
    %1359 = vmatprep.subr.bf16.mxu0 0
    %1360 = vmatpush1.bf16.msra.mxu0 0
    %1361 = vmatprep.subr.bf16.mxu0 0
    %1362 = vmatpush1.bf16.msra.mxu0 0
    %1363 = vmatprep.subr.bf16.mxu0 0
    %1364 = vmatpush1.bf16.msra.mxu0 0
    %1365 = vmatprep.subr.bf16.mxu0 0
    %1366 = vmatpush1.bf16.msra.mxu0 0
    %1367 = vmatprep.subr.bf16.mxu0 0
    %1368 = vmatpush1.bf16.msra.mxu0 0
    %1369 = vmatprep.mubr.bf16.mxu0 0
    %1370 = vmatmul.mubr.bf16.gmra.mrb[0].mxu0 %v1335
    %v1371 = vpop.f32.mrb[0].mxu0
    %v1372 = vadd.f32 0.0, %v1371
    %v1373 = vpop.f32.mrb[0].mxu0
    %v1374 = vpop.f32.mrb[0].mxu0
    %v1375 = vpop.f32.mrb[0].mxu0
    %1376 = vdwg.mxu0
    %v1377 = vadd.f32 %v1329, %v1372
    %v1378 = vld [vmem:[%s545] sm:$0xff]
    %v1379 = vmul.f32 %v1328, %v60
    %v1380 = vtanh.pop %v1379
    %v1381 = vmul.f32 %v1380, %v60
    %v1382 = vadd.f32 %v1381, %v61
    %v1383 = vmul.f32 %v1382, %v1239
    %1385 = vrot.lane.b32.xlu0 %v1382, 64
    %v1386 = vpop.permute.xlu0 %1385
    %v1388 = vmul.f32 %v1382, %v1386
    %1390 = vrot.lane.b32.xlu0 %v1388, 32
    %v1391 = vpop.permute.xlu0 %1390
    %v1393 = vadd.f32 %v1383, %v1391
    %v1394 = vtanh.pop %v1393
    %1396 = vrot.lane.b32.xlu0 %v1394, 64
    %v1397 = vpop.permute.xlu0 %1396
    %v1399 = vmul.f32 %v1382, %v1397
    %vm1400 = vcmp.gt.f32.partialorder %v1378, 0.0
    %v1401 = vsel %vm1400, 1, 0
    %1402 = vset.pattern.permute.xlu0 0
    %1403 = vperm.xlu0 %1402, %v1401
    %v1404 = vpop.permute.xlu0 %1403
    %vm1405 = vcmp.eq.s32.totalorder %v1404, 1
    %v1406 = vsel %vm1405, %v1399, %v1238
    %v1407 = vsel %vm1405, %v1393, %v1239
    %v1408 = vld [vmem:[%s514] sm:$0xff]
    %v1409 = vmul.f32 %v1377, %v60
    %v1410 = vtanh.pop %v1409
    %v1411 = vmul.f32 %v1410, %v60
    %v1412 = vadd.f32 %v1411, %v61
    %v1413 = vmul.f32 %v1412, %v1269
    %1415 = vrot.lane.b32.xlu0 %v1412, 64
    %v1416 = vpop.permute.xlu0 %1415
    %v1418 = vmul.f32 %v1412, %v1416
    %1420 = vrot.lane.b32.xlu0 %v1418, 32
    %v1421 = vpop.permute.xlu0 %1420
    %v1423 = vadd.f32 %v1413, %v1421
    %v1424 = vtanh.pop %v1423
    %1426 = vrot.lane.b32.xlu0 %v1424, 64
    %v1427 = vpop.permute.xlu0 %1426
    %v1429 = vmul.f32 %v1412, %v1427
    %vm1430 = vcmp.gt.f32.partialorder %v1408, 0.0
    %v1431 = vsel %vm1430, 1, 0
    %1432 = vset.pattern.permute.xlu0 0
    %1433 = vperm.xlu0 %1432, %v1431
    %v1434 = vpop.permute.xlu0 %1433
    %vm1435 = vcmp.eq.s32.totalorder %v1434, 1
    %v1436 = vsel %vm1435, %v1429, %v1268
    %v1437 = vsel %vm1435, %v1423, %v1269
    %1439 = vrot.lane.b32.xlu0 %v1406, 32
    %v1440 = vpop.permute.xlu0 %1439
    %1442 = vst.msk [vmem:[%s586] sm:$0xff] %vm110, %v1440
    %1444 = vrot.lane.b32.xlu0 %v1436, 64
    %v1445 = vpop.permute.xlu0 %1444
    %1447 = vst.msk [vmem:[%s580] sm:$0xff] %vm408, %v1445
    %v1448 = vld [vmem:[%s282] sm:$0xff]
    %v1449 = vpack.c.bf16 %v1406, %v1406
    %1451 = vrot.lane.b32.xlu0 %v1449, 32
    %v1452 = vpop.permute.xlu0 %1451
    %v1454 = vsel %vm110, %v1452, 0
    %1456 = vmatprep.subr.bf16.mxu0 0
    %1457 = vmatpush1.bf16.msra.mxu0 %v232
    %1458 = vmatprep.subr.bf16.mxu0 0
    %1459 = vmatpush1.bf16.msra.mxu0 %v233
    %1460 = vmatprep.subr.bf16.mxu0 0
    %1461 = vmatpush1.bf16.msra.mxu0 0
    %1462 = vmatprep.subr.bf16.mxu0 0
    %1463 = vmatpush1.bf16.msra.mxu0 0
    %1464 = vmatprep.subr.bf16.mxu0 0
    %1465 = vmatpush1.bf16.msra.mxu0 0
    %1466 = vmatprep.subr.bf16.mxu0 0
    %1467 = vmatpush1.bf16.msra.mxu0 0
    %1468 = vmatprep.subr.bf16.mxu0 0
    %1469 = vmatpush1.bf16.msra.mxu0 0
    %1470 = vmatprep.subr.bf16.mxu0 0
    %1471 = vmatpush1.bf16.msra.mxu0 0
    %1472 = vmatprep.subr.bf16.mxu0 0
    %1473 = vmatpush1.bf16.msra.mxu0 0
    %1474 = vmatprep.subr.bf16.mxu0 0
    %1475 = vmatpush1.bf16.msra.mxu0 0
    %1476 = vmatprep.subr.bf16.mxu0 0
    %1477 = vmatpush1.bf16.msra.mxu0 0
    %1478 = vmatprep.subr.bf16.mxu0 0
    %1479 = vmatpush1.bf16.msra.mxu0 0
    %1480 = vmatprep.subr.bf16.mxu0 0
    %1481 = vmatpush1.bf16.msra.mxu0 0
    %1482 = vmatprep.subr.bf16.mxu0 0
    %1483 = vmatpush1.bf16.msra.mxu0 0
    %1484 = vmatprep.subr.bf16.mxu0 0
    %1485 = vmatpush1.bf16.msra.mxu0 0
    %1486 = vmatprep.subr.bf16.mxu0 0
    %1487 = vmatpush1.bf16.msra.mxu0 0
    %1488 = vmatprep.mubr.bf16.mxu0 0
    %1489 = vmatmul.mubr.bf16.gmra.mrb[0].mxu0 %v1454
    %v1490 = vpop.f32.mrb[0].mxu0
    %v1491 = vadd.f32 0.0, %v1490
    %v1492 = vpop.f32.mrb[0].mxu0
    %v1493 = vpop.f32.mrb[0].mxu0
    %v1494 = vpop.f32.mrb[0].mxu0
    %1495 = vdwg.mxu0
    %v1496 = vadd.f32 %v1448, %v1491
    %v1497 = vld [vmem:[%s222 + $0x8] sm:$0xff]
    %v1498 = vpack.c.bf16 %v1436, %v1436
    %1500 = vrot.lane.b32.xlu0 %v1498, 32
    %v1501 = vpop.permute.xlu0 %1500
    %v1503 = vsel %vm110, %v1501, 0
    %1505 = vmatprep.subr.bf16.mxu0 0
    %1506 = vmatpush1.bf16.msra.mxu0 %v292
    %1507 = vmatprep.subr.bf16.mxu0 0
    %1508 = vmatpush1.bf16.msra.mxu0 %v293
    %1509 = vmatprep.subr.bf16.mxu0 0
    %1510 = vmatpush1.bf16.msra.mxu0 0
    %1511 = vmatprep.subr.bf16.mxu0 0
    %1512 = vmatpush1.bf16.msra.mxu0 0
    %1513 = vmatprep.subr.bf16.mxu0 0
    %1514 = vmatpush1.bf16.msra.mxu0 0
    %1515 = vmatprep.subr.bf16.mxu0 0
    %1516 = vmatpush1.bf16.msra.mxu0 0
    %1517 = vmatprep.subr.bf16.mxu0 0
    %1518 = vmatpush1.bf16.msra.mxu0 0
    %1519 = vmatprep.subr.bf16.mxu0 0
    %1520 = vmatpush1.bf16.msra.mxu0 0
    %1521 = vmatprep.subr.bf16.mxu0 0
    %1522 = vmatpush1.bf16.msra.mxu0 0
    %1523 = vmatprep.subr.bf16.mxu0 0
    %1524 = vmatpush1.bf16.msra.mxu0 0
    %1525 = vmatprep.subr.bf16.mxu0 0
    %1526 = vmatpush1.bf16.msra.mxu0 0
    %1527 = vmatprep.subr.bf16.mxu0 0
    %1528 = vmatpush1.bf16.msra.mxu0 0
    %1529 = vmatprep.subr.bf16.mxu0 0
    %1530 = vmatpush1.bf16.msra.mxu0 0
    %1531 = vmatprep.subr.bf16.mxu0 0
    %1532 = vmatpush1.bf16.msra.mxu0 0
    %1533 = vmatprep.subr.bf16.mxu0 0
    %1534 = vmatpush1.bf16.msra.mxu0 0
    %1535 = vmatprep.subr.bf16.mxu0 0
    %1536 = vmatpush1.bf16.msra.mxu0 0
    %1537 = vmatprep.mubr.bf16.mxu0 0
    %1538 = vmatmul.mubr.bf16.gmra.mrb[0].mxu0 %v1503
    %v1539 = vpop.f32.mrb[0].mxu0
    %v1540 = vadd.f32 0.0, %v1539
    %v1541 = vpop.f32.mrb[0].mxu0
    %v1542 = vpop.f32.mrb[0].mxu0
    %v1543 = vpop.f32.mrb[0].mxu0
    %1544 = vdwg.mxu0
    %v1545 = vadd.f32 %v1497, %v1540
    %v1546 = vld [vmem:[%s367] sm:$0xff]
    %v1547 = vmul.f32 %v1496, %v60
    %v1548 = vtanh.pop %v1547
    %v1549 = vmul.f32 %v1548, %v60
    %v1550 = vadd.f32 %v1549, %v61
    %v1551 = vmul.f32 %v1550, %v1407
    %1553 = vrot.lane.b32.xlu0 %v1550, 64
    %v1554 = vpop.permute.xlu0 %1553
    %v1556 = vmul.f32 %v1550, %v1554
    %1558 = vrot.lane.b32.xlu0 %v1556, 32
    %v1559 = vpop.permute.xlu0 %1558
    %v1561 = vadd.f32 %v1551, %v1559
    %v1562 = vtanh.pop %v1561
    %1564 = vrot.lane.b32.xlu0 %v1562, 64
    %v1565 = vpop.permute.xlu0 %1564
    %v1567 = vmul.f32 %v1550, %v1565
    %vm1568 = vcmp.gt.f32.partialorder %v1546, 0.0
    %v1569 = vsel %vm1568, 1, 0
    %1570 = vset.pattern.permute.xlu0 0
    %1571 = vperm.xlu0 %1570, %v1569
    %v1572 = vpop.permute.xlu0 %1571
    %vm1573 = vcmp.eq.s32.totalorder %v1572, 1
    %v1574 = vsel %vm1573, %v1567, %v1406
    %v1575 = vld [vmem:[%s1] sm:$0xff]
    %v1576 = vmul.f32 %v1545, %v60
    %v1577 = vtanh.pop %v1576
    %v1578 = vmul.f32 %v1577, %v60
    %v1579 = vadd.f32 %v1578, %v61
    %v1580 = vmul.f32 %v1579, %v1437
    %1582 = vrot.lane.b32.xlu0 %v1579, 64
    %v1583 = vpop.permute.xlu0 %1582
    %v1585 = vmul.f32 %v1579, %v1583
    %1587 = vrot.lane.b32.xlu0 %v1585, 32
    %v1588 = vpop.permute.xlu0 %1587
    %v1590 = vadd.f32 %v1580, %v1588
    %v1591 = vtanh.pop %v1590
    %1593 = vrot.lane.b32.xlu0 %v1591, 64
    %v1594 = vpop.permute.xlu0 %1593
    %v1596 = vmul.f32 %v1579, %v1594
    %vm1597 = vcmp.gt.f32.partialorder %v1575, 0.0
    %v1598 = vsel %vm1597, 1, 0
    %1599 = vset.pattern.permute.xlu0 0
    %1600 = vperm.xlu0 %1599, %v1598
    %v1601 = vpop.permute.xlu0 %1600
    %vm1602 = vcmp.eq.s32.totalorder %v1601, 1
    %v1603 = vsel %vm1602, %v1596, %v1436
    %1605 = vrot.lane.b32.xlu0 %v1574, 32
    %v1606 = vpop.permute.xlu0 %1605
    %1608 = vst.msk [vmem:[%s407] sm:$0xff] %vm110, %v1606
    %1610 = vrot.lane.b32.xlu0 %v1603, 64
    %v1611 = vpop.permute.xlu0 %1610
    %1613 = vst.msk [vmem:[#allocation2] sm:$0xff] %vm408, %v1611
    %v1614 = vld [vmem:[#allocation2] sm:$0xff]
    %v1615 = vld [vmem:[#allocation2 + $0x8] sm:$0xff]
    %v1616 = vld [vmem:[#allocation2 + $0x10] sm:$0xff]
    %v1617 = vld [vmem:[#allocation2 + $0x18] sm:$0xff]
    %v1618 = vld [vmem:[#allocation2 + $0x20] sm:$0xff]
    %v1619 = vld [vmem:[#allocation2 + $0x28] sm:$0xff]
    %v1620 = vld [vmem:[#allocation2 + $0x30] sm:$0xff]
    %v1621 = vld [vmem:[#allocation2 + $0x38] sm:$0xff]
    %v1622 = vpack.c.bf16 %v1615, %v1614
    %v1623 = vpack.c.bf16 %v1617, %v1616
    %v1624 = vpack.c.bf16 %v1619, %v1618
    %v1625 = vpack.c.bf16 %v1621, %v1620
    %v1626 = vld [vmem:[%s6] sm:$0xff]
    %v1627 = vld [vmem:[%s6 + $0x8] sm:$0xff]
    %v1628 = vld [vmem:[%s6 + $0x10] sm:$0xff]
    %v1629 = vld [vmem:[%s6 + $0x18] sm:$0xff]
    %v1630 = vld [vmem:[%s6 + $0x20] sm:$0xff]
    %v1631 = vld [vmem:[%s6 + $0x28] sm:$0xff]
    %v1632 = vld [vmem:[%s6 + $0x30] sm:$0xff]
    %v1633 = vld [vmem:[%s6 + $0x38] sm:$0xff]
    %v1634 = vld [vmem:[%s7] sm:$0x3]
    %v1636 = vlaneseq
    %v1637 = vshrl.u32 %v1636, 7
    %v1638 = vsub.s32 0, %v1637
    %v1639 = vrot.slane %v1634, %v1638
    %v1640 = vlaneseq
    %v1641 = vshrl.u32 %v1640, 7
    %v1642 = vsub.s32 1, %v1641
    %v1643 = vrot.slane %v1634, %v1642
    %v1654 = vunpack.c.l.b16 %v1626
    %v1655 = vunpack.c.h.b16 %v1626
    %v1656 = vunpack.c.l.b16 %v1627
    %v1657 = vunpack.c.h.b16 %v1627
    %v1658 = vunpack.c.l.b16 %v1628
    %v1659 = vunpack.c.h.b16 %v1628
    %v1660 = vunpack.c.l.b16 %v1629
    %v1661 = vunpack.c.h.b16 %v1629
    %v1662 = vunpack.c.l.b16 %v1630
    %v1663 = vunpack.c.h.b16 %v1630
    %v1664 = vunpack.c.l.b16 %v1631
    %v1665 = vunpack.c.h.b16 %v1631
    %v1666 = vunpack.c.l.b16 %v1632
    %v1667 = vunpack.c.h.b16 %v1632
    %v1668 = vunpack.c.l.b16 %v1633
    %v1669 = vunpack.c.h.b16 %v1633
    %v1670 = vpack.c.b16 %v1656, %v1654
    %v1671 = vpack.c.b16 %v1657, %v1655
    %v1672 = vpack.c.b16 %v1660, %v1658
    %v1673 = vpack.c.b16 %v1661, %v1659
    %v1674 = vpack.c.b16 %v1664, %v1662
    %v1675 = vpack.c.b16 %v1665, %v1663
    %v1676 = vpack.c.b16 %v1668, %v1666
    %v1677 = vpack.c.b16 %v1669, %v1667
    %vm1686 = vcmask 523264
    %v1688 = vsel %vm1686, %v1622, 0
    %v1691 = vsel %vm1686, %v1623, 0
    %v1694 = vsel %vm1686, %v1624, 0
    %v1697 = vsel %vm1686, %v1625, 0
    %1699 = vmatprep.subr.bf16.mxu0 %v1671
    %1700 = vmatpush1.bf16.msra.mxu0 %v1670
    %1701 = vmatprep.subr.bf16.mxu0 %v1673
    %1702 = vmatpush1.bf16.msra.mxu0 %v1672
    %1703 = vmatprep.subr.bf16.mxu0 %v1675
    %1704 = vmatpush1.bf16.msra.mxu0 %v1674
    %1705 = vmatprep.subr.bf16.mxu0 %v1677
    %1706 = vmatpush1.bf16.msra.mxu0 %v1676
    %1707 = vmatprep.subr.bf16.mxu0 0
    %1708 = vmatpush1.bf16.msra.mxu0 0
    %1709 = vmatprep.subr.bf16.mxu0 0
    %1710 = vmatpush1.bf16.msra.mxu0 0
    %1711 = vmatprep.subr.bf16.mxu0 0
    %1712 = vmatpush1.bf16.msra.mxu0 0
    %1713 = vmatprep.subr.bf16.mxu0 0
    %1714 = vmatpush1.bf16.msra.mxu0 0
    %1715 = vmatprep.subr.bf16.mxu0 0
    %1716 = vmatpush1.bf16.msra.mxu0 0
    %1717 = vmatprep.subr.bf16.mxu0 0
    %1718 = vmatpush1.bf16.msra.mxu0 0
    %1719 = vmatprep.subr.bf16.mxu0 0
    %1720 = vmatpush1.bf16.msra.mxu0 0
    %1721 = vmatprep.subr.bf16.mxu0 0
    %1722 = vmatpush1.bf16.msra.mxu0 0
    %1723 = vmatprep.subr.bf16.mxu0 0
    %1724 = vmatpush1.bf16.msra.mxu0 0
    %1725 = vmatprep.subr.bf16.mxu0 0
    %1726 = vmatpush1.bf16.msra.mxu0 0
    %1727 = vmatprep.subr.bf16.mxu0 0
    %1728 = vmatpush1.bf16.msra.mxu0 0
    %1729 = vmatprep.subr.bf16.mxu0 0
    %1730 = vmatpush1.bf16.msra.mxu0 0
    %1731 = vmatprep.mubr.bf16.mxu0 0
    %1732 = vmatmul.mubr.bf16.gmra.mrb[0].mxu0 %v1688
    %v1733 = vpop.f32.mrb[0].mxu0
    %v1734 = vadd.f32 %v1639, %v1733
    %v1735 = vpop.f32.mrb[0].mxu0
    %v1736 = vadd.f32 %v1643, %v1735
    %v1737 = vpop.f32.mrb[0].mxu0
    %v1738 = vadd.f32 %v1639, %v1737
    %v1739 = vpop.f32.mrb[0].mxu0
    %v1740 = vadd.f32 %v1643, %v1739
    %1741 = vmatprep.mubr.bf16.mxu0 0
    %1742 = vmatmul.mubr.bf16.gmra.mrb[0].mxu0 %v1691
    %v1743 = vpop.f32.mrb[0].mxu0
    %v1744 = vadd.f32 %v1639, %v1743
    %v1745 = vpop.f32.mrb[0].mxu0
    %v1746 = vadd.f32 %v1643, %v1745
    %v1747 = vpop.f32.mrb[0].mxu0
    %v1748 = vadd.f32 %v1639, %v1747
    %v1749 = vpop.f32.mrb[0].mxu0
    %v1750 = vadd.f32 %v1643, %v1749
    %1751 = vmatprep.mubr.bf16.mxu0 0
    %1752 = vmatmul.mubr.bf16.gmra.mrb[0].mxu0 %v1694
    %v1753 = vpop.f32.mrb[0].mxu0
    %v1754 = vadd.f32 %v1639, %v1753
    %v1755 = vpop.f32.mrb[0].mxu0
    %v1756 = vadd.f32 %v1643, %v1755
    %v1757 = vpop.f32.mrb[0].mxu0
    %v1758 = vadd.f32 %v1639, %v1757
    %v1759 = vpop.f32.mrb[0].mxu0
    %v1760 = vadd.f32 %v1643, %v1759
    %1761 = vmatprep.mubr.bf16.mxu0 0
    %1762 = vmatmul.mubr.bf16.gmra.mrb[0].mxu0 %v1697
    %v1763 = vpop.f32.mrb[0].mxu0
    %v1764 = vadd.f32 %v1639, %v1763
    %v1765 = vpop.f32.mrb[0].mxu0
    %v1766 = vadd.f32 %v1643, %v1765
    %v1767 = vpop.f32.mrb[0].mxu0
    %v1768 = vadd.f32 %v1639, %v1767
    %v1769 = vpop.f32.mrb[0].mxu0
    %v1770 = vadd.f32 %v1643, %v1769
    %1771 = vdwg.mxu0
    %1772 = vst [vmem:[#allocation4] sm:$0xff] %v1734
    %1773 = vst [vmem:[#allocation4 + $0x8] sm:$0xff] %v1736
    %1774 = vst [vmem:[#allocation4 + $0x10] sm:$0xff] %v1738
    %1775 = vst [vmem:[#allocation4 + $0x18] sm:$0xff] %v1740
    %1776 = vst [vmem:[#allocation4 + $0x20] sm:$0xff] %v1744
    %1777 = vst [vmem:[#allocation4 + $0x28] sm:$0xff] %v1746
    %1778 = vst [vmem:[#allocation4 + $0x30] sm:$0xff] %v1748
    %1779 = vst [vmem:[#allocation4 + $0x38] sm:$0xff] %v1750
    %1780 = vst [vmem:[#allocation4 + $0x40] sm:$0xff] %v1754
    %1781 = vst [vmem:[#allocation4 + $0x48] sm:$0xff] %v1756
    %1782 = vst [vmem:[#allocation4 + $0x50] sm:$0xff] %v1758
    %1783 = vst [vmem:[#allocation4 + $0x58] sm:$0xff] %v1760
    %1784 = vst [vmem:[#allocation4 + $0x60] sm:$0xff] %v1764
    %1785 = vst [vmem:[#allocation4 + $0x68] sm:$0xff] %v1766
    %1786 = vst [vmem:[#allocation4 + $0x70] sm:$0xff] %v1768
    %1787 = vst [vmem:[#allocation4 + $0x78] sm:$0xff] %v1770
    %v1788 = vld [vmem:[%s8] sm:$0xf]
    %v1789 = vld [vmem:[%s8 + $0x4] sm:$0xf]
    %v1790 = vld [vmem:[%s8 + $0x8] sm:$0xf]
    %v1791 = vld [vmem:[%s8 + $0xc] sm:$0xf]
    %v1792 = vld [vmem:[%s9] sm:$0xf]
    %v1793 = vld [vmem:[%s9 + $0x4] sm:$0xf]
    %v1794 = vld [vmem:[%s9 + $0x8] sm:$0xf]
    %v1795 = vld [vmem:[%s9 + $0xc] sm:$0xf]
    %v1796 = vld [vmem:[%s222] sm:$0xff]
    %v1801 = vunpack.c.l.b16 %v1788
    %v1802 = vunpack.c.l.b16 %v1789
    %v1803 = vunpack.c.l.b16 %v1790
    %v1804 = vunpack.c.l.b16 %v1791
    %v1805 = vpack.c.b16 %v1802, %v1801
    %v1806 = vpack.c.b16 %v1804, %v1803
    %1809 = vmatprep.subr.bf16.mxu0 0
    %1810 = vmatpush1.bf16.msra.mxu0 %v1805
    %1811 = vmatprep.subr.bf16.mxu0 0
    %1812 = vmatpush1.bf16.msra.mxu0 %v1806
    %1813 = vmatprep.subr.bf16.mxu0 0
    %1814 = vmatpush1.bf16.msra.mxu0 0
    %1815 = vmatprep.subr.bf16.mxu0 0
    %1816 = vmatpush1.bf16.msra.mxu0 0
    %1817 = vmatprep.subr.bf16.mxu0 0
    %1818 = vmatpush1.bf16.msra.mxu0 0
    %1819 = vmatprep.subr.bf16.mxu0 0
    %1820 = vmatpush1.bf16.msra.mxu0 0
    %1821 = vmatprep.subr.bf16.mxu0 0
    %1822 = vmatpush1.bf16.msra.mxu0 0
    %1823 = vmatprep.subr.bf16.mxu0 0
    %1824 = vmatpush1.bf16.msra.mxu0 0
    %1825 = vmatprep.subr.bf16.mxu0 0
    %1826 = vmatpush1.bf16.msra.mxu0 0
    %1827 = vmatprep.subr.bf16.mxu0 0
    %1828 = vmatpush1.bf16.msra.mxu0 0
    %1829 = vmatprep.subr.bf16.mxu0 0
    %1830 = vmatpush1.bf16.msra.mxu0 0
    %1831 = vmatprep.subr.bf16.mxu0 0
    %1832 = vmatpush1.bf16.msra.mxu0 0
    %1833 = vmatprep.subr.bf16.mxu0 0
    %1834 = vmatpush1.bf16.msra.mxu0 0
    %1835 = vmatprep.subr.bf16.mxu0 0
    %1836 = vmatpush1.bf16.msra.mxu0 0
    %1837 = vmatprep.subr.bf16.mxu0 0
    %1838 = vmatpush1.bf16.msra.mxu0 0
    %1839 = vmatprep.subr.bf16.mxu0 0
    %1840 = vmatpush1.bf16.msra.mxu0 0
    %1841 = vmatprep.mubr.bf16.mxu0 0
    %1842 = vmatmul.mubr.bf16.gmra.mrb[0].mxu0 %v237
    %v1843 = vpop.f32.mrb[0].mxu0
    %v1844 = vadd.f32 0.0, %v1843
    %v1845 = vpop.f32.mrb[0].mxu0
    %v1846 = vpop.f32.mrb[0].mxu0
    %v1847 = vpop.f32.mrb[0].mxu0
    %1848 = vdwg.mxu0
    %v1849 = vadd.f32 %v1796, %v1844
    %v1850 = vld [vmem:[%s282 + $0x8] sm:$0xff]
    %v1855 = vunpack.c.l.b16 %v1792
    %v1856 = vunpack.c.l.b16 %v1793
    %v1857 = vunpack.c.l.b16 %v1794
    %v1858 = vunpack.c.l.b16 %v1795
    %v1859 = vpack.c.b16 %v1856, %v1855
    %v1860 = vpack.c.b16 %v1858, %v1857
    %1863 = vmatprep.subr.bf16.mxu0 0
    %1864 = vmatpush1.bf16.msra.mxu0 %v1859
    %1865 = vmatprep.subr.bf16.mxu0 0
    %1866 = vmatpush1.bf16.msra.mxu0 %v1860
    %1867 = vmatprep.subr.bf16.mxu0 0
    %1868 = vmatpush1.bf16.msra.mxu0 0
    %1869 = vmatprep.subr.bf16.mxu0 0
    %1870 = vmatpush1.bf16.msra.mxu0 0
    %1871 = vmatprep.subr.bf16.mxu0 0
    %1872 = vmatpush1.bf16.msra.mxu0 0
    %1873 = vmatprep.subr.bf16.mxu0 0
    %1874 = vmatpush1.bf16.msra.mxu0 0
    %1875 = vmatprep.subr.bf16.mxu0 0
    %1876 = vmatpush1.bf16.msra.mxu0 0
    %1877 = vmatprep.subr.bf16.mxu0 0
    %1878 = vmatpush1.bf16.msra.mxu0 0
    %1879 = vmatprep.subr.bf16.mxu0 0
    %1880 = vmatpush1.bf16.msra.mxu0 0
    %1881 = vmatprep.subr.bf16.mxu0 0
    %1882 = vmatpush1.bf16.msra.mxu0 0
    %1883 = vmatprep.subr.bf16.mxu0 0
    %1884 = vmatpush1.bf16.msra.mxu0 0
    %1885 = vmatprep.subr.bf16.mxu0 0
    %1886 = vmatpush1.bf16.msra.mxu0 0
    %1887 = vmatprep.subr.bf16.mxu0 0
    %1888 = vmatpush1.bf16.msra.mxu0 0
    %1889 = vmatprep.subr.bf16.mxu0 0
    %1890 = vmatpush1.bf16.msra.mxu0 0
    %1891 = vmatprep.subr.bf16.mxu0 0
    %1892 = vmatpush1.bf16.msra.mxu0 0
    %1893 = vmatprep.subr.bf16.mxu0 0
    %1894 = vmatpush1.bf16.msra.mxu0 0
    %1895 = vmatprep.mubr.bf16.mxu0 0
    %1896 = vmatmul.mubr.bf16.gmra.mrb[0].mxu0 %v237
    %v1897 = vpop.f32.mrb[0].mxu0
    %v1898 = vadd.f32 0.0, %v1897
    %v1899 = vpop.f32.mrb[0].mxu0
    %v1900 = vpop.f32.mrb[0].mxu0
    %v1901 = vpop.f32.mrb[0].mxu0
    %1902 = vdwg.mxu0
    %v1903 = vadd.f32 %v1850, %v1898
    %v1904 = vld [vmem:[%s1] sm:$0xff]
    %v1905 = vmul.f32 %v1849, %v60
    %v1906 = vtanh.pop %v1905
    %v1907 = vmul.f32 %v1906, %v60
    %v1908 = vadd.f32 %v1907, %v61
    %v1909 = vmul.f32 %v1908, 0.0
    %1911 = vrot.lane.b32.xlu0 %v1908, 64
    %v1912 = vpop.permute.xlu0 %1911
    %v1914 = vmul.f32 %v1908, %v1912
    %1916 = vrot.lane.b32.xlu0 %v1914, 32
    %v1917 = vpop.permute.xlu0 %1916
    %v1919 = vadd.f32 %v1909, %v1917
    %v1920 = vtanh.pop %v1919
    %1922 = vrot.lane.b32.xlu0 %v1920, 64
    %v1923 = vpop.permute.xlu0 %1922
    %v1925 = vmul.f32 %v1908, %v1923
    %vm1926 = vcmp.gt.f32.partialorder %v1904, 0.0
    %v1927 = vsel %vm1926, 1, 0
    %1928 = vset.pattern.permute.xlu0 0
    %1929 = vperm.xlu0 %1928, %v1927
    %v1930 = vpop.permute.xlu0 %1929
    %vm1931 = vcmp.eq.s32.totalorder %v1930, 1
    %v1932 = vsel %vm1931, %v1925, 0.0
    %v1933 = vsel %vm1931, %v1919, 0.0
    %v1934 = vld [vmem:[%s367] sm:$0xff]
    %v1935 = vmul.f32 %v1903, %v60
    %v1936 = vtanh.pop %v1935
    %v1937 = vmul.f32 %v1936, %v60
    %v1938 = vadd.f32 %v1937, %v61
    %v1939 = vmul.f32 %v1938, 0.0
    %1941 = vrot.lane.b32.xlu0 %v1938, 64
    %v1942 = vpop.permute.xlu0 %1941
    %v1944 = vmul.f32 %v1938, %v1942
    %1946 = vrot.lane.b32.xlu0 %v1944, 32
    %v1947 = vpop.permute.xlu0 %1946
    %v1949 = vadd.f32 %v1939, %v1947
    %v1950 = vtanh.pop %v1949
    %1952 = vrot.lane.b32.xlu0 %v1950, 64
    %v1953 = vpop.permute.xlu0 %1952
    %v1955 = vmul.f32 %v1938, %v1953
    %vm1956 = vcmp.gt.f32.partialorder %v1934, 0.0
    %v1957 = vsel %vm1956, 1, 0
    %1958 = vset.pattern.permute.xlu0 0
    %1959 = vperm.xlu0 %1958, %v1957
    %v1960 = vpop.permute.xlu0 %1959
    %vm1961 = vcmp.eq.s32.totalorder %v1960, 1
    %v1962 = vsel %vm1961, %v1955, 0.0
    %v1963 = vsel %vm1961, %v1949, 0.0
    %1965 = vrot.lane.b32.xlu0 %v1932, 32
    %v1966 = vpop.permute.xlu0 %1965
    %1968 = vst.msk [vmem:[#allocation3] sm:$0xff] %vm110, %v1966
    %1970 = vrot.lane.b32.xlu0 %v1962, 64
    %v1971 = vpop.permute.xlu0 %1970
    %s1973 = scalar_lea.vmem [#allocation3], 56
    %1974 = vst.msk [vmem:[%s1973] sm:$0xff] %vm408, %v1971
    %v1975 = vld [vmem:[%s412] sm:$0xff]
    %v1976 = vpack.c.bf16 %v1932, %v1932
    %1978 = vrot.lane.b32.xlu0 %v1976, 32
    %v1979 = vpop.permute.xlu0 %1978
    %v1981 = vsel %vm110, %v1979, 0
    %1983 = vmatprep.subr.bf16.mxu0 0
    %1984 = vmatpush1.bf16.msra.mxu0 %v1805
    %1985 = vmatprep.subr.bf16.mxu0 0
    %1986 = vmatpush1.bf16.msra.mxu0 %v1806
    %1987 = vmatprep.subr.bf16.mxu0 0
    %1988 = vmatpush1.bf16.msra.mxu0 0
    %1989 = vmatprep.subr.bf16.mxu0 0
    %1990 = vmatpush1.bf16.msra.mxu0 0
    %1991 = vmatprep.subr.bf16.mxu0 0
    %1992 = vmatpush1.bf16.msra.mxu0 0
    %1993 = vmatprep.subr.bf16.mxu0 0
    %1994 = vmatpush1.bf16.msra.mxu0 0
    %1995 = vmatprep.subr.bf16.mxu0 0
    %1996 = vmatpush1.bf16.msra.mxu0 0
    %1997 = vmatprep.subr.bf16.mxu0 0
    %1998 = vmatpush1.bf16.msra.mxu0 0
    %1999 = vmatprep.subr.bf16.mxu0 0
    %2000 = vmatpush1.bf16.msra.mxu0 0
    %2001 = vmatprep.subr.bf16.mxu0 0
    %2002 = vmatpush1.bf16.msra.mxu0 0
    %2003 = vmatprep.subr.bf16.mxu0 0
    %2004 = vmatpush1.bf16.msra.mxu0 0
    %2005 = vmatprep.subr.bf16.mxu0 0
    %2006 = vmatpush1.bf16.msra.mxu0 0
    %2007 = vmatprep.subr.bf16.mxu0 0
    %2008 = vmatpush1.bf16.msra.mxu0 0
    %2009 = vmatprep.subr.bf16.mxu0 0
    %2010 = vmatpush1.bf16.msra.mxu0 0
    %2011 = vmatprep.subr.bf16.mxu0 0
    %2012 = vmatpush1.bf16.msra.mxu0 0
    %2013 = vmatprep.subr.bf16.mxu0 0
    %2014 = vmatpush1.bf16.msra.mxu0 0
    %2015 = vmatprep.mubr.bf16.mxu0 0
    %2016 = vmatmul.mubr.bf16.gmra.mrb[0].mxu0 %v1981
    %v2017 = vpop.f32.mrb[0].mxu0
    %v2018 = vadd.f32 0.0, %v2017
    %v2019 = vpop.f32.mrb[0].mxu0
    %v2020 = vpop.f32.mrb[0].mxu0
    %v2021 = vpop.f32.mrb[0].mxu0
    %2022 = vdwg.mxu0
    %v2023 = vadd.f32 %v1975, %v2018
    %v2024 = vld [vmem:[%s464 + $0x8] sm:$0xff]
    %v2025 = vpack.c.bf16 %v1962, %v1962
    %2027 = vrot.lane.b32.xlu0 %v2025, 32
    %v2028 = vpop.permute.xlu0 %2027
    %v2030 = vsel %vm110, %v2028, 0
    %2032 = vmatprep.subr.bf16.mxu0 0
    %2033 = vmatpush1.bf16.msra.mxu0 %v1859
    %2034 = vmatprep.subr.bf16.mxu0 0
    %2035 = vmatpush1.bf16.msra.mxu0 %v1860
    %2036 = vmatprep.subr.bf16.mxu0 0
    %2037 = vmatpush1.bf16.msra.mxu0 0
    %2038 = vmatprep.subr.bf16.mxu0 0
    %2039 = vmatpush1.bf16.msra.mxu0 0
    %2040 = vmatprep.subr.bf16.mxu0 0
    %2041 = vmatpush1.bf16.msra.mxu0 0
    %2042 = vmatprep.subr.bf16.mxu0 0
    %2043 = vmatpush1.bf16.msra.mxu0 0
    %2044 = vmatprep.subr.bf16.mxu0 0
    %2045 = vmatpush1.bf16.msra.mxu0 0
    %2046 = vmatprep.subr.bf16.mxu0 0
    %2047 = vmatpush1.bf16.msra.mxu0 0
    %2048 = vmatprep.subr.bf16.mxu0 0
    %2049 = vmatpush1.bf16.msra.mxu0 0
    %2050 = vmatprep.subr.bf16.mxu0 0
    %2051 = vmatpush1.bf16.msra.mxu0 0
    %2052 = vmatprep.subr.bf16.mxu0 0
    %2053 = vmatpush1.bf16.msra.mxu0 0
    %2054 = vmatprep.subr.bf16.mxu0 0
    %2055 = vmatpush1.bf16.msra.mxu0 0
    %2056 = vmatprep.subr.bf16.mxu0 0
    %2057 = vmatpush1.bf16.msra.mxu0 0
    %2058 = vmatprep.subr.bf16.mxu0 0
    %2059 = vmatpush1.bf16.msra.mxu0 0
    %2060 = vmatprep.subr.bf16.mxu0 0
    %2061 = vmatpush1.bf16.msra.mxu0 0
    %2062 = vmatprep.subr.bf16.mxu0 0
    %2063 = vmatpush1.bf16.msra.mxu0 0
    %2064 = vmatprep.mubr.bf16.mxu0 0
    %2065 = vmatmul.mubr.bf16.gmra.mrb[0].mxu0 %v2030
    %v2066 = vpop.f32.mrb[0].mxu0
    %v2067 = vadd.f32 0.0, %v2066
    %v2068 = vpop.f32.mrb[0].mxu0
    %v2069 = vpop.f32.mrb[0].mxu0
    %v2070 = vpop.f32.mrb[0].mxu0
    %2071 = vdwg.mxu0
    %v2072 = vadd.f32 %v2024, %v2067
    %v2073 = vld [vmem:[%s514] sm:$0xff]
    %v2074 = vmul.f32 %v2023, %v60
    %v2075 = vtanh.pop %v2074
    %v2076 = vmul.f32 %v2075, %v60
    %v2077 = vadd.f32 %v2076, %v61
    %v2078 = vmul.f32 %v2077, %v1933
    %2080 = vrot.lane.b32.xlu0 %v2077, 64
    %v2081 = vpop.permute.xlu0 %2080
    %v2083 = vmul.f32 %v2077, %v2081
    %2085 = vrot.lane.b32.xlu0 %v2083, 32
    %v2086 = vpop.permute.xlu0 %2085
    %v2088 = vadd.f32 %v2078, %v2086
    %v2089 = vtanh.pop %v2088
    %2091 = vrot.lane.b32.xlu0 %v2089, 64
    %v2092 = vpop.permute.xlu0 %2091
    %v2094 = vmul.f32 %v2077, %v2092
    %vm2095 = vcmp.gt.f32.partialorder %v2073, 0.0
    %v2096 = vsel %vm2095, 1, 0
    %2097 = vset.pattern.permute.xlu0 0
    %2098 = vperm.xlu0 %2097, %v2096
    %v2099 = vpop.permute.xlu0 %2098
    %vm2100 = vcmp.eq.s32.totalorder %v2099, 1
    %v2101 = vsel %vm2100, %v2094, %v1932
    %v2102 = vsel %vm2100, %v2088, %v1933
    %v2103 = vld [vmem:[%s545] sm:$0xff]
    %v2104 = vmul.f32 %v2072, %v60
    %v2105 = vtanh.pop %v2104
    %v2106 = vmul.f32 %v2105, %v60
    %v2107 = vadd.f32 %v2106, %v61
    %v2108 = vmul.f32 %v2107, %v1963
    %2110 = vrot.lane.b32.xlu0 %v2107, 64
    %v2111 = vpop.permute.xlu0 %2110
    %v2113 = vmul.f32 %v2107, %v2111
    %2115 = vrot.lane.b32.xlu0 %v2113, 32
    %v2116 = vpop.permute.xlu0 %2115
    %v2118 = vadd.f32 %v2108, %v2116
    %v2119 = vtanh.pop %v2118
    %2121 = vrot.lane.b32.xlu0 %v2119, 64
    %v2122 = vpop.permute.xlu0 %2121
    %v2124 = vmul.f32 %v2107, %v2122
    %vm2125 = vcmp.gt.f32.partialorder %v2103, 0.0
    %v2126 = vsel %vm2125, 1, 0
    %2127 = vset.pattern.permute.xlu0 0
    %2128 = vperm.xlu0 %2127, %v2126
    %v2129 = vpop.permute.xlu0 %2128
    %vm2130 = vcmp.eq.s32.totalorder %v2129, 1
    %v2131 = vsel %vm2130, %v2124, %v1962
    %v2132 = vsel %vm2130, %v2118, %v1963
    %2134 = vrot.lane.b32.xlu0 %v2101, 32
    %v2135 = vpop.permute.xlu0 %2134
    %s2137 = scalar_lea.vmem [#allocation3], 8
    %2138 = vst.msk [vmem:[%s2137] sm:$0xff] %vm110, %v2135
    %2140 = vrot.lane.b32.xlu0 %v2131, 64
    %v2141 = vpop.permute.xlu0 %2140
    %s2143 = scalar_lea.vmem [#allocation3], 48
    %2144 = vst.msk [vmem:[%s2143] sm:$0xff] %vm408, %v2141
    %v2145 = vld [vmem:[%s590] sm:$0xff]
    %v2146 = vpack.c.bf16 %v2101, %v2101
    %2148 = vrot.lane.b32.xlu0 %v2146, 32
    %v2149 = vpop.permute.xlu0 %2148
    %v2151 = vsel %vm110, %v2149, 0
    %2153 = vmatprep.subr.bf16.mxu0 0
    %2154 = vmatpush1.bf16.msra.mxu0 %v1805
    %2155 = vmatprep.subr.bf16.mxu0 0
    %2156 = vmatpush1.bf16.msra.mxu0 %v1806
    %2157 = vmatprep.subr.bf16.mxu0 0
    %2158 = vmatpush1.bf16.msra.mxu0 0
    %2159 = vmatprep.subr.bf16.mxu0 0
    %2160 = vmatpush1.bf16.msra.mxu0 0
    %2161 = vmatprep.subr.bf16.mxu0 0
    %2162 = vmatpush1.bf16.msra.mxu0 0
    %2163 = vmatprep.subr.bf16.mxu0 0
    %2164 = vmatpush1.bf16.msra.mxu0 0
    %2165 = vmatprep.subr.bf16.mxu0 0
    %2166 = vmatpush1.bf16.msra.mxu0 0
    %2167 = vmatprep.subr.bf16.mxu0 0
    %2168 = vmatpush1.bf16.msra.mxu0 0
    %2169 = vmatprep.subr.bf16.mxu0 0
    %2170 = vmatpush1.bf16.msra.mxu0 0
    %2171 = vmatprep.subr.bf16.mxu0 0
    %2172 = vmatpush1.bf16.msra.mxu0 0
    %2173 = vmatprep.subr.bf16.mxu0 0
    %2174 = vmatpush1.bf16.msra.mxu0 0
    %2175 = vmatprep.subr.bf16.mxu0 0
    %2176 = vmatpush1.bf16.msra.mxu0 0
    %2177 = vmatprep.subr.bf16.mxu0 0
    %2178 = vmatpush1.bf16.msra.mxu0 0
    %2179 = vmatprep.subr.bf16.mxu0 0
    %2180 = vmatpush1.bf16.msra.mxu0 0
    %2181 = vmatprep.subr.bf16.mxu0 0
    %2182 = vmatpush1.bf16.msra.mxu0 0
    %2183 = vmatprep.subr.bf16.mxu0 0
    %2184 = vmatpush1.bf16.msra.mxu0 0
    %2185 = vmatprep.mubr.bf16.mxu0 0
    %2186 = vmatmul.mubr.bf16.gmra.mrb[0].mxu0 %v2151
    %v2187 = vpop.f32.mrb[0].mxu0
    %v2188 = vadd.f32 0.0, %v2187
    %v2189 = vpop.f32.mrb[0].mxu0
    %v2190 = vpop.f32.mrb[0].mxu0
    %v2191 = vpop.f32.mrb[0].mxu0
    %2192 = vdwg.mxu0
    %v2193 = vadd.f32 %v2145, %v2188
    %v2194 = vld [vmem:[%s642 + $0x8] sm:$0xff]
    %v2195 = vpack.c.bf16 %v2131, %v2131
    %2197 = vrot.lane.b32.xlu0 %v2195, 32
    %v2198 = vpop.permute.xlu0 %2197
    %v2200 = vsel %vm110, %v2198, 0
    %2202 = vmatprep.subr.bf16.mxu0 0
    %2203 = vmatpush1.bf16.msra.mxu0 %v1859
    %2204 = vmatprep.subr.bf16.mxu0 0
    %2205 = vmatpush1.bf16.msra.mxu0 %v1860
    %2206 = vmatprep.subr.bf16.mxu0 0
    %2207 = vmatpush1.bf16.msra.mxu0 0
    %2208 = vmatprep.subr.bf16.mxu0 0
    %2209 = vmatpush1.bf16.msra.mxu0 0
    %2210 = vmatprep.subr.bf16.mxu0 0
    %2211 = vmatpush1.bf16.msra.mxu0 0
    %2212 = vmatprep.subr.bf16.mxu0 0
    %2213 = vmatpush1.bf16.msra.mxu0 0
    %2214 = vmatprep.subr.bf16.mxu0 0
    %2215 = vmatpush1.bf16.msra.mxu0 0
    %2216 = vmatprep.subr.bf16.mxu0 0
    %2217 = vmatpush1.bf16.msra.mxu0 0
    %2218 = vmatprep.subr.bf16.mxu0 0
    %2219 = vmatpush1.bf16.msra.mxu0 0
    %2220 = vmatprep.subr.bf16.mxu0 0
    %2221 = vmatpush1.bf16.msra.mxu0 0
    %2222 = vmatprep.subr.bf16.mxu0 0
    %2223 = vmatpush1.bf16.msra.mxu0 0
    %2224 = vmatprep.subr.bf16.mxu0 0
    %2225 = vmatpush1.bf16.msra.mxu0 0
    %2226 = vmatprep.subr.bf16.mxu0 0
    %2227 = vmatpush1.bf16.msra.mxu0 0
    %2228 = vmatprep.subr.bf16.mxu0 0
    %2229 = vmatpush1.bf16.msra.mxu0 0
    %2230 = vmatprep.subr.bf16.mxu0 0
    %2231 = vmatpush1.bf16.msra.mxu0 0
    %2232 = vmatprep.subr.bf16.mxu0 0
    %2233 = vmatpush1.bf16.msra.mxu0 0
    %2234 = vmatprep.mubr.bf16.mxu0 0
    %2235 = vmatmul.mubr.bf16.gmra.mrb[0].mxu0 %v2200
    %v2236 = vpop.f32.mrb[0].mxu0
    %v2237 = vadd.f32 0.0, %v2236
    %v2238 = vpop.f32.mrb[0].mxu0
    %v2239 = vpop.f32.mrb[0].mxu0
    %v2240 = vpop.f32.mrb[0].mxu0
    %2241 = vdwg.mxu0
    %v2242 = vadd.f32 %v2194, %v2237
    %v2243 = vld [vmem:[%s692] sm:$0xff]
    %v2244 = vmul.f32 %v2193, %v60
    %v2245 = vtanh.pop %v2244
    %v2246 = vmul.f32 %v2245, %v60
    %v2247 = vadd.f32 %v2246, %v61
    %v2248 = vmul.f32 %v2247, %v2102
    %2250 = vrot.lane.b32.xlu0 %v2247, 64
    %v2251 = vpop.permute.xlu0 %2250
    %v2253 = vmul.f32 %v2247, %v2251
    %2255 = vrot.lane.b32.xlu0 %v2253, 32
    %v2256 = vpop.permute.xlu0 %2255
    %v2258 = vadd.f32 %v2248, %v2256
    %v2259 = vtanh.pop %v2258
    %2261 = vrot.lane.b32.xlu0 %v2259, 64
    %v2262 = vpop.permute.xlu0 %2261
    %v2264 = vmul.f32 %v2247, %v2262
    %vm2265 = vcmp.gt.f32.partialorder %v2243, 0.0
    %v2266 = vsel %vm2265, 1, 0
    %2267 = vset.pattern.permute.xlu0 0
    %2268 = vperm.xlu0 %2267, %v2266
    %v2269 = vpop.permute.xlu0 %2268
    %vm2270 = vcmp.eq.s32.totalorder %v2269, 1
    %v2271 = vsel %vm2270, %v2264, %v2101
    %v2272 = vsel %vm2270, %v2258, %v2102
    %v2273 = vld [vmem:[%s723] sm:$0xff]
    %v2274 = vmul.f32 %v2242, %v60
    %v2275 = vtanh.pop %v2274
    %v2276 = vmul.f32 %v2275, %v60
    %v2277 = vadd.f32 %v2276, %v61
    %v2278 = vmul.f32 %v2277, %v2132
    %2280 = vrot.lane.b32.xlu0 %v2277, 64
    %v2281 = vpop.permute.xlu0 %2280
    %v2283 = vmul.f32 %v2277, %v2281
    %2285 = vrot.lane.b32.xlu0 %v2283, 32
    %v2286 = vpop.permute.xlu0 %2285
    %v2288 = vadd.f32 %v2278, %v2286
    %v2289 = vtanh.pop %v2288
    %2291 = vrot.lane.b32.xlu0 %v2289, 64
    %v2292 = vpop.permute.xlu0 %2291
    %v2294 = vmul.f32 %v2277, %v2292
    %vm2295 = vcmp.gt.f32.partialorder %v2273, 0.0
    %v2296 = vsel %vm2295, 1, 0
    %2297 = vset.pattern.permute.xlu0 0
    %2298 = vperm.xlu0 %2297, %v2296
    %v2299 = vpop.permute.xlu0 %2298
    %vm2300 = vcmp.eq.s32.totalorder %v2299, 1
    %v2301 = vsel %vm2300, %v2294, %v2131
    %v2302 = vsel %vm2300, %v2288, %v2132
    %2304 = vrot.lane.b32.xlu0 %v2271, 32
    %v2305 = vpop.permute.xlu0 %2304
    %s2307 = scalar_lea.vmem [#allocation3], 16
    %2308 = vst.msk [vmem:[%s2307] sm:$0xff] %vm110, %v2305
    %2310 = vrot.lane.b32.xlu0 %v2301, 64
    %v2311 = vpop.permute.xlu0 %2310
    %s2313 = scalar_lea.vmem [#allocation3], 40
    %2314 = vst.msk [vmem:[%s2313] sm:$0xff] %vm408, %v2311
    %v2315 = vld [vmem:[%s768] sm:$0xff]
    %v2316 = vpack.c.bf16 %v2271, %v2271
    %2318 = vrot.lane.b32.xlu0 %v2316, 32
    %v2319 = vpop.permute.xlu0 %2318
    %v2321 = vsel %vm110, %v2319, 0
    %2323 = vmatprep.subr.bf16.mxu0 0
    %2324 = vmatpush1.bf16.msra.mxu0 %v1805
    %2325 = vmatprep.subr.bf16.mxu0 0
    %2326 = vmatpush1.bf16.msra.mxu0 %v1806
    %2327 = vmatprep.subr.bf16.mxu0 0
    %2328 = vmatpush1.bf16.msra.mxu0 0
    %2329 = vmatprep.subr.bf16.mxu0 0
    %2330 = vmatpush1.bf16.msra.mxu0 0
    %2331 = vmatprep.subr.bf16.mxu0 0
    %2332 = vmatpush1.bf16.msra.mxu0 0
    %2333 = vmatprep.subr.bf16.mxu0 0
    %2334 = vmatpush1.bf16.msra.mxu0 0
    %2335 = vmatprep.subr.bf16.mxu0 0
    %2336 = vmatpush1.bf16.msra.mxu0 0
    %2337 = vmatprep.subr.bf16.mxu0 0
    %2338 = vmatpush1.bf16.msra.mxu0 0
    %2339 = vmatprep.subr.bf16.mxu0 0
    %2340 = vmatpush1.bf16.msra.mxu0 0
    %2341 = vmatprep.subr.bf16.mxu0 0
    %2342 = vmatpush1.bf16.msra.mxu0 0
    %2343 = vmatprep.subr.bf16.mxu0 0
    %2344 = vmatpush1.bf16.msra.mxu0 0
    %2345 = vmatprep.subr.bf16.mxu0 0
    %2346 = vmatpush1.bf16.msra.mxu0 0
    %2347 = vmatprep.subr.bf16.mxu0 0
    %2348 = vmatpush1.bf16.msra.mxu0 0
    %2349 = vmatprep.subr.bf16.mxu0 0
    %2350 = vmatpush1.bf16.msra.mxu0 0
    %2351 = vmatprep.subr.bf16.mxu0 0
    %2352 = vmatpush1.bf16.msra.mxu0 0
    %2353 = vmatprep.subr.bf16.mxu0 0
    %2354 = vmatpush1.bf16.msra.mxu0 0
    %2355 = vmatprep.mubr.bf16.mxu0 0
    %2356 = vmatmul.mubr.bf16.gmra.mrb[0].mxu0 %v2321
    %v2357 = vpop.f32.mrb[0].mxu0
    %v2358 = vadd.f32 0.0, %v2357
    %v2359 = vpop.f32.mrb[0].mxu0
    %v2360 = vpop.f32.mrb[0].mxu0
    %v2361 = vpop.f32.mrb[0].mxu0
    %2362 = vdwg.mxu0
    %v2363 = vadd.f32 %v2315, %v2358
    %v2364 = vld [vmem:[%s820 + $0x8] sm:$0xff]
    %v2365 = vpack.c.bf16 %v2301, %v2301
    %2367 = vrot.lane.b32.xlu0 %v2365, 32
    %v2368 = vpop.permute.xlu0 %2367
    %v2370 = vsel %vm110, %v2368, 0
    %2372 = vmatprep.subr.bf16.mxu0 0
    %2373 = vmatpush1.bf16.msra.mxu0 %v1859
    %2374 = vmatprep.subr.bf16.mxu0 0
    %2375 = vmatpush1.bf16.msra.mxu0 %v1860
    %2376 = vmatprep.subr.bf16.mxu0 0
    %2377 = vmatpush1.bf16.msra.mxu0 0
    %2378 = vmatprep.subr.bf16.mxu0 0
    %2379 = vmatpush1.bf16.msra.mxu0 0
    %2380 = vmatprep.subr.bf16.mxu0 0
    %2381 = vmatpush1.bf16.msra.mxu0 0
    %2382 = vmatprep.subr.bf16.mxu0 0
    %2383 = vmatpush1.bf16.msra.mxu0 0
    %2384 = vmatprep.subr.bf16.mxu0 0
    %2385 = vmatpush1.bf16.msra.mxu0 0
    %2386 = vmatprep.subr.bf16.mxu0 0
    %2387 = vmatpush1.bf16.msra.mxu0 0
    %2388 = vmatprep.subr.bf16.mxu0 0
    %2389 = vmatpush1.bf16.msra.mxu0 0
    %2390 = vmatprep.subr.bf16.mxu0 0
    %2391 = vmatpush1.bf16.msra.mxu0 0
    %2392 = vmatprep.subr.bf16.mxu0 0
    %2393 = vmatpush1.bf16.msra.mxu0 0
    %2394 = vmatprep.subr.bf16.mxu0 0
    %2395 = vmatpush1.bf16.msra.mxu0 0
    %2396 = vmatprep.subr.bf16.mxu0 0
    %2397 = vmatpush1.bf16.msra.mxu0 0
    %2398 = vmatprep.subr.bf16.mxu0 0
    %2399 = vmatpush1.bf16.msra.mxu0 0
    %2400 = vmatprep.subr.bf16.mxu0 0
    %2401 = vmatpush1.bf16.msra.mxu0 0
    %2402 = vmatprep.subr.bf16.mxu0 0
    %2403 = vmatpush1.bf16.msra.mxu0 0
    %2404 = vmatprep.mubr.bf16.mxu0 0
    %2405 = vmatmul.mubr.bf16.gmra.mrb[0].mxu0 %v2370
    %v2406 = vpop.f32.mrb[0].mxu0
    %v2407 = vadd.f32 0.0, %v2406
    %v2408 = vpop.f32.mrb[0].mxu0
    %v2409 = vpop.f32.mrb[0].mxu0
    %v2410 = vpop.f32.mrb[0].mxu0
    %2411 = vdwg.mxu0
    %v2412 = vadd.f32 %v2364, %v2407
    %v2413 = vld [vmem:[%s870] sm:$0xff]
    %v2414 = vmul.f32 %v2363, %v60
    %v2415 = vtanh.pop %v2414
    %v2416 = vmul.f32 %v2415, %v60
    %v2417 = vadd.f32 %v2416, %v61
    %v2418 = vmul.f32 %v2417, %v2272
    %2420 = vrot.lane.b32.xlu0 %v2417, 64
    %v2421 = vpop.permute.xlu0 %2420
    %v2423 = vmul.f32 %v2417, %v2421
    %2425 = vrot.lane.b32.xlu0 %v2423, 32
    %v2426 = vpop.permute.xlu0 %2425
    %v2428 = vadd.f32 %v2418, %v2426
    %v2429 = vtanh.pop %v2428
    %2431 = vrot.lane.b32.xlu0 %v2429, 64
    %v2432 = vpop.permute.xlu0 %2431
    %v2434 = vmul.f32 %v2417, %v2432
    %vm2435 = vcmp.gt.f32.partialorder %v2413, 0.0
    %v2436 = vsel %vm2435, 1, 0
    %2437 = vset.pattern.permute.xlu0 0
    %2438 = vperm.xlu0 %2437, %v2436
    %v2439 = vpop.permute.xlu0 %2438
    %vm2440 = vcmp.eq.s32.totalorder %v2439, 1
    %v2441 = vsel %vm2440, %v2434, %v2271
    %v2442 = vsel %vm2440, %v2428, %v2272
    %v2443 = vld [vmem:[%s901] sm:$0xff]
    %v2444 = vmul.f32 %v2412, %v60
    %v2445 = vtanh.pop %v2444
    %v2446 = vmul.f32 %v2445, %v60
    %v2447 = vadd.f32 %v2446, %v61
    %v2448 = vmul.f32 %v2447, %v2302
    %2450 = vrot.lane.b32.xlu0 %v2447, 64
    %v2451 = vpop.permute.xlu0 %2450
    %v2453 = vmul.f32 %v2447, %v2451
    %2455 = vrot.lane.b32.xlu0 %v2453, 32
    %v2456 = vpop.permute.xlu0 %2455
    %v2458 = vadd.f32 %v2448, %v2456
    %v2459 = vtanh.pop %v2458
    %2461 = vrot.lane.b32.xlu0 %v2459, 64
    %v2462 = vpop.permute.xlu0 %2461
    %v2464 = vmul.f32 %v2447, %v2462
    %vm2465 = vcmp.gt.f32.partialorder %v2443, 0.0
    %v2466 = vsel %vm2465, 1, 0
    %2467 = vset.pattern.permute.xlu0 0
    %2468 = vperm.xlu0 %2467, %v2466
    %v2469 = vpop.permute.xlu0 %2468
    %vm2470 = vcmp.eq.s32.totalorder %v2469, 1
    %v2471 = vsel %vm2470, %v2464, %v2301
    %v2472 = vsel %vm2470, %v2458, %v2302
    %2474 = vrot.lane.b32.xlu0 %v2441, 32
    %v2475 = vpop.permute.xlu0 %2474
    %s2477 = scalar_lea.vmem [#allocation3], 24
    %2478 = vst.msk [vmem:[%s2477] sm:$0xff] %vm110, %v2475
    %2480 = vrot.lane.b32.xlu0 %v2471, 64
    %v2481 = vpop.permute.xlu0 %2480
    %s2483 = scalar_lea.vmem [#allocation3], 32
    %2484 = vst.msk [vmem:[%s2483] sm:$0xff] %vm408, %v2481
    %v2485 = vld [vmem:[%s820] sm:$0xff]
    %v2486 = vpack.c.bf16 %v2441, %v2441
    %2488 = vrot.lane.b32.xlu0 %v2486, 32
    %v2489 = vpop.permute.xlu0 %2488
    %v2491 = vsel %vm110, %v2489, 0
    %2493 = vmatprep.subr.bf16.mxu0 0
    %2494 = vmatpush1.bf16.msra.mxu0 %v1805
    %2495 = vmatprep.subr.bf16.mxu0 0
    %2496 = vmatpush1.bf16.msra.mxu0 %v1806
    %2497 = vmatprep.subr.bf16.mxu0 0
    %2498 = vmatpush1.bf16.msra.mxu0 0
    %2499 = vmatprep.subr.bf16.mxu0 0
    %2500 = vmatpush1.bf16.msra.mxu0 0
    %2501 = vmatprep.subr.bf16.mxu0 0
    %2502 = vmatpush1.bf16.msra.mxu0 0
    %2503 = vmatprep.subr.bf16.mxu0 0
    %2504 = vmatpush1.bf16.msra.mxu0 0
    %2505 = vmatprep.subr.bf16.mxu0 0
    %2506 = vmatpush1.bf16.msra.mxu0 0
    %2507 = vmatprep.subr.bf16.mxu0 0
    %2508 = vmatpush1.bf16.msra.mxu0 0
    %2509 = vmatprep.subr.bf16.mxu0 0
    %2510 = vmatpush1.bf16.msra.mxu0 0
    %2511 = vmatprep.subr.bf16.mxu0 0
    %2512 = vmatpush1.bf16.msra.mxu0 0
    %2513 = vmatprep.subr.bf16.mxu0 0
    %2514 = vmatpush1.bf16.msra.mxu0 0
    %2515 = vmatprep.subr.bf16.mxu0 0
    %2516 = vmatpush1.bf16.msra.mxu0 0
    %2517 = vmatprep.subr.bf16.mxu0 0
    %2518 = vmatpush1.bf16.msra.mxu0 0
    %2519 = vmatprep.subr.bf16.mxu0 0
    %2520 = vmatpush1.bf16.msra.mxu0 0
    %2521 = vmatprep.subr.bf16.mxu0 0
    %2522 = vmatpush1.bf16.msra.mxu0 0
    %2523 = vmatprep.subr.bf16.mxu0 0
    %2524 = vmatpush1.bf16.msra.mxu0 0
    %2525 = vmatprep.mubr.bf16.mxu0 0
    %2526 = vmatmul.mubr.bf16.gmra.mrb[0].mxu0 %v2491
    %v2527 = vpop.f32.mrb[0].mxu0
    %v2528 = vadd.f32 0.0, %v2527
    %v2529 = vpop.f32.mrb[0].mxu0
    %v2530 = vpop.f32.mrb[0].mxu0
    %v2531 = vpop.f32.mrb[0].mxu0
    %2532 = vdwg.mxu0
    %v2533 = vadd.f32 %v2485, %v2528
    %v2534 = vld [vmem:[%s768 + $0x8] sm:$0xff]
    %v2535 = vpack.c.bf16 %v2471, %v2471
    %2537 = vrot.lane.b32.xlu0 %v2535, 32
    %v2538 = vpop.permute.xlu0 %2537
    %v2540 = vsel %vm110, %v2538, 0
    %2542 = vmatprep.subr.bf16.mxu0 0
    %2543 = vmatpush1.bf16.msra.mxu0 %v1859
    %2544 = vmatprep.subr.bf16.mxu0 0
    %2545 = vmatpush1.bf16.msra.mxu0 %v1860
    %2546 = vmatprep.subr.bf16.mxu0 0
    %2547 = vmatpush1.bf16.msra.mxu0 0
    %2548 = vmatprep.subr.bf16.mxu0 0
    %2549 = vmatpush1.bf16.msra.mxu0 0
    %2550 = vmatprep.subr.bf16.mxu0 0
    %2551 = vmatpush1.bf16.msra.mxu0 0
    %2552 = vmatprep.subr.bf16.mxu0 0
    %2553 = vmatpush1.bf16.msra.mxu0 0
    %2554 = vmatprep.subr.bf16.mxu0 0
    %2555 = vmatpush1.bf16.msra.mxu0 0
    %2556 = vmatprep.subr.bf16.mxu0 0
    %2557 = vmatpush1.bf16.msra.mxu0 0
    %2558 = vmatprep.subr.bf16.mxu0 0
    %2559 = vmatpush1.bf16.msra.mxu0 0
    %2560 = vmatprep.subr.bf16.mxu0 0
    %2561 = vmatpush1.bf16.msra.mxu0 0
    %2562 = vmatprep.subr.bf16.mxu0 0
    %2563 = vmatpush1.bf16.msra.mxu0 0
    %2564 = vmatprep.subr.bf16.mxu0 0
    %2565 = vmatpush1.bf16.msra.mxu0 0
    %2566 = vmatprep.subr.bf16.mxu0 0
    %2567 = vmatpush1.bf16.msra.mxu0 0
    %2568 = vmatprep.subr.bf16.mxu0 0
    %2569 = vmatpush1.bf16.msra.mxu0 0
    %2570 = vmatprep.subr.bf16.mxu0 0
    %2571 = vmatpush1.bf16.msra.mxu0 0
    %2572 = vmatprep.subr.bf16.mxu0 0
    %2573 = vmatpush1.bf16.msra.mxu0 0
    %2574 = vmatprep.mubr.bf16.mxu0 0
    %2575 = vmatmul.mubr.bf16.gmra.mrb[0].mxu0 %v2540
    %v2576 = vpop.f32.mrb[0].mxu0
    %v2577 = vadd.f32 0.0, %v2576
    %v2578 = vpop.f32.mrb[0].mxu0
    %v2579 = vpop.f32.mrb[0].mxu0
    %v2580 = vpop.f32.mrb[0].mxu0
    %2581 = vdwg.mxu0
    %v2582 = vadd.f32 %v2534, %v2577
    %v2583 = vld [vmem:[%s901] sm:$0xff]
    %v2584 = vmul.f32 %v2533, %v60
    %v2585 = vtanh.pop %v2584
    %v2586 = vmul.f32 %v2585, %v60
    %v2587 = vadd.f32 %v2586, %v61
    %v2588 = vmul.f32 %v2587, %v2442
    %2590 = vrot.lane.b32.xlu0 %v2587, 64
    %v2591 = vpop.permute.xlu0 %2590
    %v2593 = vmul.f32 %v2587, %v2591
    %2595 = vrot.lane.b32.xlu0 %v2593, 32
    %v2596 = vpop.permute.xlu0 %2595
    %v2598 = vadd.f32 %v2588, %v2596
    %v2599 = vtanh.pop %v2598
    %2601 = vrot.lane.b32.xlu0 %v2599, 64
    %v2602 = vpop.permute.xlu0 %2601
    %v2604 = vmul.f32 %v2587, %v2602
    %vm2605 = vcmp.gt.f32.partialorder %v2583, 0.0
    %v2606 = vsel %vm2605, 1, 0
    %2607 = vset.pattern.permute.xlu0 0
    %2608 = vperm.xlu0 %2607, %v2606
    %v2609 = vpop.permute.xlu0 %2608
    %vm2610 = vcmp.eq.s32.totalorder %v2609, 1
    %v2611 = vsel %vm2610, %v2604, %v2441
    %v2612 = vsel %vm2610, %v2598, %v2442
    %v2613 = vld [vmem:[%s870] sm:$0xff]
    %v2614 = vmul.f32 %v2582, %v60
    %v2615 = vtanh.pop %v2614
    %v2616 = vmul.f32 %v2615, %v60
    %v2617 = vadd.f32 %v2616, %v61
    %v2618 = vmul.f32 %v2617, %v2472
    %2620 = vrot.lane.b32.xlu0 %v2617, 64
    %v2621 = vpop.permute.xlu0 %2620
    %v2623 = vmul.f32 %v2617, %v2621
    %2625 = vrot.lane.b32.xlu0 %v2623, 32
    %v2626 = vpop.permute.xlu0 %2625
    %v2628 = vadd.f32 %v2618, %v2626
    %v2629 = vtanh.pop %v2628
    %2631 = vrot.lane.b32.xlu0 %v2629, 64
    %v2632 = vpop.permute.xlu0 %2631
    %v2634 = vmul.f32 %v2617, %v2632
    %vm2635 = vcmp.gt.f32.partialorder %v2613, 0.0
    %v2636 = vsel %vm2635, 1, 0
    %2637 = vset.pattern.permute.xlu0 0
    %2638 = vperm.xlu0 %2637, %v2636
    %v2639 = vpop.permute.xlu0 %2638
    %vm2640 = vcmp.eq.s32.totalorder %v2639, 1
    %v2641 = vsel %vm2640, %v2634, %v2471
    %v2642 = vsel %vm2640, %v2628, %v2472
    %2644 = vrot.lane.b32.xlu0 %v2611, 32
    %v2645 = vpop.permute.xlu0 %2644
    %2647 = vst.msk [vmem:[%s2483] sm:$0xff] %vm110, %v2645
    %2649 = vrot.lane.b32.xlu0 %v2641, 64
    %v2650 = vpop.permute.xlu0 %2649
    %2652 = vst.msk [vmem:[%s2477] sm:$0xff] %vm408, %v2650
    %v2653 = vld [vmem:[%s642] sm:$0xff]
    %v2654 = vpack.c.bf16 %v2611, %v2611
    %2656 = vrot.lane.b32.xlu0 %v2654, 32
    %v2657 = vpop.permute.xlu0 %2656
    %v2659 = vsel %vm110, %v2657, 0
    %2661 = vmatprep.subr.bf16.mxu0 0
    %2662 = vmatpush1.bf16.msra.mxu0 %v1805
    %2663 = vmatprep.subr.bf16.mxu0 0
    %2664 = vmatpush1.bf16.msra.mxu0 %v1806
    %2665 = vmatprep.subr.bf16.mxu0 0
    %2666 = vmatpush1.bf16.msra.mxu0 0
    %2667 = vmatprep.subr.bf16.mxu0 0
    %2668 = vmatpush1.bf16.msra.mxu0 0
    %2669 = vmatprep.subr.bf16.mxu0 0
    %2670 = vmatpush1.bf16.msra.mxu0 0
    %2671 = vmatprep.subr.bf16.mxu0 0
    %2672 = vmatpush1.bf16.msra.mxu0 0
    %2673 = vmatprep.subr.bf16.mxu0 0
    %2674 = vmatpush1.bf16.msra.mxu0 0
    %2675 = vmatprep.subr.bf16.mxu0 0
    %2676 = vmatpush1.bf16.msra.mxu0 0
    %2677 = vmatprep.subr.bf16.mxu0 0
    %2678 = vmatpush1.bf16.msra.mxu0 0
    %2679 = vmatprep.subr.bf16.mxu0 0
    %2680 = vmatpush1.bf16.msra.mxu0 0
    %2681 = vmatprep.subr.bf16.mxu0 0
    %2682 = vmatpush1.bf16.msra.mxu0 0
    %2683 = vmatprep.subr.bf16.mxu0 0
    %2684 = vmatpush1.bf16.msra.mxu0 0
    %2685 = vmatprep.subr.bf16.mxu0 0
    %2686 = vmatpush1.bf16.msra.mxu0 0
    %2687 = vmatprep.subr.bf16.mxu0 0
    %2688 = vmatpush1.bf16.msra.mxu0 0
    %2689 = vmatprep.subr.bf16.mxu0 0
    %2690 = vmatpush1.bf16.msra.mxu0 0
    %2691 = vmatprep.subr.bf16.mxu0 0
    %2692 = vmatpush1.bf16.msra.mxu0 0
    %2693 = vmatprep.mubr.bf16.mxu0 0
    %2694 = vmatmul.mubr.bf16.gmra.mrb[0].mxu0 %v2659
    %v2695 = vpop.f32.mrb[0].mxu0
    %v2696 = vadd.f32 0.0, %v2695
    %v2697 = vpop.f32.mrb[0].mxu0
    %v2698 = vpop.f32.mrb[0].mxu0
    %v2699 = vpop.f32.mrb[0].mxu0
    %2700 = vdwg.mxu0
    %v2701 = vadd.f32 %v2653, %v2696
    %v2702 = vld [vmem:[%s590 + $0x8] sm:$0xff]
    %v2703 = vpack.c.bf16 %v2641, %v2641
    %2705 = vrot.lane.b32.xlu0 %v2703, 32
    %v2706 = vpop.permute.xlu0 %2705
    %v2708 = vsel %vm110, %v2706, 0
    %2710 = vmatprep.subr.bf16.mxu0 0
    %2711 = vmatpush1.bf16.msra.mxu0 %v1859
    %2712 = vmatprep.subr.bf16.mxu0 0
    %2713 = vmatpush1.bf16.msra.mxu0 %v1860
    %2714 = vmatprep.subr.bf16.mxu0 0
    %2715 = vmatpush1.bf16.msra.mxu0 0
    %2716 = vmatprep.subr.bf16.mxu0 0
    %2717 = vmatpush1.bf16.msra.mxu0 0
    %2718 = vmatprep.subr.bf16.mxu0 0
    %2719 = vmatpush1.bf16.msra.mxu0 0
    %2720 = vmatprep.subr.bf16.mxu0 0
    %2721 = vmatpush1.bf16.msra.mxu0 0
    %2722 = vmatprep.subr.bf16.mxu0 0
    %2723 = vmatpush1.bf16.msra.mxu0 0
    %2724 = vmatprep.subr.bf16.mxu0 0
    %2725 = vmatpush1.bf16.msra.mxu0 0
    %2726 = vmatprep.subr.bf16.mxu0 0
    %2727 = vmatpush1.bf16.msra.mxu0 0
    %2728 = vmatprep.subr.bf16.mxu0 0
    %2729 = vmatpush1.bf16.msra.mxu0 0
    %2730 = vmatprep.subr.bf16.mxu0 0
    %2731 = vmatpush1.bf16.msra.mxu0 0
    %2732 = vmatprep.subr.bf16.mxu0 0
    %2733 = vmatpush1.bf16.msra.mxu0 0
    %2734 = vmatprep.subr.bf16.mxu0 0
    %2735 = vmatpush1.bf16.msra.mxu0 0
    %2736 = vmatprep.subr.bf16.mxu0 0
    %2737 = vmatpush1.bf16.msra.mxu0 0
    %2738 = vmatprep.subr.bf16.mxu0 0
    %2739 = vmatpush1.bf16.msra.mxu0 0
    %2740 = vmatprep.subr.bf16.mxu0 0
    %2741 = vmatpush1.bf16.msra.mxu0 0
    %2742 = vmatprep.mubr.bf16.mxu0 0
    %2743 = vmatmul.mubr.bf16.gmra.mrb[0].mxu0 %v2708
    %v2744 = vpop.f32.mrb[0].mxu0
    %v2745 = vadd.f32 0.0, %v2744
    %v2746 = vpop.f32.mrb[0].mxu0
    %v2747 = vpop.f32.mrb[0].mxu0
    %v2748 = vpop.f32.mrb[0].mxu0
    %2749 = vdwg.mxu0
    %v2750 = vadd.f32 %v2702, %v2745
    %v2751 = vld [vmem:[%s723] sm:$0xff]
    %v2752 = vmul.f32 %v2701, %v60
    %v2753 = vtanh.pop %v2752
    %v2754 = vmul.f32 %v2753, %v60
    %v2755 = vadd.f32 %v2754, %v61
    %v2756 = vmul.f32 %v2755, %v2612
    %2758 = vrot.lane.b32.xlu0 %v2755, 64
    %v2759 = vpop.permute.xlu0 %2758
    %v2761 = vmul.f32 %v2755, %v2759
    %2763 = vrot.lane.b32.xlu0 %v2761, 32
    %v2764 = vpop.permute.xlu0 %2763
    %v2766 = vadd.f32 %v2756, %v2764
    %v2767 = vtanh.pop %v2766
    %2769 = vrot.lane.b32.xlu0 %v2767, 64
    %v2770 = vpop.permute.xlu0 %2769
    %v2772 = vmul.f32 %v2755, %v2770
    %vm2773 = vcmp.gt.f32.partialorder %v2751, 0.0
    %v2774 = vsel %vm2773, 1, 0
    %2775 = vset.pattern.permute.xlu0 0
    %2776 = vperm.xlu0 %2775, %v2774
    %v2777 = vpop.permute.xlu0 %2776
    %vm2778 = vcmp.eq.s32.totalorder %v2777, 1
    %v2779 = vsel %vm2778, %v2772, %v2611
    %v2780 = vsel %vm2778, %v2766, %v2612
    %v2781 = vld [vmem:[%s692] sm:$0xff]
    %v2782 = vmul.f32 %v2750, %v60
    %v2783 = vtanh.pop %v2782
    %v2784 = vmul.f32 %v2783, %v60
    %v2785 = vadd.f32 %v2784, %v61
    %v2786 = vmul.f32 %v2785, %v2642
    %2788 = vrot.lane.b32.xlu0 %v2785, 64
    %v2789 = vpop.permute.xlu0 %2788
    %v2791 = vmul.f32 %v2785, %v2789
    %2793 = vrot.lane.b32.xlu0 %v2791, 32
    %v2794 = vpop.permute.xlu0 %2793
    %v2796 = vadd.f32 %v2786, %v2794
    %v2797 = vtanh.pop %v2796
    %2799 = vrot.lane.b32.xlu0 %v2797, 64
    %v2800 = vpop.permute.xlu0 %2799
    %v2802 = vmul.f32 %v2785, %v2800
    %vm2803 = vcmp.gt.f32.partialorder %v2781, 0.0
    %v2804 = vsel %vm2803, 1, 0
    %2805 = vset.pattern.permute.xlu0 0
    %2806 = vperm.xlu0 %2805, %v2804
    %v2807 = vpop.permute.xlu0 %2806
    %vm2808 = vcmp.eq.s32.totalorder %v2807, 1
    %v2809 = vsel %vm2808, %v2802, %v2641
    %v2810 = vsel %vm2808, %v2796, %v2642
    %2812 = vrot.lane.b32.xlu0 %v2779, 32
    %v2813 = vpop.permute.xlu0 %2812
    %2815 = vst.msk [vmem:[%s2313] sm:$0xff] %vm110, %v2813
    %2817 = vrot.lane.b32.xlu0 %v2809, 64
    %v2818 = vpop.permute.xlu0 %2817
    %2820 = vst.msk [vmem:[%s2307] sm:$0xff] %vm408, %v2818
    %v2821 = vld [vmem:[%s464] sm:$0xff]
    %v2822 = vpack.c.bf16 %v2779, %v2779
    %2824 = vrot.lane.b32.xlu0 %v2822, 32
    %v2825 = vpop.permute.xlu0 %2824
    %v2827 = vsel %vm110, %v2825, 0
    %2829 = vmatprep.subr.bf16.mxu0 0
    %2830 = vmatpush1.bf16.msra.mxu0 %v1805
    %2831 = vmatprep.subr.bf16.mxu0 0
    %2832 = vmatpush1.bf16.msra.mxu0 %v1806
    %2833 = vmatprep.subr.bf16.mxu0 0
    %2834 = vmatpush1.bf16.msra.mxu0 0
    %2835 = vmatprep.subr.bf16.mxu0 0
    %2836 = vmatpush1.bf16.msra.mxu0 0
    %2837 = vmatprep.subr.bf16.mxu0 0
    %2838 = vmatpush1.bf16.msra.mxu0 0
    %2839 = vmatprep.subr.bf16.mxu0 0
    %2840 = vmatpush1.bf16.msra.mxu0 0
    %2841 = vmatprep.subr.bf16.mxu0 0
    %2842 = vmatpush1.bf16.msra.mxu0 0
    %2843 = vmatprep.subr.bf16.mxu0 0
    %2844 = vmatpush1.bf16.msra.mxu0 0
    %2845 = vmatprep.subr.bf16.mxu0 0
    %2846 = vmatpush1.bf16.msra.mxu0 0
    %2847 = vmatprep.subr.bf16.mxu0 0
    %2848 = vmatpush1.bf16.msra.mxu0 0
    %2849 = vmatprep.subr.bf16.mxu0 0
    %2850 = vmatpush1.bf16.msra.mxu0 0
    %2851 = vmatprep.subr.bf16.mxu0 0
    %2852 = vmatpush1.bf16.msra.mxu0 0
    %2853 = vmatprep.subr.bf16.mxu0 0
    %2854 = vmatpush1.bf16.msra.mxu0 0
    %2855 = vmatprep.subr.bf16.mxu0 0
    %2856 = vmatpush1.bf16.msra.mxu0 0
    %2857 = vmatprep.subr.bf16.mxu0 0
    %2858 = vmatpush1.bf16.msra.mxu0 0
    %2859 = vmatprep.subr.bf16.mxu0 0
    %2860 = vmatpush1.bf16.msra.mxu0 0
    %2861 = vmatprep.mubr.bf16.mxu0 0
    %2862 = vmatmul.mubr.bf16.gmra.mrb[0].mxu0 %v2827
    %v2863 = vpop.f32.mrb[0].mxu0
    %v2864 = vadd.f32 0.0, %v2863
    %v2865 = vpop.f32.mrb[0].mxu0
    %v2866 = vpop.f32.mrb[0].mxu0
    %v2867 = vpop.f32.mrb[0].mxu0
    %2868 = vdwg.mxu0
    %v2869 = vadd.f32 %v2821, %v2864
    %v2870 = vld [vmem:[%s412 + $0x8] sm:$0xff]
    %v2871 = vpack.c.bf16 %v2809, %v2809
    %2873 = vrot.lane.b32.xlu0 %v2871, 32
    %v2874 = vpop.permute.xlu0 %2873
    %v2876 = vsel %vm110, %v2874, 0
    %2878 = vmatprep.subr.bf16.mxu0 0
    %2879 = vmatpush1.bf16.msra.mxu0 %v1859
    %2880 = vmatprep.subr.bf16.mxu0 0
    %2881 = vmatpush1.bf16.msra.mxu0 %v1860
    %2882 = vmatprep.subr.bf16.mxu0 0
    %2883 = vmatpush1.bf16.msra.mxu0 0
    %2884 = vmatprep.subr.bf16.mxu0 0
    %2885 = vmatpush1.bf16.msra.mxu0 0
    %2886 = vmatprep.subr.bf16.mxu0 0
    %2887 = vmatpush1.bf16.msra.mxu0 0
    %2888 = vmatprep.subr.bf16.mxu0 0
    %2889 = vmatpush1.bf16.msra.mxu0 0
    %2890 = vmatprep.subr.bf16.mxu0 0
    %2891 = vmatpush1.bf16.msra.mxu0 0
    %2892 = vmatprep.subr.bf16.mxu0 0
    %2893 = vmatpush1.bf16.msra.mxu0 0
    %2894 = vmatprep.subr.bf16.mxu0 0
    %2895 = vmatpush1.bf16.msra.mxu0 0
    %2896 = vmatprep.subr.bf16.mxu0 0
    %2897 = vmatpush1.bf16.msra.mxu0 0
    %2898 = vmatprep.subr.bf16.mxu0 0
    %2899 = vmatpush1.bf16.msra.mxu0 0
    %2900 = vmatprep.subr.bf16.mxu0 0
    %2901 = vmatpush1.bf16.msra.mxu0 0
    %2902 = vmatprep.subr.bf16.mxu0 0
    %2903 = vmatpush1.bf16.msra.mxu0 0
    %2904 = vmatprep.subr.bf16.mxu0 0
    %2905 = vmatpush1.bf16.msra.mxu0 0
    %2906 = vmatprep.subr.bf16.mxu0 0
    %2907 = vmatpush1.bf16.msra.mxu0 0
    %2908 = vmatprep.subr.bf16.mxu0 0
    %2909 = vmatpush1.bf16.msra.mxu0 0
    %2910 = vmatprep.mubr.bf16.mxu0 0
    %2911 = vmatmul.mubr.bf16.gmra.mrb[0].mxu0 %v2876
    %v2912 = vpop.f32.mrb[0].mxu0
    %v2913 = vadd.f32 0.0, %v2912
    %v2914 = vpop.f32.mrb[0].mxu0
    %v2915 = vpop.f32.mrb[0].mxu0
    %v2916 = vpop.f32.mrb[0].mxu0
    %2917 = vdwg.mxu0
    %v2918 = vadd.f32 %v2870, %v2913
    %v2919 = vld [vmem:[%s545] sm:$0xff]
    %v2920 = vmul.f32 %v2869, %v60
    %v2921 = vtanh.pop %v2920
    %v2922 = vmul.f32 %v2921, %v60
    %v2923 = vadd.f32 %v2922, %v61
    %v2924 = vmul.f32 %v2923, %v2780
    %2926 = vrot.lane.b32.xlu0 %v2923, 64
    %v2927 = vpop.permute.xlu0 %2926
    %v2929 = vmul.f32 %v2923, %v2927
    %2931 = vrot.lane.b32.xlu0 %v2929, 32
    %v2932 = vpop.permute.xlu0 %2931
    %v2934 = vadd.f32 %v2924, %v2932
    %v2935 = vtanh.pop %v2934
    %2937 = vrot.lane.b32.xlu0 %v2935, 64
    %v2938 = vpop.permute.xlu0 %2937
    %v2940 = vmul.f32 %v2923, %v2938
    %vm2941 = vcmp.gt.f32.partialorder %v2919, 0.0
    %v2942 = vsel %vm2941, 1, 0
    %2943 = vset.pattern.permute.xlu0 0
    %2944 = vperm.xlu0 %2943, %v2942
    %v2945 = vpop.permute.xlu0 %2944
    %vm2946 = vcmp.eq.s32.totalorder %v2945, 1
    %v2947 = vsel %vm2946, %v2940, %v2779
    %v2948 = vsel %vm2946, %v2934, %v2780
    %v2949 = vld [vmem:[%s514] sm:$0xff]
    %v2950 = vmul.f32 %v2918, %v60
    %v2951 = vtanh.pop %v2950
    %v2952 = vmul.f32 %v2951, %v60
    %v2953 = vadd.f32 %v2952, %v61
    %v2954 = vmul.f32 %v2953, %v2810
    %2956 = vrot.lane.b32.xlu0 %v2953, 64
    %v2957 = vpop.permute.xlu0 %2956
    %v2959 = vmul.f32 %v2953, %v2957
    %2961 = vrot.lane.b32.xlu0 %v2959, 32
    %v2962 = vpop.permute.xlu0 %2961
    %v2964 = vadd.f32 %v2954, %v2962
    %v2965 = vtanh.pop %v2964
    %2967 = vrot.lane.b32.xlu0 %v2965, 64
    %v2968 = vpop.permute.xlu0 %2967
    %v2970 = vmul.f32 %v2953, %v2968
    %vm2971 = vcmp.gt.f32.partialorder %v2949, 0.0
    %v2972 = vsel %vm2971, 1, 0
    %2973 = vset.pattern.permute.xlu0 0
    %2974 = vperm.xlu0 %2973, %v2972
    %v2975 = vpop.permute.xlu0 %2974
    %vm2976 = vcmp.eq.s32.totalorder %v2975, 1
    %v2977 = vsel %vm2976, %v2970, %v2809
    %v2978 = vsel %vm2976, %v2964, %v2810
    %2980 = vrot.lane.b32.xlu0 %v2947, 32
    %v2981 = vpop.permute.xlu0 %2980
    %2983 = vst.msk [vmem:[%s2143] sm:$0xff] %vm110, %v2981
    %2985 = vrot.lane.b32.xlu0 %v2977, 64
    %v2986 = vpop.permute.xlu0 %2985
    %2988 = vst.msk [vmem:[%s2137] sm:$0xff] %vm408, %v2986
    %v2989 = vld [vmem:[%s282] sm:$0xff]
    %v2990 = vpack.c.bf16 %v2947, %v2947
    %2992 = vrot.lane.b32.xlu0 %v2990, 32
    %v2993 = vpop.permute.xlu0 %2992
    %v2995 = vsel %vm110, %v2993, 0
    %2997 = vmatprep.subr.bf16.mxu0 0
    %2998 = vmatpush1.bf16.msra.mxu0 %v1805
    %2999 = vmatprep.subr.bf16.mxu0 0
    %3000 = vmatpush1.bf16.msra.mxu0 %v1806
    %3001 = vmatprep.subr.bf16.mxu0 0
    %3002 = vmatpush1.bf16.msra.mxu0 0
    %3003 = vmatprep.subr.bf16.mxu0 0
    %3004 = vmatpush1.bf16.msra.mxu0 0
    %3005 = vmatprep.subr.bf16.mxu0 0
    %3006 = vmatpush1.bf16.msra.mxu0 0
    %3007 = vmatprep.subr.bf16.mxu0 0
    %3008 = vmatpush1.bf16.msra.mxu0 0
    %3009 = vmatprep.subr.bf16.mxu0 0
    %3010 = vmatpush1.bf16.msra.mxu0 0
    %3011 = vmatprep.subr.bf16.mxu0 0
    %3012 = vmatpush1.bf16.msra.mxu0 0
    %3013 = vmatprep.subr.bf16.mxu0 0
    %3014 = vmatpush1.bf16.msra.mxu0 0
    %3015 = vmatprep.subr.bf16.mxu0 0
    %3016 = vmatpush1.bf16.msra.mxu0 0
    %3017 = vmatprep.subr.bf16.mxu0 0
    %3018 = vmatpush1.bf16.msra.mxu0 0
    %3019 = vmatprep.subr.bf16.mxu0 0
    %3020 = vmatpush1.bf16.msra.mxu0 0
    %3021 = vmatprep.subr.bf16.mxu0 0
    %3022 = vmatpush1.bf16.msra.mxu0 0
    %3023 = vmatprep.subr.bf16.mxu0 0
    %3024 = vmatpush1.bf16.msra.mxu0 0
    %3025 = vmatprep.subr.bf16.mxu0 0
    %3026 = vmatpush1.bf16.msra.mxu0 0
    %3027 = vmatprep.subr.bf16.mxu0 0
    %3028 = vmatpush1.bf16.msra.mxu0 0
    %3029 = vmatprep.mubr.bf16.mxu0 0
    %3030 = vmatmul.mubr.bf16.gmra.mrb[0].mxu0 %v2995
    %v3031 = vpop.f32.mrb[0].mxu0
    %v3032 = vadd.f32 0.0, %v3031
    %v3033 = vpop.f32.mrb[0].mxu0
    %v3034 = vpop.f32.mrb[0].mxu0
    %v3035 = vpop.f32.mrb[0].mxu0
    %3036 = vdwg.mxu0
    %v3037 = vadd.f32 %v2989, %v3032
    %v3038 = vld [vmem:[%s222 + $0x8] sm:$0xff]
    %v3039 = vpack.c.bf16 %v2977, %v2977
    %3041 = vrot.lane.b32.xlu0 %v3039, 32
    %v3042 = vpop.permute.xlu0 %3041
    %v3044 = vsel %vm110, %v3042, 0
    %3046 = vmatprep.subr.bf16.mxu0 0
    %3047 = vmatpush1.bf16.msra.mxu0 %v1859
    %3048 = vmatprep.subr.bf16.mxu0 0
    %3049 = vmatpush1.bf16.msra.mxu0 %v1860
    %3050 = vmatprep.subr.bf16.mxu0 0
    %3051 = vmatpush1.bf16.msra.mxu0 0
    %3052 = vmatprep.subr.bf16.mxu0 0
    %3053 = vmatpush1.bf16.msra.mxu0 0
    %3054 = vmatprep.subr.bf16.mxu0 0
    %3055 = vmatpush1.bf16.msra.mxu0 0
    %3056 = vmatprep.subr.bf16.mxu0 0
    %3057 = vmatpush1.bf16.msra.mxu0 0
    %3058 = vmatprep.subr.bf16.mxu0 0
    %3059 = vmatpush1.bf16.msra.mxu0 0
    %3060 = vmatprep.subr.bf16.mxu0 0
    %3061 = vmatpush1.bf16.msra.mxu0 0
    %3062 = vmatprep.subr.bf16.mxu0 0
    %3063 = vmatpush1.bf16.msra.mxu0 0
    %3064 = vmatprep.subr.bf16.mxu0 0
    %3065 = vmatpush1.bf16.msra.mxu0 0
    %3066 = vmatprep.subr.bf16.mxu0 0
    %3067 = vmatpush1.bf16.msra.mxu0 0
    %3068 = vmatprep.subr.bf16.mxu0 0
    %3069 = vmatpush1.bf16.msra.mxu0 0
    %3070 = vmatprep.subr.bf16.mxu0 0
    %3071 = vmatpush1.bf16.msra.mxu0 0
    %3072 = vmatprep.subr.bf16.mxu0 0
    %3073 = vmatpush1.bf16.msra.mxu0 0
    %3074 = vmatprep.subr.bf16.mxu0 0
    %3075 = vmatpush1.bf16.msra.mxu0 0
    %3076 = vmatprep.subr.bf16.mxu0 0
    %3077 = vmatpush1.bf16.msra.mxu0 0
    %3078 = vmatprep.mubr.bf16.mxu0 0
    %3079 = vmatmul.mubr.bf16.gmra.mrb[0].mxu0 %v3044
    %v3080 = vpop.f32.mrb[0].mxu0
    %v3081 = vadd.f32 0.0, %v3080
    %v3082 = vpop.f32.mrb[0].mxu0
    %v3083 = vpop.f32.mrb[0].mxu0
    %v3084 = vpop.f32.mrb[0].mxu0
    %3085 = vdwg.mxu0
    %v3086 = vadd.f32 %v3038, %v3081
    %v3087 = vld [vmem:[%s367] sm:$0xff]
    %v3088 = vmul.f32 %v3037, %v60
    %v3089 = vtanh.pop %v3088
    %v3090 = vmul.f32 %v3089, %v60
    %v3091 = vadd.f32 %v3090, %v61
    %v3092 = vmul.f32 %v3091, %v2948
    %3094 = vrot.lane.b32.xlu0 %v3091, 64
    %v3095 = vpop.permute.xlu0 %3094
    %v3097 = vmul.f32 %v3091, %v3095
    %3099 = vrot.lane.b32.xlu0 %v3097, 32
    %v3100 = vpop.permute.xlu0 %3099
    %v3102 = vadd.f32 %v3092, %v3100
    %v3103 = vtanh.pop %v3102
    %3105 = vrot.lane.b32.xlu0 %v3103, 64
    %v3106 = vpop.permute.xlu0 %3105
    %v3108 = vmul.f32 %v3091, %v3106
    %vm3109 = vcmp.gt.f32.partialorder %v3087, 0.0
    %v3110 = vsel %vm3109, 1, 0
    %3111 = vset.pattern.permute.xlu0 0
    %3112 = vperm.xlu0 %3111, %v3110
    %v3113 = vpop.permute.xlu0 %3112
    %vm3114 = vcmp.eq.s32.totalorder %v3113, 1
    %v3115 = vsel %vm3114, %v3108, %v2947
    %v3116 = vld [vmem:[%s1] sm:$0xff]
    %v3117 = vmul.f32 %v3086, %v60
    %v3118 = vtanh.pop %v3117
    %v3119 = vmul.f32 %v3118, %v60
    %v3120 = vadd.f32 %v3119, %v61
    %v3121 = vmul.f32 %v3120, %v2978
    %3123 = vrot.lane.b32.xlu0 %v3120, 64
    %v3124 = vpop.permute.xlu0 %3123
    %v3126 = vmul.f32 %v3120, %v3124
    %3128 = vrot.lane.b32.xlu0 %v3126, 32
    %v3129 = vpop.permute.xlu0 %3128
    %v3131 = vadd.f32 %v3121, %v3129
    %v3132 = vtanh.pop %v3131
    %3134 = vrot.lane.b32.xlu0 %v3132, 64
    %v3135 = vpop.permute.xlu0 %3134
    %v3137 = vmul.f32 %v3120, %v3135
    %vm3138 = vcmp.gt.f32.partialorder %v3116, 0.0
    %v3139 = vsel %vm3138, 1, 0
    %3140 = vset.pattern.permute.xlu0 0
    %3141 = vperm.xlu0 %3140, %v3139
    %v3142 = vpop.permute.xlu0 %3141
    %vm3143 = vcmp.eq.s32.totalorder %v3142, 1
    %v3144 = vsel %vm3143, %v3137, %v2977
    %3146 = vrot.lane.b32.xlu0 %v3115, 32
    %v3147 = vpop.permute.xlu0 %3146
    %3149 = vst.msk [vmem:[%s1973] sm:$0xff] %vm110, %v3147
    %3151 = vrot.lane.b32.xlu0 %v3144, 64
    %v3152 = vpop.permute.xlu0 %3151
    %3154 = vst.msk [vmem:[#allocation3] sm:$0xff] %vm408, %v3152
    %v3155 = vld [vmem:[#allocation3] sm:$0xff]
    %v3156 = vld [vmem:[#allocation3 + $0x8] sm:$0xff]
    %v3157 = vld [vmem:[#allocation3 + $0x10] sm:$0xff]
    %v3158 = vld [vmem:[#allocation3 + $0x18] sm:$0xff]
    %v3159 = vld [vmem:[#allocation3 + $0x20] sm:$0xff]
    %v3160 = vld [vmem:[#allocation3 + $0x28] sm:$0xff]
    %v3161 = vld [vmem:[#allocation3 + $0x30] sm:$0xff]
    %v3162 = vld [vmem:[#allocation3 + $0x38] sm:$0xff]
    %v3163 = vpack.c.bf16 %v3156, %v3155
    %v3164 = vpack.c.bf16 %v3158, %v3157
    %v3165 = vpack.c.bf16 %v3160, %v3159
    %v3166 = vpack.c.bf16 %v3162, %v3161
    %v3167 = vld [vmem:[%s10] sm:$0xf]
    %v3168 = vld [vmem:[%s10 + $0x4] sm:$0xf]
    %v3169 = vld [vmem:[%s10 + $0x8] sm:$0xf]
    %v3170 = vld [vmem:[%s10 + $0xc] sm:$0xf]
    %v3171 = vld [vmem:[%s10 + $0x10] sm:$0xf]
    %v3172 = vld [vmem:[%s10 + $0x14] sm:$0xf]
    %v3173 = vld [vmem:[%s10 + $0x18] sm:$0xf]
    %v3174 = vld [vmem:[%s10 + $0x1c] sm:$0xf]
    %v3175 = vld [vmem:[%s11] sm:$0x1]
    %v3177 = vlaneseq
    %v3178 = vshrl.u32 %v3177, 7
    %v3179 = vsub.s32 0, %v3178
    %v3180 = vrot.slane %v3175, %v3179
    %v3190 = vunpack.c.l.b16 %v3167
    %v3191 = vunpack.c.l.b16 %v3168
    %v3192 = vunpack.c.l.b16 %v3169
    %v3193 = vunpack.c.l.b16 %v3170
    %v3194 = vunpack.c.l.b16 %v3171
    %v3195 = vunpack.c.l.b16 %v3172
    %v3196 = vunpack.c.l.b16 %v3173
    %v3197 = vunpack.c.l.b16 %v3174
    %v3198 = vpack.c.b16 %v3191, %v3190
    %v3199 = vpack.c.b16 %v3193, %v3192
    %v3200 = vpack.c.b16 %v3195, %v3194
    %v3201 = vpack.c.b16 %v3197, %v3196
    %v3207 = vsel %vm1686, %v3163, 0
    %v3210 = vsel %vm1686, %v3164, 0
    %v3213 = vsel %vm1686, %v3165, 0
    %v3216 = vsel %vm1686, %v3166, 0
    %3218 = vmatprep.subr.bf16.mxu0 0
    %3219 = vmatpush1.bf16.msra.mxu0 %v3198
    %3220 = vmatprep.subr.bf16.mxu0 0
    %3221 = vmatpush1.bf16.msra.mxu0 %v3199
    %3222 = vmatprep.subr.bf16.mxu0 0
    %3223 = vmatpush1.bf16.msra.mxu0 %v3200
    %3224 = vmatprep.subr.bf16.mxu0 0
    %3225 = vmatpush1.bf16.msra.mxu0 %v3201
    %3226 = vmatprep.subr.bf16.mxu0 0
    %3227 = vmatpush1.bf16.msra.mxu0 0
    %3228 = vmatprep.subr.bf16.mxu0 0
    %3229 = vmatpush1.bf16.msra.mxu0 0
    %3230 = vmatprep.subr.bf16.mxu0 0
    %3231 = vmatpush1.bf16.msra.mxu0 0
    %3232 = vmatprep.subr.bf16.mxu0 0
    %3233 = vmatpush1.bf16.msra.mxu0 0
    %3234 = vmatprep.subr.bf16.mxu0 0
    %3235 = vmatpush1.bf16.msra.mxu0 0
    %3236 = vmatprep.subr.bf16.mxu0 0
    %3237 = vmatpush1.bf16.msra.mxu0 0
    %3238 = vmatprep.subr.bf16.mxu0 0
    %3239 = vmatpush1.bf16.msra.mxu0 0
    %3240 = vmatprep.subr.bf16.mxu0 0
    %3241 = vmatpush1.bf16.msra.mxu0 0
    %3242 = vmatprep.subr.bf16.mxu0 0
    %3243 = vmatpush1.bf16.msra.mxu0 0
    %3244 = vmatprep.subr.bf16.mxu0 0
    %3245 = vmatpush1.bf16.msra.mxu0 0
    %3246 = vmatprep.subr.bf16.mxu0 0
    %3247 = vmatpush1.bf16.msra.mxu0 0
    %3248 = vmatprep.subr.bf16.mxu0 0
    %3249 = vmatpush1.bf16.msra.mxu0 0
    %3250 = vmatprep.mubr.bf16.mxu0 0
    %3251 = vmatmul.mubr.bf16.gmra.mrb[0].mxu0 %v3207
    %v3252 = vpop.f32.mrb[0].mxu0
    %v3253 = vadd.f32 %v3180, %v3252
    %v3254 = vpop.f32.mrb[0].mxu0
    %v3255 = vpop.f32.mrb[0].mxu0
    %v3256 = vadd.f32 %v3180, %v3255
    %v3257 = vpop.f32.mrb[0].mxu0
    %3258 = vmatprep.mubr.bf16.mxu0 0
    %3259 = vmatmul.mubr.bf16.gmra.mrb[0].mxu0 %v3210
    %v3260 = vpop.f32.mrb[0].mxu0
    %v3261 = vadd.f32 %v3180, %v3260
    %v3262 = vpop.f32.mrb[0].mxu0
    %v3263 = vpop.f32.mrb[0].mxu0
    %v3264 = vadd.f32 %v3180, %v3263
    %v3265 = vpop.f32.mrb[0].mxu0
    %3266 = vmatprep.mubr.bf16.mxu0 0
    %3267 = vmatmul.mubr.bf16.gmra.mrb[0].mxu0 %v3213
    %v3268 = vpop.f32.mrb[0].mxu0
    %v3269 = vadd.f32 %v3180, %v3268
    %v3270 = vpop.f32.mrb[0].mxu0
    %v3271 = vpop.f32.mrb[0].mxu0
    %v3272 = vadd.f32 %v3180, %v3271
    %v3273 = vpop.f32.mrb[0].mxu0
    %3274 = vmatprep.mubr.bf16.mxu0 0
    %3275 = vmatmul.mubr.bf16.gmra.mrb[0].mxu0 %v3216
    %v3276 = vpop.f32.mrb[0].mxu0
    %v3277 = vadd.f32 %v3180, %v3276
    %v3278 = vpop.f32.mrb[0].mxu0
    %v3279 = vpop.f32.mrb[0].mxu0
    %v3280 = vadd.f32 %v3180, %v3279
    %v3281 = vpop.f32.mrb[0].mxu0
    %3282 = vdwg.mxu0
    %v3283 = vld [vmem:[%s1] sm:$0xff]
    %v3284 = vld [vmem:[%s1 + $0x8] sm:$0xff]
    %v3285 = vld [vmem:[%s1 + $0x10] sm:$0xff]
    %v3286 = vld [vmem:[%s1 + $0x18] sm:$0xff]
    %v3287 = vld [vmem:[%s1 + $0x20] sm:$0xff]
    %v3288 = vld [vmem:[%s1 + $0x28] sm:$0xff]
    %v3289 = vld [vmem:[%s1 + $0x30] sm:$0xff]
    %v3290 = vld [vmem:[%s1 + $0x38] sm:$0xff]
    %3292 = vset.pattern.permute.xlu0 0
    %3293 = vperm.xlu0 %3292, %v3283
    %v3294 = vpop.permute.xlu0 %3293
    %3297 = vset.pattern.permute.xlu0 0
    %3298 = vperm.xlu0 %3297, %v3284
    %v3299 = vpop.permute.xlu0 %3298
    %3302 = vset.pattern.permute.xlu0 0
    %3303 = vperm.xlu0 %3302, %v3285
    %v3304 = vpop.permute.xlu0 %3303
    %3307 = vset.pattern.permute.xlu0 0
    %3308 = vperm.xlu0 %3307, %v3286
    %v3309 = vpop.permute.xlu0 %3308
    %3312 = vset.pattern.permute.xlu0 0
    %3313 = vperm.xlu0 %3312, %v3287
    %v3314 = vpop.permute.xlu0 %3313
    %3317 = vset.pattern.permute.xlu0 0
    %3318 = vperm.xlu0 %3317, %v3288
    %v3319 = vpop.permute.xlu0 %3318
    %3322 = vset.pattern.permute.xlu0 0
    %3323 = vperm.xlu0 %3322, %v3289
    %v3324 = vpop.permute.xlu0 %3323
    %3327 = vset.pattern.permute.xlu0 0
    %3328 = vperm.xlu0 %3327, %v3290
    %v3329 = vpop.permute.xlu0 %3328
    %v3331 = vmul.f32 %v3253, %v3294
    %v3332 = vmul.f32 %v3256, %v3299
    %v3333 = vmul.f32 %v3261, %v3304
    %v3334 = vmul.f32 %v3264, %v3309
    %v3335 = vmul.f32 %v3269, %v3314
    %v3336 = vmul.f32 %v3272, %v3319
    %v3337 = vmul.f32 %v3277, %v3324
    %v3338 = vmul.f32 %v3280, %v3329
    %v3339 = vpack.c.bf16 %v3332, %v3331
    %v3340 = vpack.c.bf16 %v3334, %v3333
    %v3341 = vpack.c.bf16 %v3336, %v3335
    %v3342 = vpack.c.bf16 %v3338, %v3337
    %v3347 = vunpack.c.l.b16 %v3339
    %v3348 = vunpack.c.h.b16 %v3339
    %v3349 = vunpack.c.l.b16 %v3340
    %v3350 = vunpack.c.h.b16 %v3340
    %v3351 = vunpack.c.l.b16 %v3341
    %v3352 = vunpack.c.h.b16 %v3341
    %v3353 = vunpack.c.l.b16 %v3342
    %v3354 = vunpack.c.h.b16 %v3342
    %v3355 = vpack.c.b16 %v3347, %v3347
    %v3356 = vpack.c.b16 %v3348, %v3348
    %v3357 = vpack.c.b16 %v3349, %v3349
    %v3358 = vpack.c.b16 %v3350, %v3350
    %v3359 = vpack.c.b16 %v3351, %v3351
    %v3360 = vpack.c.b16 %v3352, %v3352
    %v3361 = vpack.c.b16 %v3353, %v3353
    %v3362 = vpack.c.b16 %v3354, %v3354
    %3371 = vst [vmem:[#allocation8] sm:$0xf] %v3355
    %3372 = vst [vmem:[#allocation8 + $0x4] sm:$0xf] %v3356
    %3373 = vst [vmem:[#allocation8 + $0x8] sm:$0xf] %v3357
    %3374 = vst [vmem:[#allocation8 + $0xc] sm:$0xf] %v3358
    %3375 = vst [vmem:[#allocation8 + $0x10] sm:$0xf] %v3359
    %3376 = vst [vmem:[#allocation8 + $0x14] sm:$0xf] %v3360
    %3377 = vst [vmem:[#allocation8 + $0x18] sm:$0xf] %v3361
    %3378 = vst [vmem:[#allocation8 + $0x1c] sm:$0xf] %v3362
    // Predicated region
    $region54: #{tpu_custom_call.1} parent=1 // pred_check
      _
    $region55: #{tpu_custom_call.1} parent=1 // pred_check_branch
      %3380 = sbr.rel (0) target = $region57
    $region56: #{tpu_custom_call.1} parent=1 // pred_region
      %s3382 = ssub.s32 512, 512
      %3383 = vsyncadd [#allocation7], %s3382
      %s3384 = sshll.u32 [#allocation8], 4
      %s3385 = int_to_ptr.vmem [resolvable:$true] %s3384
      %3390 = dma.vmem_to_hbm [thread:$0]  %s3385, 512, %s12, [#allocation7], 64, 64, 4
    $region57: #{tpu_custom_call.1} parent=1 // pred_fallthru
      _
    // Predicated region
    $region58: #{tpu_custom_call.1} parent=1 // pred_check
      _
    $region59: #{tpu_custom_call.1} parent=1 // pred_check_branch
      %3392 = sbr.rel (0) target = $region61
    $region60: #{tpu_custom_call.1} parent=1 // pred_region
      %3393 = dma.done [#allocation7], 512
    $region61: #{tpu_custom_call.1} parent=1 // pred_fallthru
      _
    %3394 = vsyncpa [#allocation6], 1
    %3395 = vsyncpa [#allocation7], 1

</llo_original>
